<compile_context>
chip_gen: v5e
topology: v5e:2x2
jax: 0.10.0
libtpu: 0.0.40
codegen_flags: <defaults>
</compile_context>

<pallas_src>
import jax
import jax.numpy as jnp
from jax import lax
from jax.experimental import pallas as pl
from jax.experimental.pallas import tpu as pltpu

EPS = 1e-5  # nn.InstanceNorm2d default


def _round_up(x, m):
    return (x + m - 1) // m * m


def _make_resblock_kernel(C, H, W, matmul_dtype):
    Hp, Wp = H + 2, W + 2
    HW = H * W

    def reflect_pad_into(xp_ref, h):
        # h: (H, W, C) in matmul_dtype -> PyTorch 'reflect' pad into xp_ref.
        xp_ref[1:H + 1, 1:W + 1, :] = h
        xp_ref[0:1, 1:W + 1, :] = h[1:2, :, :]                   # top    <- row 1
        xp_ref[H + 1:H + 2, 1:W + 1, :] = h[H - 2:H - 1, :, :]   # bottom <- row H-2
        # Columns copied from already-padded columns so corners come out right.
        xp_ref[:, 0:1, :] = xp_ref[:, 2:3, :]                    # left   <- col 1
        xp_ref[:, W + 1:W + 2, :] = xp_ref[:, W - 1:W, :]        # right  <- col W-2

    def conv3x3(xp_ref, w_ref):
        # 9 accumulating (HW, C) @ (C, C) MXU matmuls; no (HW, 9C) im2col temp.
        acc = None
        for di in range(3):
            for dj in range(3):
                t = di * 3 + dj
                tap = xp_ref[di:di + H, dj:dj + W, :].reshape(HW, C)
                part = jnp.dot(tap, w_ref[t * C:(t + 1) * C, :],
                               preferred_element_type=jnp.float32)
                acc = part if acc is None else acc + part
        return acc                                               # (HW, C) f32

    def instance_norm(h):
        # Per-channel stats over the spatial axis (biased variance).
        mean = jnp.mean(h, axis=0, keepdims=True)
        hc = h - mean
        var = jnp.mean(hc * hc, axis=0, keepdims=True)
        return hc * lax.rsqrt(var + EPS)

    def kernel(x_ref, w1_ref, w2_ref, out_ref, xp_ref):
        # conv1 -> instancenorm -> relu  (conv bias is a no-op under InstanceNorm)
        reflect_pad_into(xp_ref, x_ref[...].astype(matmul_dtype).reshape(H, W, C))
        h = instance_norm(conv3x3(xp_ref, w1_ref))
        h = jnp.maximum(h, 0.0)

        # conv2 -> instancenorm
        reflect_pad_into(xp_ref, h.astype(matmul_dtype).reshape(H, W, C))
        h2 = instance_norm(conv3x3(xp_ref, w2_ref))

        # residual add (x re-read here; not held live across the convs)
        out_ref[...] = x_ref[...] + h2

    return kernel


def _vmem_cap_bytes():
    kind = ""
    try:
        kind = jax.devices()[0].device_kind.lower()
    except Exception:
        pass
    if "v7" in kind or "7x" in kind:
        return 48 * 1024 * 1024        # v7x: 64 MiB physical per TensorCore
    return 100 * 1024 * 1024           # v5e / v6e: 128 MiB physical


def residual_block(x, w1, b1, w2, b2, *, matmul_dtype=jnp.bfloat16):
    """x: (B, C, H, W) f32; w: (C, C, 3, 3); b: (C,).

    matmul_dtype=jnp.bfloat16 (default) uses the bf16-native MXU path with f32
    accumulation; pass jnp.float32 for bit-tight comparison vs an f32 reference.
    Conv biases are exactly cancelled by the following InstanceNorm2d
    (affine=False), so b1/b2 are accepted for API parity but unused.
    """
    del b1, b2  # exact no-op under InstanceNorm(affine=False)
    B, C, H, W = x.shape
    HW = H * W
    Hp, Wp = H + 2, W + 2

    # Lane-dense channel count (exact: zero-padded channels stay zero end-to-end).
    Cp = max(_round_up(C, 128), 128)

    itemsize = jnp.dtype(matmul_dtype).itemsize
    sublane = 32 // itemsize                    # 8 for f32, 16 for bf16
    Wp_pad = _round_up(Wp, sublane)             # tile-aligned pad scratch width

    # Wrapper-side layout plumbing: channels-last, spatial flattened, C padded.
    x_cl = jnp.transpose(x, (0, 2, 3, 1))
    if Cp != C:
        x_cl = jnp.pad(x_cl, ((0, 0), (0, 0), (0, 0), (0, Cp - C)))
    x_cl = x_cl.reshape(B, HW, Cp)

    def prep_w(w):
        wp = jnp.zeros((Cp, Cp, 3, 3), w.dtype).at[:C, :C].set(w)
        # (Cout, Cin, 3, 3) -> (3, 3, Cin, Cout) -> (9*Cin, Cout); row block
        # t = di*3 + dj matches the kernel's tap order.
        return jnp.transpose(wp, (2, 3, 1, 0)).reshape(9 * Cp, Cp).astype(matmul_dtype)

    w1_cl = prep_w(w1)
    w2_cl = prep_w(w2)

    kernel = _make_resblock_kernel(Cp, H, W, matmul_dtype)

    # Per-step VMEM: double-buffered f32 activation/out blocks, double-buffered
    # weights, pad scratch, plus in-flight f32 temporaries (acc / norm values).
    est = (2 * 2 * HW * Cp * 4
           + 2 * 2 * 9 * Cp * Cp * itemsize
           + Hp * Wp_pad * Cp * itemsize
           + 6 * HW * Cp * 4)
    vmem_limit = int(min(max(2 * est, 16 * 1024 * 1024), _vmem_cap_bytes()))

    out_cl = pl.pallas_call(
        kernel,
        out_shape=jax.ShapeDtypeStruct((B, HW, Cp), jnp.float32),
        grid_spec=pltpu.PrefetchScalarGridSpec(
            num_scalar_prefetch=0,
            grid=(B,),
            in_specs=[
                pl.BlockSpec((None, HW, Cp), lambda b: (b, 0, 0)),   # activation
                pl.BlockSpec((9 * Cp, Cp), lambda b: (0, 0)),        # w1 (9C, C)
                pl.BlockSpec((9 * Cp, Cp), lambda b: (0, 0)),        # w2
            ],
            out_specs=pl.BlockSpec((None, HW, Cp), lambda b: (b, 0, 0)),
            scratch_shapes=[pltpu.VMEM((Hp, Wp_pad, Cp), matmul_dtype)],  # pad buf
        ),
        compiler_params=pltpu.CompilerParams(
            dimension_semantics=("parallel",),
            vmem_limit_bytes=vmem_limit,
        ),
    )(x_cl, w1_cl, w2_cl)

    # NOTE: for B == 1 on v7x, add a spatial / Cout grid split (with a
    # cross-core partial-stats reduction for InstanceNorm) so both TensorCores
    # get work; at B >= 2 the "parallel" batch axis already feeds both cores.
    out = out_cl.reshape(B, H, W, Cp)[..., :C]
    return jnp.transpose(out, (0, 3, 1, 2))


def _reference(x, w1, b1, w2, b2):
    """Pure-JAX reference matching PyTorch semantics (NCHW, biases included)."""
    def conv(h, w, b):
        hp = jnp.pad(h, ((0, 0), (0, 0), (1, 1), (1, 1)), mode="reflect")
        y = lax.conv_general_dilated(
            hp, w, window_strides=(1, 1), padding="VALID",
            dimension_numbers=("NCHW", "OIHW", "NCHW"))
        return y + b[None, :, None, None]

    def inorm(h):
        mean = jnp.mean(h, axis=(2, 3), keepdims=True)
        var = jnp.mean((h - mean) ** 2, axis=(2, 3), keepdims=True)
        return (h - mean) / jnp.sqrt(var + EPS)

    h = jnp.maximum(inorm(conv(x, w1, b1)), 0.0)
    h = inorm(conv(h, w2, b2))
    return x + h


if __name__ == "__main__":
    B, C, H, W = 2, 4, 16, 16
    key = jax.random.PRNGKey(0)
    kx, k1, kb1, k2, kb2 = jax.random.split(key, 5)

    x = jax.random.normal(kx, (B, C, H, W), dtype=jnp.float32)

    # PyTorch-style uniform init, bound = 1/sqrt(fan_in), fan_in = C*3*3.
    bound = 1.0 / jnp.sqrt(jnp.float32(C * 3 * 3))
    w1 = jax.random.uniform(k1, (C, C, 3, 3), jnp.float32, -bound, bound)
    b1 = jax.random.uniform(kb1, (C,), jnp.float32, -bound, bound)
    w2 = jax.random.uniform(k2, (C, C, 3, 3), jnp.float32, -bound, bound)
    b2 = jax.random.uniform(kb2, (C,), jnp.float32, -bound, bound)

    ref = jax.block_until_ready(_reference(x, w1, b1, w2, b2))

    # f32 MXU operands: tight check vs the f32 reference (proves the math,
    # including the exact bias cancellation and channel padding).
    out_f32 = jax.block_until_ready(
        residual_block(x, w1, b1, w2, b2, matmul_dtype=jnp.float32))
    assert out_f32.shape == (B, C, H, W)
    assert jnp.allclose(out_f32, ref, rtol=1e-4, atol=1e-4), "f32 path mismatch"

    # Default bf16 MXU operands (f32 accumulation): relaxed tolerance.
    out_bf16 = jax.block_until_ready(residual_block(x, w1, b1, w2, b2))
    assert out_bf16.shape == (B, C, H, W)
    assert jnp.allclose(out_bf16, ref, rtol=5e-2, atol=5e-2), "bf16 path mismatch"

    print("KERNEL_OK")
</pallas_src>

<mosaic_0001>
module attributes {stable_mosaic.version = 11 : i64} {
  func.func @kernel(%arg0: i32, %arg1: memref<1x256x128xf32, #tpu.memory_space<vmem>>, %arg2: memref<1152x128xf32, #tpu.memory_space<vmem>>, %arg3: memref<1152x128xf32, #tpu.memory_space<vmem>>, %arg4: memref<1x256x128xf32, #tpu.memory_space<vmem>>, %arg5: memref<18x24x128xf32, #tpu.memory_space<vmem>>) attributes {dimension_semantics = [#tpu.dimension_semantics<parallel>], iteration_bounds = array<i64: 2>, scalar_prefetch = 0 : i64, scratch_operands = 1 : i64, tpu.core_type = #tpu.core_type<tc>, window_params = [{transform_indices = @transform_0, window_bounds = array<i64: 1, 256, 128>}, {pipeline_mode = #tpu.pipeline_mode<synchronous>, transform_indices = @transform_1, window_bounds = array<i64: 1152, 128>}, {pipeline_mode = #tpu.pipeline_mode<synchronous>, transform_indices = @transform_2, window_bounds = array<i64: 1152, 128>}, {transform_indices = @transform_3, window_bounds = array<i64: 1, 256, 128>}]} {
    %c0 = arith.constant 0 : index
    %c0_0 = arith.constant 0 : index
    %c0_1 = arith.constant 0 : index
    %0 = vector.load %arg1[%c0, %c0_0, %c0_1] : memref<1x256x128xf32, #tpu.memory_space<vmem>>, vector<1x256x128xf32>
    %1 = vector.shape_cast %0 : vector<1x256x128xf32> to vector<256x128xf32>
    %2 = vector.shape_cast %1 : vector<256x128xf32> to vector<16x16x128xf32>
    %c1 = arith.constant 1 : index
    %c1_2 = arith.constant 1 : index
    %c0_3 = arith.constant 0 : index
    %3 = vector.load %arg5[%c1, %c1_2, %c0_3] : memref<18x24x128xf32, #tpu.memory_space<vmem>>, vector<16x16x128xf32>
    tpu.vector_store %arg5[%c1, %c1_2, %c0_3], %2 {strides = array<i32>} : memref<18x24x128xf32, #tpu.memory_space<vmem>>, vector<16x16x128xf32>,
    %4 = vector.extract_strided_slice %2 {offsets = [1, 0, 0], sizes = [1, 16, 128], strides = [1, 1, 1]} : vector<16x16x128xf32> to vector<1x16x128xf32>
    %c0_4 = arith.constant 0 : index
    %c1_5 = arith.constant 1 : index
    %c0_6 = arith.constant 0 : index
    %5 = vector.load %arg5[%c0_4, %c1_5, %c0_6] : memref<18x24x128xf32, #tpu.memory_space<vmem>>, vector<1x16x128xf32>
    tpu.vector_store %arg5[%c0_4, %c1_5, %c0_6], %4 {strides = array<i32>} : memref<18x24x128xf32, #tpu.memory_space<vmem>>, vector<1x16x128xf32>,
    %6 = vector.extract_strided_slice %2 {offsets = [14, 0, 0], sizes = [1, 16, 128], strides = [1, 1, 1]} : vector<16x16x128xf32> to vector<1x16x128xf32>
    %c17 = arith.constant 17 : index
    %c1_7 = arith.constant 1 : index
    %c0_8 = arith.constant 0 : index
    %7 = vector.load %arg5[%c17, %c1_7, %c0_8] : memref<18x24x128xf32, #tpu.memory_space<vmem>>, vector<1x16x128xf32>
    tpu.vector_store %arg5[%c17, %c1_7, %c0_8], %6 {strides = array<i32>} : memref<18x24x128xf32, #tpu.memory_space<vmem>>, vector<1x16x128xf32>,
    %c0_9 = arith.constant 0 : index
    %c2 = arith.constant 2 : index
    %c0_10 = arith.constant 0 : index
    %8 = vector.load %arg5[%c0_9, %c2, %c0_10] : memref<18x24x128xf32, #tpu.memory_space<vmem>>, vector<18x1x128xf32>
    %c0_11 = arith.constant 0 : index
    %c0_12 = arith.constant 0 : index
    %c0_13 = arith.constant 0 : index
    %9 = vector.load %arg5[%c0_11, %c0_12, %c0_13] : memref<18x24x128xf32, #tpu.memory_space<vmem>>, vector<18x1x128xf32>
    tpu.vector_store %arg5[%c0_11, %c0_12, %c0_13], %8 {strides = array<i32>} : memref<18x24x128xf32, #tpu.memory_space<vmem>>, vector<18x1x128xf32>,
    %c0_14 = arith.constant 0 : index
    %c15 = arith.constant 15 : index
    %c0_15 = arith.constant 0 : index
    %10 = vector.load %arg5[%c0_14, %c15, %c0_15] : memref<18x24x128xf32, #tpu.memory_space<vmem>>, vector<18x1x128xf32>
    %c0_16 = arith.constant 0 : index
    %c17_17 = arith.constant 17 : index
    %c0_18 = arith.constant 0 : index
    %11 = vector.load %arg5[%c0_16, %c17_17, %c0_18] : memref<18x24x128xf32, #tpu.memory_space<vmem>>, vector<18x1x128xf32>
    tpu.vector_store %arg5[%c0_16, %c17_17, %c0_18], %10 {strides = array<i32>} : memref<18x24x128xf32, #tpu.memory_space<vmem>>, vector<18x1x128xf32>,
    %c0_19 = arith.constant 0 : index
    %c0_20 = arith.constant 0 : index
    %c0_21 = arith.constant 0 : index
    %12 = vector.load %arg5[%c0_19, %c0_20, %c0_21] : memref<18x24x128xf32, #tpu.memory_space<vmem>>, vector<16x16x128xf32>
    %13 = vector.shape_cast %12 : vector<16x16x128xf32> to vector<256x128xf32>
    %c0_22 = arith.constant 0 : index
    %c0_23 = arith.constant 0 : index
    %14 = vector.load %arg2[%c0_22, %c0_23] : memref<1152x128xf32, #tpu.memory_space<vmem>>, vector<128x128xf32>
    %cst = arith.constant dense<0.000000e+00> : vector<256x128xf32>
    %15 = tpu.matmul %13, %14, %cst {dimension_numbers = #tpu.dot_dimension_numbers<[1], [0], [0], [1], [0, 0, 1, 1], [], []>} : vector<256x128xf32>, vector<128x128xf32>, vector<256x128xf32> -> vector<256x128xf32>
    %c0_24 = arith.constant 0 : index
    %c1_25 = arith.constant 1 : index
    %c0_26 = arith.constant 0 : index
    %16 = vector.load %arg5[%c0_24, %c1_25, %c0_26] : memref<18x24x128xf32, #tpu.memory_space<vmem>>, vector<16x16x128xf32>
    %17 = vector.shape_cast %16 : vector<16x16x128xf32> to vector<256x128xf32>
    %c128 = arith.constant 128 : index
    %c0_27 = arith.constant 0 : index
    %18 = vector.load %arg2[%c128, %c0_27] : memref<1152x128xf32, #tpu.memory_space<vmem>>, vector<128x128xf32>
    %cst_28 = arith.constant dense<0.000000e+00> : vector<256x128xf32>
    %19 = tpu.matmul %17, %18, %cst_28 {dimension_numbers = #tpu.dot_dimension_numbers<[1], [0], [0], [1], [0, 0, 1, 1], [], []>} : vector<256x128xf32>, vector<128x128xf32>, vector<256x128xf32> -> vector<256x128xf32>
    %20 = arith.addf %15, %19 : vector<256x128xf32>
    %c0_29 = arith.constant 0 : index
    %c2_30 = arith.constant 2 : index
    %c0_31 = arith.constant 0 : index
    %21 = vector.load %arg5[%c0_29, %c2_30, %c0_31] : memref<18x24x128xf32, #tpu.memory_space<vmem>>, vector<16x16x128xf32>
    %22 = vector.shape_cast %21 : vector<16x16x128xf32> to vector<256x128xf32>
    %c256 = arith.constant 256 : index
    %c0_32 = arith.constant 0 : index
    %23 = vector.load %arg2[%c256, %c0_32] : memref<1152x128xf32, #tpu.memory_space<vmem>>, vector<128x128xf32>
    %cst_33 = arith.constant dense<0.000000e+00> : vector<256x128xf32>
    %24 = tpu.matmul %22, %23, %cst_33 {dimension_numbers = #tpu.dot_dimension_numbers<[1], [0], [0], [1], [0, 0, 1, 1], [], []>} : vector<256x128xf32>, vector<128x128xf32>, vector<256x128xf32> -> vector<256x128xf32>
    %25 = arith.addf %20, %24 : vector<256x128xf32>
    %c1_34 = arith.constant 1 : index
    %c0_35 = arith.constant 0 : index
    %c0_36 = arith.constant 0 : index
    %26 = vector.load %arg5[%c1_34, %c0_35, %c0_36] : memref<18x24x128xf32, #tpu.memory_space<vmem>>, vector<16x16x128xf32>
    %27 = vector.shape_cast %26 : vector<16x16x128xf32> to vector<256x128xf32>
    %c384 = arith.constant 384 : index
    %c0_37 = arith.constant 0 : index
    %28 = vector.load %arg2[%c384, %c0_37] : memref<1152x128xf32, #tpu.memory_space<vmem>>, vector<128x128xf32>
    %cst_38 = arith.constant dense<0.000000e+00> : vector<256x128xf32>
    %29 = tpu.matmul %27, %28, %cst_38 {dimension_numbers = #tpu.dot_dimension_numbers<[1], [0], [0], [1], [0, 0, 1, 1], [], []>} : vector<256x128xf32>, vector<128x128xf32>, vector<256x128xf32> -> vector<256x128xf32>
    %30 = arith.addf %25, %29 : vector<256x128xf32>
    %c1_39 = arith.constant 1 : index
    %c1_40 = arith.constant 1 : index
    %c0_41 = arith.constant 0 : index
    %31 = vector.load %arg5[%c1_39, %c1_40, %c0_41] : memref<18x24x128xf32, #tpu.memory_space<vmem>>, vector<16x16x128xf32>
    %32 = vector.shape_cast %31 : vector<16x16x128xf32> to vector<256x128xf32>
    %c512 = arith.constant 512 : index
    %c0_42 = arith.constant 0 : index
    %33 = vector.load %arg2[%c512, %c0_42] : memref<1152x128xf32, #tpu.memory_space<vmem>>, vector<128x128xf32>
    %cst_43 = arith.constant dense<0.000000e+00> : vector<256x128xf32>
    %34 = tpu.matmul %32, %33, %cst_43 {dimension_numbers = #tpu.dot_dimension_numbers<[1], [0], [0], [1], [0, 0, 1, 1], [], []>} : vector<256x128xf32>, vector<128x128xf32>, vector<256x128xf32> -> vector<256x128xf32>
    %35 = arith.addf %30, %34 : vector<256x128xf32>
    %c1_44 = arith.constant 1 : index
    %c2_45 = arith.constant 2 : index
    %c0_46 = arith.constant 0 : index
    %36 = vector.load %arg5[%c1_44, %c2_45, %c0_46] : memref<18x24x128xf32, #tpu.memory_space<vmem>>, vector<16x16x128xf32>
    %37 = vector.shape_cast %36 : vector<16x16x128xf32> to vector<256x128xf32>
    %c640 = arith.constant 640 : index
    %c0_47 = arith.constant 0 : index
    %38 = vector.load %arg2[%c640, %c0_47] : memref<1152x128xf32, #tpu.memory_space<vmem>>, vector<128x128xf32>
    %cst_48 = arith.constant dense<0.000000e+00> : vector<256x128xf32>
    %39 = tpu.matmul %37, %38, %cst_48 {dimension_numbers = #tpu.dot_dimension_numbers<[1], [0], [0], [1], [0, 0, 1, 1], [], []>} : vector<256x128xf32>, vector<128x128xf32>, vector<256x128xf32> -> vector<256x128xf32>
    %40 = arith.addf %35, %39 : vector<256x128xf32>
    %c2_49 = arith.constant 2 : index
    %c0_50 = arith.constant 0 : index
    %c0_51 = arith.constant 0 : index
    %41 = vector.load %arg5[%c2_49, %c0_50, %c0_51] : memref<18x24x128xf32, #tpu.memory_space<vmem>>, vector<16x16x128xf32>
    %42 = vector.shape_cast %41 : vector<16x16x128xf32> to vector<256x128xf32>
    %c768 = arith.constant 768 : index
    %c0_52 = arith.constant 0 : index
    %43 = vector.load %arg2[%c768, %c0_52] : memref<1152x128xf32, #tpu.memory_space<vmem>>, vector<128x128xf32>
    %cst_53 = arith.constant dense<0.000000e+00> : vector<256x128xf32>
    %44 = tpu.matmul %42, %43, %cst_53 {dimension_numbers = #tpu.dot_dimension_numbers<[1], [0], [0], [1], [0, 0, 1, 1], [], []>} : vector<256x128xf32>, vector<128x128xf32>, vector<256x128xf32> -> vector<256x128xf32>
    %45 = arith.addf %40, %44 : vector<256x128xf32>
    %c2_54 = arith.constant 2 : index
    %c1_55 = arith.constant 1 : index
    %c0_56 = arith.constant 0 : index
    %46 = vector.load %arg5[%c2_54, %c1_55, %c0_56] : memref<18x24x128xf32, #tpu.memory_space<vmem>>, vector<16x16x128xf32>
    %47 = vector.shape_cast %46 : vector<16x16x128xf32> to vector<256x128xf32>
    %c896 = arith.constant 896 : index
    %c0_57 = arith.constant 0 : index
    %48 = vector.load %arg2[%c896, %c0_57] : memref<1152x128xf32, #tpu.memory_space<vmem>>, vector<128x128xf32>
    %cst_58 = arith.constant dense<0.000000e+00> : vector<256x128xf32>
    %49 = tpu.matmul %47, %48, %cst_58 {dimension_numbers = #tpu.dot_dimension_numbers<[1], [0], [0], [1], [0, 0, 1, 1], [], []>} : vector<256x128xf32>, vector<128x128xf32>, vector<256x128xf32> -> vector<256x128xf32>
    %50 = arith.addf %45, %49 : vector<256x128xf32>
    %c2_59 = arith.constant 2 : index
    %c2_60 = arith.constant 2 : index
    %c0_61 = arith.constant 0 : index
    %51 = vector.load %arg5[%c2_59, %c2_60, %c0_61] : memref<18x24x128xf32, #tpu.memory_space<vmem>>, vector<16x16x128xf32>
    %52 = vector.shape_cast %51 : vector<16x16x128xf32> to vector<256x128xf32>
    %c1024 = arith.constant 1024 : index
    %c0_62 = arith.constant 0 : index
    %53 = vector.load %arg2[%c1024, %c0_62] : memref<1152x128xf32, #tpu.memory_space<vmem>>, vector<128x128xf32>
    %cst_63 = arith.constant dense<0.000000e+00> : vector<256x128xf32>
    %54 = tpu.matmul %52, %53, %cst_63 {dimension_numbers = #tpu.dot_dimension_numbers<[1], [0], [0], [1], [0, 0, 1, 1], [], []>} : vector<256x128xf32>, vector<128x128xf32>, vector<256x128xf32> -> vector<256x128xf32>
    %55 = arith.addf %50, %54 : vector<256x128xf32>
    %cst_64 = arith.constant dense<0.000000e+00> : vector<128xf32>
    %56 = vector.multi_reduction <add>, %55, %cst_64 [0] : vector<256x128xf32> to vector<128xf32>
    %57 = vector.shape_cast %56 : vector<128xf32> to vector<1x128xf32>
    %cst_65 = arith.constant 2.560000e+02 : f32
    %58 = vector.broadcast %cst_65 : f32 to vector<1x128xf32>
    %59 = arith.divf %57, %58 : vector<1x128xf32>
    %60 = vector.broadcast %59 : vector<1x128xf32> to vector<256x128xf32>
    %61 = arith.subf %55, %60 : vector<256x128xf32>
    %62 = arith.mulf %61, %61 : vector<256x128xf32>
    %cst_66 = arith.constant dense<0.000000e+00> : vector<128xf32>
    %63 = vector.multi_reduction <add>, %62, %cst_66 [0] : vector<256x128xf32> to vector<128xf32>
    %64 = vector.shape_cast %63 : vector<128xf32> to vector<1x128xf32>
    %cst_67 = arith.constant 2.560000e+02 : f32
    %65 = vector.broadcast %cst_67 : f32 to vector<1x128xf32>
    %66 = arith.divf %64, %65 : vector<1x128xf32>
    %cst_68 = arith.constant 9.99999974E-6 : f32
    %67 = vector.broadcast %cst_68 : f32 to vector<1x128xf32>
    %68 = arith.addf %66, %67 : vector<1x128xf32>
    %69 = math.rsqrt %68 : vector<1x128xf32>
    %70 = vector.broadcast %69 : vector<1x128xf32> to vector<256x128xf32>
    %71 = arith.mulf %61, %70 : vector<256x128xf32>
    %cst_69 = arith.constant 0.000000e+00 : f32
    %72 = vector.broadcast %cst_69 : f32 to vector<256x128xf32>
    %73 = arith.maximumf %71, %72 : vector<256x128xf32>
    %74 = vector.shape_cast %73 : vector<256x128xf32> to vector<16x16x128xf32>
    %c1_70 = arith.constant 1 : index
    %c1_71 = arith.constant 1 : index
    %c0_72 = arith.constant 0 : index
    %75 = vector.load %arg5[%c1_70, %c1_71, %c0_72] : memref<18x24x128xf32, #tpu.memory_space<vmem>>, vector<16x16x128xf32>
    tpu.vector_store %arg5[%c1_70, %c1_71, %c0_72], %74 {strides = array<i32>} : memref<18x24x128xf32, #tpu.memory_space<vmem>>, vector<16x16x128xf32>,
    %76 = vector.extract_strided_slice %74 {offsets = [1, 0, 0], sizes = [1, 16, 128], strides = [1, 1, 1]} : vector<16x16x128xf32> to vector<1x16x128xf32>
    %c0_73 = arith.constant 0 : index
    %c1_74 = arith.constant 1 : index
    %c0_75 = arith.constant 0 : index
    %77 = vector.load %arg5[%c0_73, %c1_74, %c0_75] : memref<18x24x128xf32, #tpu.memory_space<vmem>>, vector<1x16x128xf32>
    tpu.vector_store %arg5[%c0_73, %c1_74, %c0_75], %76 {strides = array<i32>} : memref<18x24x128xf32, #tpu.memory_space<vmem>>, vector<1x16x128xf32>,
    %78 = vector.extract_strided_slice %74 {offsets = [14, 0, 0], sizes = [1, 16, 128], strides = [1, 1, 1]} : vector<16x16x128xf32> to vector<1x16x128xf32>
    %c17_76 = arith.constant 17 : index
    %c1_77 = arith.constant 1 : index
    %c0_78 = arith.constant 0 : index
    %79 = vector.load %arg5[%c17_76, %c1_77, %c0_78] : memref<18x24x128xf32, #tpu.memory_space<vmem>>, vector<1x16x128xf32>
    tpu.vector_store %arg5[%c17_76, %c1_77, %c0_78], %78 {strides = array<i32>} : memref<18x24x128xf32, #tpu.memory_space<vmem>>, vector<1x16x128xf32>,
    %c0_79 = arith.constant 0 : index
    %c2_80 = arith.constant 2 : index
    %c0_81 = arith.constant 0 : index
    %80 = vector.load %arg5[%c0_79, %c2_80, %c0_81] : memref<18x24x128xf32, #tpu.memory_space<vmem>>, vector<18x1x128xf32>
    %c0_82 = arith.constant 0 : index
    %c0_83 = arith.constant 0 : index
    %c0_84 = arith.constant 0 : index
    %81 = vector.load %arg5[%c0_82, %c0_83, %c0_84] : memref<18x24x128xf32, #tpu.memory_space<vmem>>, vector<18x1x128xf32>
    tpu.vector_store %arg5[%c0_82, %c0_83, %c0_84], %80 {strides = array<i32>} : memref<18x24x128xf32, #tpu.memory_space<vmem>>, vector<18x1x128xf32>,
    %c0_85 = arith.constant 0 : index
    %c15_86 = arith.constant 15 : index
    %c0_87 = arith.constant 0 : index
    %82 = vector.load %arg5[%c0_85, %c15_86, %c0_87] : memref<18x24x128xf32, #tpu.memory_space<vmem>>, vector<18x1x128xf32>
    %c0_88 = arith.constant 0 : index
    %c17_89 = arith.constant 17 : index
    %c0_90 = arith.constant 0 : index
    %83 = vector.load %arg5[%c0_88, %c17_89, %c0_90] : memref<18x24x128xf32, #tpu.memory_space<vmem>>, vector<18x1x128xf32>
    tpu.vector_store %arg5[%c0_88, %c17_89, %c0_90], %82 {strides = array<i32>} : memref<18x24x128xf32, #tpu.memory_space<vmem>>, vector<18x1x128xf32>,
    %c0_91 = arith.constant 0 : index
    %c0_92 = arith.constant 0 : index
    %c0_93 = arith.constant 0 : index
    %84 = vector.load %arg5[%c0_91, %c0_92, %c0_93] : memref<18x24x128xf32, #tpu.memory_space<vmem>>, vector<16x16x128xf32>
    %85 = vector.shape_cast %84 : vector<16x16x128xf32> to vector<256x128xf32>
    %c0_94 = arith.constant 0 : index
    %c0_95 = arith.constant 0 : index
    %86 = vector.load %arg3[%c0_94, %c0_95] : memref<1152x128xf32, #tpu.memory_space<vmem>>, vector<128x128xf32>
    %cst_96 = arith.constant dense<0.000000e+00> : vector<256x128xf32>
    %87 = tpu.matmul %85, %86, %cst_96 {dimension_numbers = #tpu.dot_dimension_numbers<[1], [0], [0], [1], [0, 0, 1, 1], [], []>} : vector<256x128xf32>, vector<128x128xf32>, vector<256x128xf32> -> vector<256x128xf32>
    %c0_97 = arith.constant 0 : index
    %c1_98 = arith.constant 1 : index
    %c0_99 = arith.constant 0 : index
    %88 = vector.load %arg5[%c0_97, %c1_98, %c0_99] : memref<18x24x128xf32, #tpu.memory_space<vmem>>, vector<16x16x128xf32>
    %89 = vector.shape_cast %88 : vector<16x16x128xf32> to vector<256x128xf32>
    %c128_100 = arith.constant 128 : index
    %c0_101 = arith.constant 0 : index
    %90 = vector.load %arg3[%c128_100, %c0_101] : memref<1152x128xf32, #tpu.memory_space<vmem>>, vector<128x128xf32>
    %cst_102 = arith.constant dense<0.000000e+00> : vector<256x128xf32>
    %91 = tpu.matmul %89, %90, %cst_102 {dimension_numbers = #tpu.dot_dimension_numbers<[1], [0], [0], [1], [0, 0, 1, 1], [], []>} : vector<256x128xf32>, vector<128x128xf32>, vector<256x128xf32> -> vector<256x128xf32>
    %92 = arith.addf %87, %91 : vector<256x128xf32>
    %c0_103 = arith.constant 0 : index
    %c2_104 = arith.constant 2 : index
    %c0_105 = arith.constant 0 : index
    %93 = vector.load %arg5[%c0_103, %c2_104, %c0_105] : memref<18x24x128xf32, #tpu.memory_space<vmem>>, vector<16x16x128xf32>
    %94 = vector.shape_cast %93 : vector<16x16x128xf32> to vector<256x128xf32>
    %c256_106 = arith.constant 256 : index
    %c0_107 = arith.constant 0 : index
    %95 = vector.load %arg3[%c256_106, %c0_107] : memref<1152x128xf32, #tpu.memory_space<vmem>>, vector<128x128xf32>
    %cst_108 = arith.constant dense<0.000000e+00> : vector<256x128xf32>
    %96 = tpu.matmul %94, %95, %cst_108 {dimension_numbers = #tpu.dot_dimension_numbers<[1], [0], [0], [1], [0, 0, 1, 1], [], []>} : vector<256x128xf32>, vector<128x128xf32>, vector<256x128xf32> -> vector<256x128xf32>
    %97 = arith.addf %92, %96 : vector<256x128xf32>
    %c1_109 = arith.constant 1 : index
    %c0_110 = arith.constant 0 : index
    %c0_111 = arith.constant 0 : index
    %98 = vector.load %arg5[%c1_109, %c0_110, %c0_111] : memref<18x24x128xf32, #tpu.memory_space<vmem>>, vector<16x16x128xf32>
    %99 = vector.shape_cast %98 : vector<16x16x128xf32> to vector<256x128xf32>
    %c384_112 = arith.constant 384 : index
    %c0_113 = arith.constant 0 : index
    %100 = vector.load %arg3[%c384_112, %c0_113] : memref<1152x128xf32, #tpu.memory_space<vmem>>, vector<128x128xf32>
    %cst_114 = arith.constant dense<0.000000e+00> : vector<256x128xf32>
    %101 = tpu.matmul %99, %100, %cst_114 {dimension_numbers = #tpu.dot_dimension_numbers<[1], [0], [0], [1], [0, 0, 1, 1], [], []>} : vector<256x128xf32>, vector<128x128xf32>, vector<256x128xf32> -> vector<256x128xf32>
    %102 = arith.addf %97, %101 : vector<256x128xf32>
    %c1_115 = arith.constant 1 : index
    %c1_116 = arith.constant 1 : index
    %c0_117 = arith.constant 0 : index
    %103 = vector.load %arg5[%c1_115, %c1_116, %c0_117] : memref<18x24x128xf32, #tpu.memory_space<vmem>>, vector<16x16x128xf32>
    %104 = vector.shape_cast %103 : vector<16x16x128xf32> to vector<256x128xf32>
    %c512_118 = arith.constant 512 : index
    %c0_119 = arith.constant 0 : index
    %105 = vector.load %arg3[%c512_118, %c0_119] : memref<1152x128xf32, #tpu.memory_space<vmem>>, vector<128x128xf32>
    %cst_120 = arith.constant dense<0.000000e+00> : vector<256x128xf32>
    %106 = tpu.matmul %104, %105, %cst_120 {dimension_numbers = #tpu.dot_dimension_numbers<[1], [0], [0], [1], [0, 0, 1, 1], [], []>} : vector<256x128xf32>, vector<128x128xf32>, vector<256x128xf32> -> vector<256x128xf32>
    %107 = arith.addf %102, %106 : vector<256x128xf32>
    %c1_121 = arith.constant 1 : index
    %c2_122 = arith.constant 2 : index
    %c0_123 = arith.constant 0 : index
    %108 = vector.load %arg5[%c1_121, %c2_122, %c0_123] : memref<18x24x128xf32, #tpu.memory_space<vmem>>, vector<16x16x128xf32>
    %109 = vector.shape_cast %108 : vector<16x16x128xf32> to vector<256x128xf32>
    %c640_124 = arith.constant 640 : index
    %c0_125 = arith.constant 0 : index
    %110 = vector.load %arg3[%c640_124, %c0_125] : memref<1152x128xf32, #tpu.memory_space<vmem>>, vector<128x128xf32>
    %cst_126 = arith.constant dense<0.000000e+00> : vector<256x128xf32>
    %111 = tpu.matmul %109, %110, %cst_126 {dimension_numbers = #tpu.dot_dimension_numbers<[1], [0], [0], [1], [0, 0, 1, 1], [], []>} : vector<256x128xf32>, vector<128x128xf32>, vector<256x128xf32> -> vector<256x128xf32>
    %112 = arith.addf %107, %111 : vector<256x128xf32>
    %c2_127 = arith.constant 2 : index
    %c0_128 = arith.constant 0 : index
    %c0_129 = arith.constant 0 : index
    %113 = vector.load %arg5[%c2_127, %c0_128, %c0_129] : memref<18x24x128xf32, #tpu.memory_space<vmem>>, vector<16x16x128xf32>
    %114 = vector.shape_cast %113 : vector<16x16x128xf32> to vector<256x128xf32>
    %c768_130 = arith.constant 768 : index
    %c0_131 = arith.constant 0 : index
    %115 = vector.load %arg3[%c768_130, %c0_131] : memref<1152x128xf32, #tpu.memory_space<vmem>>, vector<128x128xf32>
    %cst_132 = arith.constant dense<0.000000e+00> : vector<256x128xf32>
    %116 = tpu.matmul %114, %115, %cst_132 {dimension_numbers = #tpu.dot_dimension_numbers<[1], [0], [0], [1], [0, 0, 1, 1], [], []>} : vector<256x128xf32>, vector<128x128xf32>, vector<256x128xf32> -> vector<256x128xf32>
    %117 = arith.addf %112, %116 : vector<256x128xf32>
    %c2_133 = arith.constant 2 : index
    %c1_134 = arith.constant 1 : index
    %c0_135 = arith.constant 0 : index
    %118 = vector.load %arg5[%c2_133, %c1_134, %c0_135] : memref<18x24x128xf32, #tpu.memory_space<vmem>>, vector<16x16x128xf32>
    %119 = vector.shape_cast %118 : vector<16x16x128xf32> to vector<256x128xf32>
    %c896_136 = arith.constant 896 : index
    %c0_137 = arith.constant 0 : index
    %120 = vector.load %arg3[%c896_136, %c0_137] : memref<1152x128xf32, #tpu.memory_space<vmem>>, vector<128x128xf32>
    %cst_138 = arith.constant dense<0.000000e+00> : vector<256x128xf32>
    %121 = tpu.matmul %119, %120, %cst_138 {dimension_numbers = #tpu.dot_dimension_numbers<[1], [0], [0], [1], [0, 0, 1, 1], [], []>} : vector<256x128xf32>, vector<128x128xf32>, vector<256x128xf32> -> vector<256x128xf32>
    %122 = arith.addf %117, %121 : vector<256x128xf32>
    %c2_139 = arith.constant 2 : index
    %c2_140 = arith.constant 2 : index
    %c0_141 = arith.constant 0 : index
    %123 = vector.load %arg5[%c2_139, %c2_140, %c0_141] : memref<18x24x128xf32, #tpu.memory_space<vmem>>, vector<16x16x128xf32>
    %124 = vector.shape_cast %123 : vector<16x16x128xf32> to vector<256x128xf32>
    %c1024_142 = arith.constant 1024 : index
    %c0_143 = arith.constant 0 : index
    %125 = vector.load %arg3[%c1024_142, %c0_143] : memref<1152x128xf32, #tpu.memory_space<vmem>>, vector<128x128xf32>
    %cst_144 = arith.constant dense<0.000000e+00> : vector<256x128xf32>
    %126 = tpu.matmul %124, %125, %cst_144 {dimension_numbers = #tpu.dot_dimension_numbers<[1], [0], [0], [1], [0, 0, 1, 1], [], []>} : vector<256x128xf32>, vector<128x128xf32>, vector<256x128xf32> -> vector<256x128xf32>
    %127 = arith.addf %122, %126 : vector<256x128xf32>
    %cst_145 = arith.constant dense<0.000000e+00> : vector<128xf32>
    %128 = vector.multi_reduction <add>, %127, %cst_145 [0] : vector<256x128xf32> to vector<128xf32>
    %129 = vector.shape_cast %128 : vector<128xf32> to vector<1x128xf32>
    %cst_146 = arith.constant 2.560000e+02 : f32
    %130 = vector.broadcast %cst_146 : f32 to vector<1x128xf32>
    %131 = arith.divf %129, %130 : vector<1x128xf32>
    %132 = vector.broadcast %131 : vector<1x128xf32> to vector<256x128xf32>
    %133 = arith.subf %127, %132 : vector<256x128xf32>
    %134 = arith.mulf %133, %133 : vector<256x128xf32>
    %cst_147 = arith.constant dense<0.000000e+00> : vector<128xf32>
    %135 = vector.multi_reduction <add>, %134, %cst_147 [0] : vector<256x128xf32> to vector<128xf32>
    %136 = vector.shape_cast %135 : vector<128xf32> to vector<1x128xf32>
    %cst_148 = arith.constant 2.560000e+02 : f32
    %137 = vector.broadcast %cst_148 : f32 to vector<1x128xf32>
    %138 = arith.divf %136, %137 : vector<1x128xf32>
    %cst_149 = arith.constant 9.99999974E-6 : f32
    %139 = vector.broadcast %cst_149 : f32 to vector<1x128xf32>
    %140 = arith.addf %138, %139 : vector<1x128xf32>
    %141 = math.rsqrt %140 : vector<1x128xf32>
    %142 = vector.broadcast %141 : vector<1x128xf32> to vector<256x128xf32>
    %143 = arith.mulf %133, %142 : vector<256x128xf32>
    %c0_150 = arith.constant 0 : index
    %c0_151 = arith.constant 0 : index
    %c0_152 = arith.constant 0 : index
    %144 = vector.load %arg1[%c0_150, %c0_151, %c0_152] : memref<1x256x128xf32, #tpu.memory_space<vmem>>, vector<1x256x128xf32>
    %145 = vector.shape_cast %144 : vector<1x256x128xf32> to vector<256x128xf32>
    %146 = arith.addf %145, %143 : vector<256x128xf32>
    %c0_153 = arith.constant 0 : index
    %c0_154 = arith.constant 0 : index
    %c0_155 = arith.constant 0 : index
    %147 = vector.load %arg4[%c0_153, %c0_154, %c0_155] : memref<1x256x128xf32, #tpu.memory_space<vmem>>, vector<1x256x128xf32>
    %148 = vector.shape_cast %147 : vector<1x256x128xf32> to vector<256x128xf32>
    %149 = vector.shape_cast %146 : vector<256x128xf32> to vector<1x256x128xf32>
    tpu.vector_store %arg4[%c0_153, %c0_154, %c0_155], %149 {strides = array<i32>} : memref<1x256x128xf32, #tpu.memory_space<vmem>>, vector<1x256x128xf32>,
    return
  }
  func.func @transform_0(%arg0: i32) -> (i32, i32, i32) {
    %c0_i32 = arith.constant 0 : i32
    %c0_i32_0 = arith.constant 0 : i32
    %c0_i32_1 = arith.constant 0 : i32
    return %arg0, %c0_i32, %c0_i32_0 : i32, i32, i32
  }
  func.func @transform_1(%arg0: i32) -> (i32, i32) {
    %c0_i32 = arith.constant 0 : i32
    %c0_i32_0 = arith.constant 0 : i32
    %c0_i32_1 = arith.constant 0 : i32
    return %c0_i32, %c0_i32_0 : i32, i32
  }
  func.func @transform_2(%arg0: i32) -> (i32, i32) {
    %c0_i32 = arith.constant 0 : i32
    %c0_i32_0 = arith.constant 0 : i32
    %c0_i32_1 = arith.constant 0 : i32
    return %c0_i32, %c0_i32_0 : i32, i32
  }
  func.func @transform_3(%arg0: i32) -> (i32, i32, i32) {
    %c0_i32 = arith.constant 0 : i32
    %c0_i32_0 = arith.constant 0 : i32
    %c0_i32_1 = arith.constant 0 : i32
    return %arg0, %c0_i32, %c0_i32_0 : i32, i32, i32
  }
}

</mosaic_0001>

<llo_original>
// kernel: tpu_custom_call.1
$region0: #{tpu_custom_call.1}
  #allocation0 [shape = 'u32[]', space=smem, size = 0x4, offset = 0x4, fixed_abs, tag = 'smem constant byte address 0x4 - core index']
  #allocation1 [shape = 'u32[72,128]{1,0:T(1,128)}', space=vmem, size = 0x9000, scoped, tag = 'internal scratch']
  #allocation2 [shape = 'f32[18,24,128]{2,1,0:T(8,128)}', space=vmem, size = 0x36000, scoped, tag = 'scratch operand']
  %s0 = inlined_call_operand.hbm [shape: f32[2,256,128], index: 0, kind: input, shape index: {}]
  %s1 = inlined_call_operand.hbm [shape: f32[1152,128], index: 1, kind: input, shape index: {}]
  %s2 = inlined_call_operand.hbm [shape: f32[1152,128], index: 2, kind: input, shape index: {}]
  %s3 = inlined_call_operand.hbm [shape: f32[2,256,128], index: 3, kind: output, shape index: {}]
  %s4 = sld [smem:[#allocation0]]
  $region57: #{tpu_custom_call.1} parent=0
    _
  %s6 = ssub.s32 1, %s4
  %s7 = scalar_select 0, %s6, %s4
  $region1: #{tpu_custom_call.1} parent=0
    #allocation3 [shape = 'u8[262144]{0}', space=vmem, size = 0x40000, scoped, tag = 'input window, operand 0']
    #allocation4 [shape = 's32[2]{0}', space=sflag, size = 0x8, scoped, tag = 'scoped memory for tpu_custom_call.1']
    #allocation5 [shape = 's32[2]{0}', space=sflag, size = 0x8, scoped, tag = 'scoped memory for tpu_custom_call.1']
    #allocation6 [shape = 'u8[589824]{0}', space=vmem, size = 0x90000, scoped, tag = 'input window, operand 1, single buffered']
    #allocation7 [shape = 's32[1]{0}', space=sflag, size = 0x4, scoped, tag = 'scoped memory for tpu_custom_call.1']
    #allocation8 [shape = 'u8[589824]{0}', space=vmem, size = 0x90000, scoped, tag = 'input window, operand 2, single buffered']
    #allocation9 [shape = 'u8[262144]{0}', space=vmem, size = 0x40000, scoped, tag = 'output window, operand 0']
    %8 = vsyncpa [#allocation4], 0
    %s9 = scalar_lea.sflag [#allocation4], 1
    %10 = vsyncpa %s9, 0
    %11 = vsyncpa [#allocation7], 0
    %12 = vsyncpa [#allocation5], 0
    %s13 = scalar_lea.sflag [#allocation5], 1
    %14 = vsyncpa %s13, 0
    loop: start=0, step=1, limit=4
    $region2: #{tpu_custom_call.1} parent=1 // loop_pre_header
      _
    $region3: #{tpu_custom_call.1} parent=1 // loop_header
      %s16 = sphi 0, %s20
      %p17 = scmp.ge.s32.totalorder %s16, 4
      %s26 = sphi 0, %s28
      %s29 = sphi 0, %s26
      %s30 = sphi 0, %s29
      %s46 = sphi 0, %s30
      %s50 = sphi 0, %s50
      %s52 = sphi 0, %s50
      %s53 = sphi 0, %s52
      %s67 = sphi 0, %s53
      %s71 = sphi 0, %s71
      %s73 = sphi 0, %s71
      %s74 = sphi 0, %s73
      %s88 = sphi 0, %s74
      %s94 = sphi 0, %s96
      %s97 = sphi 0, %s94
      %s98 = sphi 0, %s97
      %s114 = sphi 0, %s98
    $region4: #{tpu_custom_call.1} parent=1 // loop_header_branch
      %19 = sbr.rel (%p17) target = $region8
    $region5: #{tpu_custom_call.1} parent=1 // loop_body
      %s21 = ssub.s32 %s16, 1
      %s22 = ssub.s32 %s16, 2
      %s23 = sadd.s32 %s16, 1
      %s24 = ssub.s32 %s16, %s23
      %p25 = scmp.eq.s32.totalorder %s24, 0
      %s27 = sadd.s32 %s26, 1
      %s28 = scalar_select %p25, %s26, %s27
      %p31 = pneg %p25
      %p32 = scmp.eq.s32.totalorder %s16, 1
      %p33 = por %p31, %p32
      %p34 = scmp.ne.s32.totalorder %s26, %s29
      %p35 = scmp.eq.s32.totalorder %s16, 0
      %p36 = por %p34, %p35
      %p37 = scmp.ne.s32.totalorder %s26, %s29
      %p38 = scmp.eq.s32.totalorder %s21, 1
      %p39 = por %p37, %p38
      %p40 = scmp.ne.s32.totalorder %s29, %s30
      %p41 = scmp.eq.s32.totalorder %s21, 0
      %p42 = por %p40, %p41
      %p43 = scmp.ne.s32.totalorder %s29, %s30
      %p44 = scmp.eq.s32.totalorder %s22, 1
      %p45 = por %p43, %p44
      %p47 = scmp.ne.s32.totalorder %s30, %s46
      %p48 = scmp.eq.s32.totalorder %s22, 0
      %p49 = por %p47, %p48
      %s51 = sadd.s32 %s50, 1
      %p54 = scmp.eq.s32.totalorder %s16, 1
      %p55 = scmp.ne.s32.totalorder %s50, %s52
      %p56 = scmp.eq.s32.totalorder %s16, 0
      %p57 = por %p55, %p56
      %p58 = scmp.ne.s32.totalorder %s50, %s52
      %p59 = scmp.eq.s32.totalorder %s21, 1
      %p60 = por %p58, %p59
      %p61 = scmp.ne.s32.totalorder %s52, %s53
      %p62 = scmp.eq.s32.totalorder %s21, 0
      %p63 = por %p61, %p62
      %p64 = scmp.ne.s32.totalorder %s52, %s53
      %p65 = scmp.eq.s32.totalorder %s22, 1
      %p66 = por %p64, %p65
      %p68 = scmp.ne.s32.totalorder %s53, %s67
      %p69 = scmp.eq.s32.totalorder %s22, 0
      %p70 = por %p68, %p69
      %s72 = sadd.s32 %s71, 1
      %p75 = scmp.eq.s32.totalorder %s16, 1
      %p76 = scmp.ne.s32.totalorder %s71, %s73
      %p77 = scmp.eq.s32.totalorder %s16, 0
      %p78 = por %p76, %p77
      %p79 = scmp.ne.s32.totalorder %s71, %s73
      %p80 = scmp.eq.s32.totalorder %s21, 1
      %p81 = por %p79, %p80
      %p82 = scmp.ne.s32.totalorder %s73, %s74
      %p83 = scmp.eq.s32.totalorder %s21, 0
      %p84 = por %p82, %p83
      %p85 = scmp.ne.s32.totalorder %s73, %s74
      %p86 = scmp.eq.s32.totalorder %s22, 1
      %p87 = por %p85, %p86
      %p89 = scmp.ne.s32.totalorder %s74, %s88
      %p90 = scmp.eq.s32.totalorder %s22, 0
      %p91 = por %p89, %p90
      %s92 = ssub.s32 %s16, %s23
      %p93 = scmp.eq.s32.totalorder %s92, 0
      %s95 = sadd.s32 %s94, 1
      %s96 = scalar_select %p93, %s94, %s95
      %p99 = pneg %p93
      %p100 = scmp.eq.s32.totalorder %s16, 1
      %p101 = por %p99, %p100
      %p102 = scmp.ne.s32.totalorder %s94, %s97
      %p103 = scmp.eq.s32.totalorder %s16, 0
      %p104 = por %p102, %p103
      %p105 = scmp.ne.s32.totalorder %s94, %s97
      %p106 = scmp.eq.s32.totalorder %s21, 1
      %p107 = por %p105, %p106
      %p108 = scmp.ne.s32.totalorder %s97, %s98
      %p109 = scmp.eq.s32.totalorder %s21, 0
      %p110 = por %p108, %p109
      %p111 = scmp.ne.s32.totalorder %s97, %s98
      %p112 = scmp.eq.s32.totalorder %s22, 1
      %p113 = por %p111, %p112
      %p115 = scmp.ne.s32.totalorder %s98, %s114
      %p116 = scmp.eq.s32.totalorder %s22, 0
      %p117 = por %p115, %p116
      %p118 = scmp.le.s32.totalorder 1, %s16
      %p119 = scmp.lt.s32.totalorder %s16, 3
      %p120 = pnand %p118, %p119
      %p121 = pneg %p120
      // Predicated region
      $region9: #{tpu_custom_call.1} parent=5 // pred_check
        _
      $region10: #{tpu_custom_call.1} parent=5 // pred_check_branch
        %123 = sbr.rel (%p120) target = $region12
      $region11: #{tpu_custom_call.1} parent=5 // pred_region
        %s124 = ssub.s32 %s16, 1
        // Predicated region
        $region13: #{tpu_custom_call.1} parent=11 // pred_check
          %p125 = pneg %p63
        $region14: #{tpu_custom_call.1} parent=11 // pred_check_branch
          %127 = sbr.rel (%p125) target = $region16
        $region15: #{tpu_custom_call.1} parent=11 // pred_region
          %129 = vsyncadd [#allocation7], 0
          %s130 = sshll.u32 %s1, 4
          %s131 = int_to_ptr.hbm [resolvable:$true] %s130
          %s132 = sshll.u32 [#allocation6], 4
          %s133 = int_to_ptr.vmem [resolvable:$true] %s132
          %138 = dma.hbm_to_vmem [thread:$0]  %s131, 18432, %s133, [#allocation7], 128, 128, 8
        $region16: #{tpu_custom_call.1} parent=11 // pred_fallthru
          _
        // Predicated region
        $region17: #{tpu_custom_call.1} parent=11 // pred_check
          %p139 = pneg %p84
        $region18: #{tpu_custom_call.1} parent=11 // pred_check_branch
          %141 = sbr.rel (%p139) target = $region20
        $region19: #{tpu_custom_call.1} parent=11 // pred_region
          %143 = vsyncadd [#allocation7], 0
          %s144 = sshll.u32 %s2, 4
          %s145 = int_to_ptr.hbm [resolvable:$true] %s144
          %s146 = sshll.u32 [#allocation8], 4
          %s147 = int_to_ptr.vmem [resolvable:$true] %s146
          %152 = dma.hbm_to_vmem [thread:$0]  %s145, 18432, %s147, [#allocation7], 128, 128, 8
        $region20: #{tpu_custom_call.1} parent=11 // pred_fallthru
          _
      $region12: #{tpu_custom_call.1} parent=5 // pred_fallthru
        _
      %p153 = scmp.lt.s32.totalorder %s16, 2
      // Predicated region
      $region21: #{tpu_custom_call.1} parent=5 // pred_check
        %p154 = pneg %p153
      $region22: #{tpu_custom_call.1} parent=5 // pred_check_branch
        %156 = sbr.rel (%p154) target = $region24
      $region23: #{tpu_custom_call.1} parent=5 // pred_region
        // Predicated region
        $region25: #{tpu_custom_call.1} parent=23 // pred_check
          %p157 = pneg %p36
        $region26: #{tpu_custom_call.1} parent=23 // pred_check_branch
          %159 = sbr.rel (%p157) target = $region28
        $region27: #{tpu_custom_call.1} parent=23 // pred_region
          %s160 = sand.u32 %s26, 1
          %s161 = scalar_lea.sflag [#allocation4], %s160
          %s162 = sand.u32 %s26, 1
          %s163 = smul.addr %s162, 256
          %s164 = scalar_lea.vmem [#allocation3], %s163
          %166 = vsyncadd %s161, 0
          %s167 = smul.addr %s16, 32
          %s168 = smul.addr %s167, 8
          %s169 = scalar_lea.hbm %s0, %s168
          %s170 = sshll.u32 %s169, 4
          %s171 = int_to_ptr.hbm [resolvable:$true] %s170
          %s172 = sshll.u32 %s164, 4
          %s173 = int_to_ptr.vmem [resolvable:$true] %s172
          %178 = dma.hbm_to_vmem [thread:$0]  %s171, 4096, %s173, %s161, 128, 128, 8
        $region28: #{tpu_custom_call.1} parent=23 // pred_fallthru
          _
      $region24: #{tpu_custom_call.1} parent=5 // pred_fallthru
        _
      %p179 = scmp.le.s32.totalorder 1, %s16
      %p180 = scmp.lt.s32.totalorder %s16, 3
      %p181 = pnand %p179, %p180
      %p182 = pneg %p181
      // Predicated region
      $region29: #{tpu_custom_call.1} parent=5 // pred_check
        _
      $region30: #{tpu_custom_call.1} parent=5 // pred_check_branch
        %184 = sbr.rel (%p181) target = $region32
      $region31: #{tpu_custom_call.1} parent=5 // pred_region
        %s185 = ssub.s32 %s16, 1
        %s186 = sand.u32 %s29, 1
        %s187 = scalar_lea.sflag [#allocation4], %s186
        %s188 = sand.u32 %s29, 1
        %s189 = smul.addr %s188, 256
        %s190 = scalar_lea.vmem [#allocation3], %s189
        // Predicated region
        $region33: #{tpu_custom_call.1} parent=31 // pred_check
          %p191 = pneg %p42
        $region34: #{tpu_custom_call.1} parent=31 // pred_check_branch
          %193 = sbr.rel (%p191) target = $region36
        $region35: #{tpu_custom_call.1} parent=31 // pred_region
          %195 = dma.done %s187, 4096
        $region36: #{tpu_custom_call.1} parent=31 // pred_fallthru
          _
        // Predicated region
        $region37: #{tpu_custom_call.1} parent=31 // pred_check
          %p196 = pneg %p63
        $region38: #{tpu_custom_call.1} parent=31 // pred_check_branch
          %198 = sbr.rel (%p196) target = $region40
        $region39: #{tpu_custom_call.1} parent=31 // pred_region
          %200 = dma.done [#allocation7], 18432
        $region40: #{tpu_custom_call.1} parent=31 // pred_fallthru
          _
        // Predicated region
        $region41: #{tpu_custom_call.1} parent=31 // pred_check
          %p201 = pneg %p84
        $region42: #{tpu_custom_call.1} parent=31 // pred_check_branch
          %203 = sbr.rel (%p201) target = $region44
        $region43: #{tpu_custom_call.1} parent=31 // pred_region
          %205 = dma.done [#allocation7], 18432
        $region44: #{tpu_custom_call.1} parent=31 // pred_fallthru
          _
        %s206 = sand.u32 %s29, 1
        %s207 = scalar_lea.sflag [#allocation4], %s206
        %s208 = sand.u32 %s29, 1
        %s209 = smul.addr %s208, 256
        %s210 = scalar_lea.vmem [#allocation3], %s209
        %p211 = pneg %p42
        %p212 = pneg %p39
        %p213 = pneg %p63
        %p214 = pneg %p60
        %p215 = pneg %p84
        %p216 = pneg %p81
        %p217 = pneg %p110
        %p218 = pneg %p107
        %s219 = sand.u32 %s97, 1
        %s220 = scalar_lea.sflag [#allocation5], %s219
        %s221 = sand.u32 %s97, 1
        %s222 = smul.addr %s221, 256
        %s223 = scalar_lea.vmem [#allocation9], %s222
        %v224 = vld [vmem:[%s190] sm:$0xff]
        %v225 = vld [vmem:[%s190 + $0x8] sm:$0xff]
        %v226 = vld [vmem:[%s190 + $0x10] sm:$0xff]
        %v227 = vld [vmem:[%s190 + $0x18] sm:$0xff]
        %v228 = vld [vmem:[%s190 + $0x20] sm:$0xff]
        %v229 = vld [vmem:[%s190 + $0x28] sm:$0xff]
        %v230 = vld [vmem:[%s190 + $0x30] sm:$0xff]
        %v231 = vld [vmem:[%s190 + $0x38] sm:$0xff]
        %v232 = vld [vmem:[%s190 + $0x40] sm:$0xff]
        %v233 = vld [vmem:[%s190 + $0x48] sm:$0xff]
        %v234 = vld [vmem:[%s190 + $0x50] sm:$0xff]
        %v235 = vld [vmem:[%s190 + $0x58] sm:$0xff]
        %v236 = vld [vmem:[%s190 + $0x60] sm:$0xff]
        %v237 = vld [vmem:[%s190 + $0x68] sm:$0xff]
        %v238 = vld [vmem:[%s190 + $0x70] sm:$0xff]
        %v239 = vld [vmem:[%s190 + $0x78] sm:$0xff]
        %v240 = vld [vmem:[%s190 + $0x80] sm:$0xff]
        %v241 = vld [vmem:[%s190 + $0x88] sm:$0xff]
        %v242 = vld [vmem:[%s190 + $0x90] sm:$0xff]
        %v243 = vld [vmem:[%s190 + $0x98] sm:$0xff]
        %v244 = vld [vmem:[%s190 + $0xa0] sm:$0xff]
        %v245 = vld [vmem:[%s190 + $0xa8] sm:$0xff]
        %v246 = vld [vmem:[%s190 + $0xb0] sm:$0xff]
        %v247 = vld [vmem:[%s190 + $0xb8] sm:$0xff]
        %v248 = vld [vmem:[%s190 + $0xc0] sm:$0xff]
        %v249 = vld [vmem:[%s190 + $0xc8] sm:$0xff]
        %v250 = vld [vmem:[%s190 + $0xd0] sm:$0xff]
        %v251 = vld [vmem:[%s190 + $0xd8] sm:$0xff]
        %v252 = vld [vmem:[%s190 + $0xe0] sm:$0xff]
        %v253 = vld [vmem:[%s190 + $0xe8] sm:$0xff]
        %v254 = vld [vmem:[%s190 + $0xf0] sm:$0xff]
        %v255 = vld [vmem:[%s190 + $0xf8] sm:$0xff]
        %s256 = scalar_lea.vmem [#allocation2], 24
        %257 = vst [vmem:[%s256 + $0x1] sm:$0xff] %v224
        %258 = vst [vmem:[%s256 + $0x9] sm:$0xff] %v225
        %259 = vst [vmem:[%s256 + $0x19] sm:$0xff] %v226
        %260 = vst [vmem:[%s256 + $0x21] sm:$0xff] %v227
        %261 = vst [vmem:[%s256 + $0x31] sm:$0xff] %v228
        %262 = vst [vmem:[%s256 + $0x39] sm:$0xff] %v229
        %263 = vst [vmem:[%s256 + $0x49] sm:$0xff] %v230
        %264 = vst [vmem:[%s256 + $0x51] sm:$0xff] %v231
        %265 = vst [vmem:[%s256 + $0x61] sm:$0xff] %v232
        %266 = vst [vmem:[%s256 + $0x69] sm:$0xff] %v233
        %267 = vst [vmem:[%s256 + $0x79] sm:$0xff] %v234
        %268 = vst [vmem:[%s256 + $0x81] sm:$0xff] %v235
        %269 = vst [vmem:[%s256 + $0x91] sm:$0xff] %v236
        %270 = vst [vmem:[%s256 + $0x99] sm:$0xff] %v237
        %271 = vst [vmem:[%s256 + $0xa9] sm:$0xff] %v238
        %272 = vst [vmem:[%s256 + $0xb1] sm:$0xff] %v239
        %273 = vst [vmem:[%s256 + $0xc1] sm:$0xff] %v240
        %274 = vst [vmem:[%s256 + $0xc9] sm:$0xff] %v241
        %275 = vst [vmem:[%s256 + $0xd9] sm:$0xff] %v242
        %276 = vst [vmem:[%s256 + $0xe1] sm:$0xff] %v243
        %277 = vst [vmem:[%s256 + $0xf1] sm:$0xff] %v244
        %278 = vst [vmem:[%s256 + $0xf9] sm:$0xff] %v245
        %279 = vst [vmem:[%s256 + $0x109] sm:$0xff] %v246
        %280 = vst [vmem:[%s256 + $0x111] sm:$0xff] %v247
        %281 = vst [vmem:[%s256 + $0x121] sm:$0xff] %v248
        %282 = vst [vmem:[%s256 + $0x129] sm:$0xff] %v249
        %283 = vst [vmem:[%s256 + $0x139] sm:$0xff] %v250
        %284 = vst [vmem:[%s256 + $0x141] sm:$0xff] %v251
        %285 = vst [vmem:[%s256 + $0x151] sm:$0xff] %v252
        %286 = vst [vmem:[%s256 + $0x159] sm:$0xff] %v253
        %287 = vst [vmem:[%s256 + $0x169] sm:$0xff] %v254
        %288 = vst [vmem:[%s256 + $0x171] sm:$0xff] %v255
        %289 = vst [vmem:[#allocation2 + $0x1] sm:$0xff] %v226
        %290 = vst [vmem:[#allocation2 + $0x9] sm:$0xff] %v227
        %s291 = scalar_lea.vmem [#allocation2], 408
        %292 = vst [vmem:[%s291 + $0x1] sm:$0xff] %v252
        %293 = vst [vmem:[%s291 + $0x9] sm:$0xff] %v253
        %v294 = vld [vmem:[#allocation2 + $0x2] sm:$0x1]
        %v295 = vld [vmem:[#allocation2 + $0x1a] sm:$0x1]
        %v296 = vld [vmem:[#allocation2 + $0x32] sm:$0x1]
        %v297 = vld [vmem:[#allocation2 + $0x4a] sm:$0x1]
        %v298 = vld [vmem:[#allocation2 + $0x62] sm:$0x1]
        %v299 = vld [vmem:[#allocation2 + $0x7a] sm:$0x1]
        %v300 = vld [vmem:[#allocation2 + $0x92] sm:$0x1]
        %v301 = vld [vmem:[#allocation2 + $0xaa] sm:$0x1]
        %v302 = vld [vmem:[#allocation2 + $0xc2] sm:$0x1]
        %v303 = vld [vmem:[#allocation2 + $0xda] sm:$0x1]
        %v304 = vld [vmem:[#allocation2 + $0xf2] sm:$0x1]
        %v305 = vld [vmem:[#allocation2 + $0x10a] sm:$0x1]
        %v306 = vld [vmem:[#allocation2 + $0x122] sm:$0x1]
        %v307 = vld [vmem:[#allocation2 + $0x13a] sm:$0x1]
        %v308 = vld [vmem:[#allocation2 + $0x152] sm:$0x1]
        %v309 = vld [vmem:[#allocation2 + $0x16a] sm:$0x1]
        %v310 = vld [vmem:[#allocation2 + $0x182] sm:$0x1]
        %v311 = vld [vmem:[#allocation2 + $0x19a] sm:$0x1]
        %312 = vst [vmem:[#allocation2] sm:$0x1] %v294
        %313 = vst [vmem:[#allocation2 + $0x18] sm:$0x1] %v295
        %314 = vst [vmem:[#allocation2 + $0x30] sm:$0x1] %v296
        %315 = vst [vmem:[#allocation2 + $0x48] sm:$0x1] %v297
        %316 = vst [vmem:[#allocation2 + $0x60] sm:$0x1] %v298
        %317 = vst [vmem:[#allocation2 + $0x78] sm:$0x1] %v299
        %318 = vst [vmem:[#allocation2 + $0x90] sm:$0x1] %v300
        %319 = vst [vmem:[#allocation2 + $0xa8] sm:$0x1] %v301
        %320 = vst [vmem:[#allocation2 + $0xc0] sm:$0x1] %v302
        %321 = vst [vmem:[#allocation2 + $0xd8] sm:$0x1] %v303
        %322 = vst [vmem:[#allocation2 + $0xf0] sm:$0x1] %v304
        %323 = vst [vmem:[#allocation2 + $0x108] sm:$0x1] %v305
        %324 = vst [vmem:[#allocation2 + $0x120] sm:$0x1] %v306
        %325 = vst [vmem:[#allocation2 + $0x138] sm:$0x1] %v307
        %326 = vst [vmem:[#allocation2 + $0x150] sm:$0x1] %v308
        %327 = vst [vmem:[#allocation2 + $0x168] sm:$0x1] %v309
        %328 = vst [vmem:[#allocation2 + $0x180] sm:$0x1] %v310
        %329 = vst [vmem:[#allocation2 + $0x198] sm:$0x1] %v311
        %v330 = vld [vmem:[#allocation2 + $0xf] sm:$0x1]
        %v331 = vld [vmem:[#allocation2 + $0x27] sm:$0x1]
        %v332 = vld [vmem:[#allocation2 + $0x3f] sm:$0x1]
        %v333 = vld [vmem:[#allocation2 + $0x57] sm:$0x1]
        %v334 = vld [vmem:[#allocation2 + $0x6f] sm:$0x1]
        %v335 = vld [vmem:[#allocation2 + $0x87] sm:$0x1]
        %v336 = vld [vmem:[#allocation2 + $0x9f] sm:$0x1]
        %v337 = vld [vmem:[#allocation2 + $0xb7] sm:$0x1]
        %v338 = vld [vmem:[#allocation2 + $0xcf] sm:$0x1]
        %v339 = vld [vmem:[#allocation2 + $0xe7] sm:$0x1]
        %v340 = vld [vmem:[#allocation2 + $0xff] sm:$0x1]
        %v341 = vld [vmem:[#allocation2 + $0x117] sm:$0x1]
        %v342 = vld [vmem:[#allocation2 + $0x12f] sm:$0x1]
        %v343 = vld [vmem:[#allocation2 + $0x147] sm:$0x1]
        %v344 = vld [vmem:[#allocation2 + $0x15f] sm:$0x1]
        %v345 = vld [vmem:[#allocation2 + $0x177] sm:$0x1]
        %v346 = vld [vmem:[#allocation2 + $0x18f] sm:$0x1]
        %v347 = vld [vmem:[#allocation2 + $0x1a7] sm:$0x1]
        %348 = vst [vmem:[#allocation2 + $0x11] sm:$0x1] %v330
        %349 = vst [vmem:[#allocation2 + $0x29] sm:$0x1] %v331
        %350 = vst [vmem:[#allocation2 + $0x41] sm:$0x1] %v332
        %351 = vst [vmem:[#allocation2 + $0x59] sm:$0x1] %v333
        %352 = vst [vmem:[#allocation2 + $0x71] sm:$0x1] %v334
        %353 = vst [vmem:[#allocation2 + $0x89] sm:$0x1] %v335
        %354 = vst [vmem:[#allocation2 + $0xa1] sm:$0x1] %v336
        %355 = vst [vmem:[#allocation2 + $0xb9] sm:$0x1] %v337
        %356 = vst [vmem:[#allocation2 + $0xd1] sm:$0x1] %v338
        %357 = vst [vmem:[#allocation2 + $0xe9] sm:$0x1] %v339
        %358 = vst [vmem:[#allocation2 + $0x101] sm:$0x1] %v340
        %359 = vst [vmem:[#allocation2 + $0x119] sm:$0x1] %v341
        %360 = vst [vmem:[#allocation2 + $0x131] sm:$0x1] %v342
        %361 = vst [vmem:[#allocation2 + $0x149] sm:$0x1] %v343
        %362 = vst [vmem:[#allocation2 + $0x161] sm:$0x1] %v344
        %363 = vst [vmem:[#allocation2 + $0x179] sm:$0x1] %v345
        %364 = vst [vmem:[#allocation2 + $0x191] sm:$0x1] %v346
        %365 = vst [vmem:[#allocation2 + $0x1a9] sm:$0x1] %v347
        %v366 = vld [vmem:[#allocation2] sm:$0xff]
        %v367 = vld [vmem:[#allocation2 + $0x8] sm:$0xff]
        %v368 = vld [vmem:[#allocation2 + $0x18] sm:$0xff]
        %v369 = vld [vmem:[#allocation2 + $0x20] sm:$0xff]
        %v370 = vld [vmem:[#allocation2 + $0x30] sm:$0xff]
        %v371 = vld [vmem:[#allocation2 + $0x38] sm:$0xff]
        %v372 = vld [vmem:[#allocation2 + $0x48] sm:$0xff]
        %v373 = vld [vmem:[#allocation2 + $0x50] sm:$0xff]
        %v374 = vld [vmem:[#allocation2 + $0x60] sm:$0xff]
        %v375 = vld [vmem:[#allocation2 + $0x68] sm:$0xff]
        %v376 = vld [vmem:[#allocation2 + $0x78] sm:$0xff]
        %v377 = vld [vmem:[#allocation2 + $0x80] sm:$0xff]
        %v378 = vld [vmem:[#allocation2 + $0x90] sm:$0xff]
        %v379 = vld [vmem:[#allocation2 + $0x98] sm:$0xff]
        %v380 = vld [vmem:[#allocation2 + $0xa8] sm:$0xff]
        %v381 = vld [vmem:[#allocation2 + $0xb0] sm:$0xff]
        %v382 = vld [vmem:[#allocation2 + $0xc0] sm:$0xff]
        %v383 = vld [vmem:[#allocation2 + $0xc8] sm:$0xff]
        %v384 = vld [vmem:[#allocation2 + $0xd8] sm:$0xff]
        %v385 = vld [vmem:[#allocation2 + $0xe0] sm:$0xff]
        %v386 = vld [vmem:[#allocation2 + $0xf0] sm:$0xff]
        %v387 = vld [vmem:[#allocation2 + $0xf8] sm:$0xff]
        %v388 = vld [vmem:[#allocation2 + $0x108] sm:$0xff]
        %v389 = vld [vmem:[#allocation2 + $0x110] sm:$0xff]
        %v390 = vld [vmem:[#allocation2 + $0x120] sm:$0xff]
        %v391 = vld [vmem:[#allocation2 + $0x128] sm:$0xff]
        %v392 = vld [vmem:[#allocation2 + $0x138] sm:$0xff]
        %v393 = vld [vmem:[#allocation2 + $0x140] sm:$0xff]
        %v394 = vld [vmem:[#allocation2 + $0x150] sm:$0xff]
        %v395 = vld [vmem:[#allocation2 + $0x158] sm:$0xff]
        %v396 = vld [vmem:[#allocation2 + $0x168] sm:$0xff]
        %v397 = vld [vmem:[#allocation2 + $0x170] sm:$0xff]
        %v398 = vld [vmem:[#allocation6] sm:$0xff]
        %v399 = vld [vmem:[#allocation6 + $0x8] sm:$0xff]
        %v400 = vld [vmem:[#allocation6 + $0x10] sm:$0xff]
        %v401 = vld [vmem:[#allocation6 + $0x18] sm:$0xff]
        %v402 = vld [vmem:[#allocation6 + $0x20] sm:$0xff]
        %v403 = vld [vmem:[#allocation6 + $0x28] sm:$0xff]
        %v404 = vld [vmem:[#allocation6 + $0x30] sm:$0xff]
        %v405 = vld [vmem:[#allocation6 + $0x38] sm:$0xff]
        %v406 = vld [vmem:[#allocation6 + $0x40] sm:$0xff]
        %v407 = vld [vmem:[#allocation6 + $0x48] sm:$0xff]
        %v408 = vld [vmem:[#allocation6 + $0x50] sm:$0xff]
        %v409 = vld [vmem:[#allocation6 + $0x58] sm:$0xff]
        %v410 = vld [vmem:[#allocation6 + $0x60] sm:$0xff]
        %v411 = vld [vmem:[#allocation6 + $0x68] sm:$0xff]
        %v412 = vld [vmem:[#allocation6 + $0x70] sm:$0xff]
        %v413 = vld [vmem:[#allocation6 + $0x78] sm:$0xff]
        %v414 = vld [vmem:[#allocation2 + $0x1] sm:$0xff]
        %v415 = vld [vmem:[#allocation2 + $0x9] sm:$0xff]
        %v416 = vld [vmem:[#allocation2 + $0x19] sm:$0xff]
        %v417 = vld [vmem:[#allocation2 + $0x21] sm:$0xff]
        %v418 = vld [vmem:[#allocation2 + $0x31] sm:$0xff]
        %v419 = vld [vmem:[#allocation2 + $0x39] sm:$0xff]
        %v420 = vld [vmem:[#allocation2 + $0x49] sm:$0xff]
        %v421 = vld [vmem:[#allocation2 + $0x51] sm:$0xff]
        %v422 = vld [vmem:[#allocation2 + $0x61] sm:$0xff]
        %v423 = vld [vmem:[#allocation2 + $0x69] sm:$0xff]
        %v424 = vld [vmem:[#allocation2 + $0x79] sm:$0xff]
        %v425 = vld [vmem:[#allocation2 + $0x81] sm:$0xff]
        %v426 = vld [vmem:[#allocation2 + $0x91] sm:$0xff]
        %v427 = vld [vmem:[#allocation2 + $0x99] sm:$0xff]
        %v428 = vld [vmem:[#allocation2 + $0xa9] sm:$0xff]
        %v429 = vld [vmem:[#allocation2 + $0xb1] sm:$0xff]
        %v430 = vld [vmem:[#allocation2 + $0xc1] sm:$0xff]
        %v431 = vld [vmem:[#allocation2 + $0xc9] sm:$0xff]
        %v432 = vld [vmem:[#allocation2 + $0xd9] sm:$0xff]
        %v433 = vld [vmem:[#allocation2 + $0xe1] sm:$0xff]
        %v434 = vld [vmem:[#allocation2 + $0xf1] sm:$0xff]
        %v435 = vld [vmem:[#allocation2 + $0xf9] sm:$0xff]
        %v436 = vld [vmem:[#allocation2 + $0x109] sm:$0xff]
        %v437 = vld [vmem:[#allocation2 + $0x111] sm:$0xff]
        %v438 = vld [vmem:[#allocation2 + $0x121] sm:$0xff]
        %v439 = vld [vmem:[#allocation2 + $0x129] sm:$0xff]
        %v440 = vld [vmem:[#allocation2 + $0x139] sm:$0xff]
        %v441 = vld [vmem:[#allocation2 + $0x141] sm:$0xff]
        %v442 = vld [vmem:[#allocation2 + $0x151] sm:$0xff]
        %v443 = vld [vmem:[#allocation2 + $0x159] sm:$0xff]
        %v444 = vld [vmem:[#allocation2 + $0x169] sm:$0xff]
        %v445 = vld [vmem:[#allocation2 + $0x171] sm:$0xff]
        %v446 = vld [vmem:[#allocation6 + $0x80] sm:$0xff]
        %v447 = vld [vmem:[#allocation6 + $0x88] sm:$0xff]
        %v448 = vld [vmem:[#allocation6 + $0x90] sm:$0xff]
        %v449 = vld [vmem:[#allocation6 + $0x98] sm:$0xff]
        %v450 = vld [vmem:[#allocation6 + $0xa0] sm:$0xff]
        %v451 = vld [vmem:[#allocation6 + $0xa8] sm:$0xff]
        %v452 = vld [vmem:[#allocation6 + $0xb0] sm:$0xff]
        %v453 = vld [vmem:[#allocation6 + $0xb8] sm:$0xff]
        %v454 = vld [vmem:[#allocation6 + $0xc0] sm:$0xff]
        %v455 = vld [vmem:[#allocation6 + $0xc8] sm:$0xff]
        %v456 = vld [vmem:[#allocation6 + $0xd0] sm:$0xff]
        %v457 = vld [vmem:[#allocation6 + $0xd8] sm:$0xff]
        %v458 = vld [vmem:[#allocation6 + $0xe0] sm:$0xff]
        %v459 = vld [vmem:[#allocation6 + $0xe8] sm:$0xff]
        %v460 = vld [vmem:[#allocation6 + $0xf0] sm:$0xff]
        %v461 = vld [vmem:[#allocation6 + $0xf8] sm:$0xff]
        %462 = vmatpush.msra.mxu0 %v461
        %463 = vmatpush.msra.mxu0 %v460
        %464 = vmatpush.msra.mxu0 %v459
        %465 = vmatpush.msra.mxu0 %v458
        %466 = vmatpush.msra.mxu0 %v457
        %467 = vmatpush.msra.mxu0 %v456
        %468 = vmatpush.msra.mxu0 %v455
        %469 = vmatpush.msra.mxu0 %v454
        %470 = vmatpush.msra.mxu0 %v453
        %471 = vmatpush.msra.mxu0 %v452
        %472 = vmatpush.msra.mxu0 %v451
        %473 = vmatpush.msra.mxu0 %v450
        %474 = vmatpush.msra.mxu0 %v449
        %475 = vmatpush.msra.mxu0 %v448
        %476 = vmatpush.msra.mxu0 %v447
        %477 = vmatpush.msra.mxu0 %v446
        %478 = vmatmul.f32.gmra.mxu0 %v414
        %v479 = vpop.f32.mrf.mxu0
        %v480 = vadd.f32 0.0, %v479
        %481 = vmatmul.f32.gmra.mxu0 %v415
        %v482 = vpop.f32.mrf.mxu0
        %v483 = vadd.f32 0.0, %v482
        %484 = vmatmul.f32.gmra.mxu0 %v416
        %v485 = vpop.f32.mrf.mxu0
        %v486 = vadd.f32 0.0, %v485
        %487 = vmatmul.f32.gmra.mxu0 %v417
        %v488 = vpop.f32.mrf.mxu0
        %v489 = vadd.f32 0.0, %v488
        %490 = vmatmul.f32.gmra.mxu0 %v418
        %v491 = vpop.f32.mrf.mxu0
        %v492 = vadd.f32 0.0, %v491
        %493 = vmatmul.f32.gmra.mxu0 %v419
        %v494 = vpop.f32.mrf.mxu0
        %v495 = vadd.f32 0.0, %v494
        %496 = vmatmul.f32.gmra.mxu0 %v420
        %v497 = vpop.f32.mrf.mxu0
        %v498 = vadd.f32 0.0, %v497
        %499 = vmatmul.f32.gmra.mxu0 %v421
        %v500 = vpop.f32.mrf.mxu0
        %v501 = vadd.f32 0.0, %v500
        %502 = vmatmul.f32.gmra.mxu0 %v422
        %v503 = vpop.f32.mrf.mxu0
        %v504 = vadd.f32 0.0, %v503
        %505 = vmatmul.f32.gmra.mxu0 %v423
        %v506 = vpop.f32.mrf.mxu0
        %v507 = vadd.f32 0.0, %v506
        %508 = vmatmul.f32.gmra.mxu0 %v424
        %v509 = vpop.f32.mrf.mxu0
        %v510 = vadd.f32 0.0, %v509
        %511 = vmatmul.f32.gmra.mxu0 %v425
        %v512 = vpop.f32.mrf.mxu0
        %v513 = vadd.f32 0.0, %v512
        %514 = vmatmul.f32.gmra.mxu0 %v426
        %v515 = vpop.f32.mrf.mxu0
        %v516 = vadd.f32 0.0, %v515
        %517 = vmatmul.f32.gmra.mxu0 %v427
        %v518 = vpop.f32.mrf.mxu0
        %v519 = vadd.f32 0.0, %v518
        %520 = vmatmul.f32.gmra.mxu0 %v428
        %v521 = vpop.f32.mrf.mxu0
        %v522 = vadd.f32 0.0, %v521
        %523 = vmatmul.f32.gmra.mxu0 %v429
        %v524 = vpop.f32.mrf.mxu0
        %v525 = vadd.f32 0.0, %v524
        %526 = vmatmul.f32.gmra.mxu0 %v430
        %v527 = vpop.f32.mrf.mxu0
        %v528 = vadd.f32 0.0, %v527
        %529 = vmatmul.f32.gmra.mxu0 %v431
        %v530 = vpop.f32.mrf.mxu0
        %v531 = vadd.f32 0.0, %v530
        %532 = vmatmul.f32.gmra.mxu0 %v432
        %v533 = vpop.f32.mrf.mxu0
        %v534 = vadd.f32 0.0, %v533
        %535 = vmatmul.f32.gmra.mxu0 %v433
        %v536 = vpop.f32.mrf.mxu0
        %v537 = vadd.f32 0.0, %v536
        %538 = vmatmul.f32.gmra.mxu0 %v434
        %v539 = vpop.f32.mrf.mxu0
        %v540 = vadd.f32 0.0, %v539
        %541 = vmatmul.f32.gmra.mxu0 %v435
        %v542 = vpop.f32.mrf.mxu0
        %v543 = vadd.f32 0.0, %v542
        %544 = vmatmul.f32.gmra.mxu0 %v436
        %v545 = vpop.f32.mrf.mxu0
        %v546 = vadd.f32 0.0, %v545
        %547 = vmatmul.f32.gmra.mxu0 %v437
        %v548 = vpop.f32.mrf.mxu0
        %v549 = vadd.f32 0.0, %v548
        %550 = vmatmul.f32.gmra.mxu0 %v438
        %v551 = vpop.f32.mrf.mxu0
        %v552 = vadd.f32 0.0, %v551
        %553 = vmatmul.f32.gmra.mxu0 %v439
        %v554 = vpop.f32.mrf.mxu0
        %v555 = vadd.f32 0.0, %v554
        %556 = vmatmul.f32.gmra.mxu0 %v440
        %v557 = vpop.f32.mrf.mxu0
        %v558 = vadd.f32 0.0, %v557
        %559 = vmatmul.f32.gmra.mxu0 %v441
        %v560 = vpop.f32.mrf.mxu0
        %v561 = vadd.f32 0.0, %v560
        %562 = vmatmul.f32.gmra.mxu0 %v442
        %v563 = vpop.f32.mrf.mxu0
        %v564 = vadd.f32 0.0, %v563
        %565 = vmatmul.f32.gmra.mxu0 %v443
        %v566 = vpop.f32.mrf.mxu0
        %v567 = vadd.f32 0.0, %v566
        %568 = vmatmul.f32.gmra.mxu0 %v444
        %v569 = vpop.f32.mrf.mxu0
        %v570 = vadd.f32 0.0, %v569
        %571 = vmatmul.f32.gmra.mxu0 %v445
        %v572 = vpop.f32.mrf.mxu0
        %v573 = vadd.f32 0.0, %v572
        %574 = vdwg.mxu0
        %575 = vmatpush.msra.mxu0 %v413
        %576 = vmatpush.msra.mxu0 %v412
        %577 = vmatpush.msra.mxu0 %v411
        %578 = vmatpush.msra.mxu0 %v410
        %579 = vmatpush.msra.mxu0 %v409
        %580 = vmatpush.msra.mxu0 %v408
        %581 = vmatpush.msra.mxu0 %v407
        %582 = vmatpush.msra.mxu0 %v406
        %583 = vmatpush.msra.mxu0 %v405
        %584 = vmatpush.msra.mxu0 %v404
        %585 = vmatpush.msra.mxu0 %v403
        %586 = vmatpush.msra.mxu0 %v402
        %587 = vmatpush.msra.mxu0 %v401
        %588 = vmatpush.msra.mxu0 %v400
        %589 = vmatpush.msra.mxu0 %v399
        %590 = vmatpush.msra.mxu0 %v398
        %591 = vmatmul.f32.gmra.mxu0 %v366
        %v592 = vpop.f32.mrf.mxu0
        %v593 = vadd.f32 %v480, %v592
        %594 = vmatmul.f32.gmra.mxu0 %v367
        %v595 = vpop.f32.mrf.mxu0
        %v596 = vadd.f32 %v483, %v595
        %597 = vmatmul.f32.gmra.mxu0 %v368
        %v598 = vpop.f32.mrf.mxu0
        %v599 = vadd.f32 %v486, %v598
        %600 = vmatmul.f32.gmra.mxu0 %v369
        %v601 = vpop.f32.mrf.mxu0
        %v602 = vadd.f32 %v489, %v601
        %603 = vmatmul.f32.gmra.mxu0 %v370
        %v604 = vpop.f32.mrf.mxu0
        %v605 = vadd.f32 %v492, %v604
        %606 = vmatmul.f32.gmra.mxu0 %v371
        %v607 = vpop.f32.mrf.mxu0
        %v608 = vadd.f32 %v495, %v607
        %609 = vmatmul.f32.gmra.mxu0 %v372
        %v610 = vpop.f32.mrf.mxu0
        %v611 = vadd.f32 %v498, %v610
        %612 = vmatmul.f32.gmra.mxu0 %v373
        %v613 = vpop.f32.mrf.mxu0
        %v614 = vadd.f32 %v501, %v613
        %615 = vmatmul.f32.gmra.mxu0 %v374
        %v616 = vpop.f32.mrf.mxu0
        %v617 = vadd.f32 %v504, %v616
        %618 = vmatmul.f32.gmra.mxu0 %v375
        %v619 = vpop.f32.mrf.mxu0
        %v620 = vadd.f32 %v507, %v619
        %621 = vmatmul.f32.gmra.mxu0 %v376
        %v622 = vpop.f32.mrf.mxu0
        %v623 = vadd.f32 %v510, %v622
        %624 = vmatmul.f32.gmra.mxu0 %v377
        %v625 = vpop.f32.mrf.mxu0
        %v626 = vadd.f32 %v513, %v625
        %627 = vmatmul.f32.gmra.mxu0 %v378
        %v628 = vpop.f32.mrf.mxu0
        %v629 = vadd.f32 %v516, %v628
        %630 = vmatmul.f32.gmra.mxu0 %v379
        %v631 = vpop.f32.mrf.mxu0
        %v632 = vadd.f32 %v519, %v631
        %633 = vmatmul.f32.gmra.mxu0 %v380
        %v634 = vpop.f32.mrf.mxu0
        %v635 = vadd.f32 %v522, %v634
        %636 = vmatmul.f32.gmra.mxu0 %v381
        %v637 = vpop.f32.mrf.mxu0
        %v638 = vadd.f32 %v525, %v637
        %639 = vmatmul.f32.gmra.mxu0 %v382
        %v640 = vpop.f32.mrf.mxu0
        %v641 = vadd.f32 %v528, %v640
        %642 = vmatmul.f32.gmra.mxu0 %v383
        %v643 = vpop.f32.mrf.mxu0
        %v644 = vadd.f32 %v531, %v643
        %645 = vmatmul.f32.gmra.mxu0 %v384
        %v646 = vpop.f32.mrf.mxu0
        %v647 = vadd.f32 %v534, %v646
        %648 = vmatmul.f32.gmra.mxu0 %v385
        %v649 = vpop.f32.mrf.mxu0
        %v650 = vadd.f32 %v537, %v649
        %651 = vmatmul.f32.gmra.mxu0 %v386
        %v652 = vpop.f32.mrf.mxu0
        %v653 = vadd.f32 %v540, %v652
        %654 = vmatmul.f32.gmra.mxu0 %v387
        %v655 = vpop.f32.mrf.mxu0
        %v656 = vadd.f32 %v543, %v655
        %657 = vmatmul.f32.gmra.mxu0 %v388
        %v658 = vpop.f32.mrf.mxu0
        %v659 = vadd.f32 %v546, %v658
        %660 = vmatmul.f32.gmra.mxu0 %v389
        %v661 = vpop.f32.mrf.mxu0
        %v662 = vadd.f32 %v549, %v661
        %663 = vmatmul.f32.gmra.mxu0 %v390
        %v664 = vpop.f32.mrf.mxu0
        %v665 = vadd.f32 %v552, %v664
        %666 = vmatmul.f32.gmra.mxu0 %v391
        %v667 = vpop.f32.mrf.mxu0
        %v668 = vadd.f32 %v555, %v667
        %669 = vmatmul.f32.gmra.mxu0 %v392
        %v670 = vpop.f32.mrf.mxu0
        %v671 = vadd.f32 %v558, %v670
        %672 = vmatmul.f32.gmra.mxu0 %v393
        %v673 = vpop.f32.mrf.mxu0
        %v674 = vadd.f32 %v561, %v673
        %675 = vmatmul.f32.gmra.mxu0 %v394
        %v676 = vpop.f32.mrf.mxu0
        %v677 = vadd.f32 %v564, %v676
        %678 = vmatmul.f32.gmra.mxu0 %v395
        %v679 = vpop.f32.mrf.mxu0
        %v680 = vadd.f32 %v567, %v679
        %681 = vmatmul.f32.gmra.mxu0 %v396
        %v682 = vpop.f32.mrf.mxu0
        %v683 = vadd.f32 %v570, %v682
        %684 = vmatmul.f32.gmra.mxu0 %v397
        %v685 = vpop.f32.mrf.mxu0
        %v686 = vadd.f32 %v573, %v685
        %687 = vdwg.mxu0
        %v688 = vld [vmem:[#allocation2 + $0x2] sm:$0xff]
        %v689 = vld [vmem:[#allocation2 + $0xa] sm:$0xff]
        %v690 = vld [vmem:[#allocation2 + $0x1a] sm:$0xff]
        %v691 = vld [vmem:[#allocation2 + $0x22] sm:$0xff]
        %v692 = vld [vmem:[#allocation2 + $0x32] sm:$0xff]
        %v693 = vld [vmem:[#allocation2 + $0x3a] sm:$0xff]
        %v694 = vld [vmem:[#allocation2 + $0x4a] sm:$0xff]
        %v695 = vld [vmem:[#allocation2 + $0x52] sm:$0xff]
        %v696 = vld [vmem:[#allocation2 + $0x62] sm:$0xff]
        %v697 = vld [vmem:[#allocation2 + $0x6a] sm:$0xff]
        %v698 = vld [vmem:[#allocation2 + $0x7a] sm:$0xff]
        %v699 = vld [vmem:[#allocation2 + $0x82] sm:$0xff]
        %v700 = vld [vmem:[#allocation2 + $0x92] sm:$0xff]
        %v701 = vld [vmem:[#allocation2 + $0x9a] sm:$0xff]
        %v702 = vld [vmem:[#allocation2 + $0xaa] sm:$0xff]
        %v703 = vld [vmem:[#allocation2 + $0xb2] sm:$0xff]
        %v704 = vld [vmem:[#allocation2 + $0xc2] sm:$0xff]
        %v705 = vld [vmem:[#allocation2 + $0xca] sm:$0xff]
        %v706 = vld [vmem:[#allocation2 + $0xda] sm:$0xff]
        %v707 = vld [vmem:[#allocation2 + $0xe2] sm:$0xff]
        %v708 = vld [vmem:[#allocation2 + $0xf2] sm:$0xff]
        %v709 = vld [vmem:[#allocation2 + $0xfa] sm:$0xff]
        %v710 = vld [vmem:[#allocation2 + $0x10a] sm:$0xff]
        %v711 = vld [vmem:[#allocation2 + $0x112] sm:$0xff]
        %v712 = vld [vmem:[#allocation2 + $0x122] sm:$0xff]
        %v713 = vld [vmem:[#allocation2 + $0x12a] sm:$0xff]
        %v714 = vld [vmem:[#allocation2 + $0x13a] sm:$0xff]
        %v715 = vld [vmem:[#allocation2 + $0x142] sm:$0xff]
        %v716 = vld [vmem:[#allocation2 + $0x152] sm:$0xff]
        %v717 = vld [vmem:[#allocation2 + $0x15a] sm:$0xff]
        %v718 = vld [vmem:[#allocation2 + $0x16a] sm:$0xff]
        %v719 = vld [vmem:[#allocation2 + $0x172] sm:$0xff]
        %v720 = vld [vmem:[#allocation6 + $0x100] sm:$0xff]
        %v721 = vld [vmem:[#allocation6 + $0x108] sm:$0xff]
        %v722 = vld [vmem:[#allocation6 + $0x110] sm:$0xff]
        %v723 = vld [vmem:[#allocation6 + $0x118] sm:$0xff]
        %v724 = vld [vmem:[#allocation6 + $0x120] sm:$0xff]
        %v725 = vld [vmem:[#allocation6 + $0x128] sm:$0xff]
        %v726 = vld [vmem:[#allocation6 + $0x130] sm:$0xff]
        %v727 = vld [vmem:[#allocation6 + $0x138] sm:$0xff]
        %v728 = vld [vmem:[#allocation6 + $0x140] sm:$0xff]
        %v729 = vld [vmem:[#allocation6 + $0x148] sm:$0xff]
        %v730 = vld [vmem:[#allocation6 + $0x150] sm:$0xff]
        %v731 = vld [vmem:[#allocation6 + $0x158] sm:$0xff]
        %v732 = vld [vmem:[#allocation6 + $0x160] sm:$0xff]
        %v733 = vld [vmem:[#allocation6 + $0x168] sm:$0xff]
        %v734 = vld [vmem:[#allocation6 + $0x170] sm:$0xff]
        %v735 = vld [vmem:[#allocation6 + $0x178] sm:$0xff]
        %736 = vmatpush.msra.mxu0 %v735
        %737 = vmatpush.msra.mxu0 %v734
        %738 = vmatpush.msra.mxu0 %v733
        %739 = vmatpush.msra.mxu0 %v732
        %740 = vmatpush.msra.mxu0 %v731
        %741 = vmatpush.msra.mxu0 %v730
        %742 = vmatpush.msra.mxu0 %v729
        %743 = vmatpush.msra.mxu0 %v728
        %744 = vmatpush.msra.mxu0 %v727
        %745 = vmatpush.msra.mxu0 %v726
        %746 = vmatpush.msra.mxu0 %v725
        %747 = vmatpush.msra.mxu0 %v724
        %748 = vmatpush.msra.mxu0 %v723
        %749 = vmatpush.msra.mxu0 %v722
        %750 = vmatpush.msra.mxu0 %v721
        %751 = vmatpush.msra.mxu0 %v720
        %752 = vmatmul.f32.gmra.mxu0 %v688
        %v753 = vpop.f32.mrf.mxu0
        %v754 = vadd.f32 0.0, %v753
        %755 = vmatmul.f32.gmra.mxu0 %v689
        %v756 = vpop.f32.mrf.mxu0
        %v757 = vadd.f32 0.0, %v756
        %758 = vmatmul.f32.gmra.mxu0 %v690
        %v759 = vpop.f32.mrf.mxu0
        %v760 = vadd.f32 0.0, %v759
        %761 = vmatmul.f32.gmra.mxu0 %v691
        %v762 = vpop.f32.mrf.mxu0
        %v763 = vadd.f32 0.0, %v762
        %764 = vmatmul.f32.gmra.mxu0 %v692
        %v765 = vpop.f32.mrf.mxu0
        %v766 = vadd.f32 0.0, %v765
        %767 = vmatmul.f32.gmra.mxu0 %v693
        %v768 = vpop.f32.mrf.mxu0
        %v769 = vadd.f32 0.0, %v768
        %770 = vmatmul.f32.gmra.mxu0 %v694
        %v771 = vpop.f32.mrf.mxu0
        %v772 = vadd.f32 0.0, %v771
        %773 = vmatmul.f32.gmra.mxu0 %v695
        %v774 = vpop.f32.mrf.mxu0
        %v775 = vadd.f32 0.0, %v774
        %776 = vmatmul.f32.gmra.mxu0 %v696
        %v777 = vpop.f32.mrf.mxu0
        %v778 = vadd.f32 0.0, %v777
        %779 = vmatmul.f32.gmra.mxu0 %v697
        %v780 = vpop.f32.mrf.mxu0
        %v781 = vadd.f32 0.0, %v780
        %782 = vmatmul.f32.gmra.mxu0 %v698
        %v783 = vpop.f32.mrf.mxu0
        %v784 = vadd.f32 0.0, %v783
        %785 = vmatmul.f32.gmra.mxu0 %v699
        %v786 = vpop.f32.mrf.mxu0
        %v787 = vadd.f32 0.0, %v786
        %788 = vmatmul.f32.gmra.mxu0 %v700
        %v789 = vpop.f32.mrf.mxu0
        %v790 = vadd.f32 0.0, %v789
        %791 = vmatmul.f32.gmra.mxu0 %v701
        %v792 = vpop.f32.mrf.mxu0
        %v793 = vadd.f32 0.0, %v792
        %794 = vmatmul.f32.gmra.mxu0 %v702
        %v795 = vpop.f32.mrf.mxu0
        %v796 = vadd.f32 0.0, %v795
        %797 = vmatmul.f32.gmra.mxu0 %v703
        %v798 = vpop.f32.mrf.mxu0
        %v799 = vadd.f32 0.0, %v798
        %800 = vmatmul.f32.gmra.mxu0 %v704
        %v801 = vpop.f32.mrf.mxu0
        %v802 = vadd.f32 0.0, %v801
        %803 = vmatmul.f32.gmra.mxu0 %v705
        %v804 = vpop.f32.mrf.mxu0
        %v805 = vadd.f32 0.0, %v804
        %806 = vmatmul.f32.gmra.mxu0 %v706
        %v807 = vpop.f32.mrf.mxu0
        %v808 = vadd.f32 0.0, %v807
        %809 = vmatmul.f32.gmra.mxu0 %v707
        %v810 = vpop.f32.mrf.mxu0
        %v811 = vadd.f32 0.0, %v810
        %812 = vmatmul.f32.gmra.mxu0 %v708
        %v813 = vpop.f32.mrf.mxu0
        %v814 = vadd.f32 0.0, %v813
        %815 = vmatmul.f32.gmra.mxu0 %v709
        %v816 = vpop.f32.mrf.mxu0
        %v817 = vadd.f32 0.0, %v816
        %818 = vmatmul.f32.gmra.mxu0 %v710
        %v819 = vpop.f32.mrf.mxu0
        %v820 = vadd.f32 0.0, %v819
        %821 = vmatmul.f32.gmra.mxu0 %v711
        %v822 = vpop.f32.mrf.mxu0
        %v823 = vadd.f32 0.0, %v822
        %824 = vmatmul.f32.gmra.mxu0 %v712
        %v825 = vpop.f32.mrf.mxu0
        %v826 = vadd.f32 0.0, %v825
        %827 = vmatmul.f32.gmra.mxu0 %v713
        %v828 = vpop.f32.mrf.mxu0
        %v829 = vadd.f32 0.0, %v828
        %830 = vmatmul.f32.gmra.mxu0 %v714
        %v831 = vpop.f32.mrf.mxu0
        %v832 = vadd.f32 0.0, %v831
        %833 = vmatmul.f32.gmra.mxu0 %v715
        %v834 = vpop.f32.mrf.mxu0
        %v835 = vadd.f32 0.0, %v834
        %836 = vmatmul.f32.gmra.mxu0 %v716
        %v837 = vpop.f32.mrf.mxu0
        %v838 = vadd.f32 0.0, %v837
        %839 = vmatmul.f32.gmra.mxu0 %v717
        %v840 = vpop.f32.mrf.mxu0
        %v841 = vadd.f32 0.0, %v840
        %842 = vmatmul.f32.gmra.mxu0 %v718
        %v843 = vpop.f32.mrf.mxu0
        %v844 = vadd.f32 0.0, %v843
        %845 = vmatmul.f32.gmra.mxu0 %v719
        %v846 = vpop.f32.mrf.mxu0
        %v847 = vadd.f32 0.0, %v846
        %848 = vdwg.mxu0
        %v849 = vadd.f32 %v593, %v754
        %v850 = vadd.f32 %v596, %v757
        %v851 = vadd.f32 %v599, %v760
        %v852 = vadd.f32 %v602, %v763
        %v853 = vadd.f32 %v605, %v766
        %v854 = vadd.f32 %v608, %v769
        %v855 = vadd.f32 %v611, %v772
        %v856 = vadd.f32 %v614, %v775
        %v857 = vadd.f32 %v617, %v778
        %v858 = vadd.f32 %v620, %v781
        %v859 = vadd.f32 %v623, %v784
        %v860 = vadd.f32 %v626, %v787
        %v861 = vadd.f32 %v629, %v790
        %v862 = vadd.f32 %v632, %v793
        %v863 = vadd.f32 %v635, %v796
        %v864 = vadd.f32 %v638, %v799
        %v865 = vadd.f32 %v641, %v802
        %v866 = vadd.f32 %v644, %v805
        %v867 = vadd.f32 %v647, %v808
        %v868 = vadd.f32 %v650, %v811
        %v869 = vadd.f32 %v653, %v814
        %v870 = vadd.f32 %v656, %v817
        %v871 = vadd.f32 %v659, %v820
        %v872 = vadd.f32 %v662, %v823
        %v873 = vadd.f32 %v665, %v826
        %v874 = vadd.f32 %v668, %v829
        %v875 = vadd.f32 %v671, %v832
        %v876 = vadd.f32 %v674, %v835
        %v877 = vadd.f32 %v677, %v838
        %v878 = vadd.f32 %v680, %v841
        %v879 = vadd.f32 %v683, %v844
        %v880 = vadd.f32 %v686, %v847
        %v881 = vld [vmem:[%s256] sm:$0xff]
        %v882 = vld [vmem:[%s256 + $0x8] sm:$0xff]
        %v883 = vld [vmem:[%s256 + $0x18] sm:$0xff]
        %v884 = vld [vmem:[%s256 + $0x20] sm:$0xff]
        %v885 = vld [vmem:[%s256 + $0x30] sm:$0xff]
        %v886 = vld [vmem:[%s256 + $0x38] sm:$0xff]
        %v887 = vld [vmem:[%s256 + $0x48] sm:$0xff]
        %v888 = vld [vmem:[%s256 + $0x50] sm:$0xff]
        %v889 = vld [vmem:[%s256 + $0x60] sm:$0xff]
        %v890 = vld [vmem:[%s256 + $0x68] sm:$0xff]
        %v891 = vld [vmem:[%s256 + $0x78] sm:$0xff]
        %v892 = vld [vmem:[%s256 + $0x80] sm:$0xff]
        %v893 = vld [vmem:[%s256 + $0x90] sm:$0xff]
        %v894 = vld [vmem:[%s256 + $0x98] sm:$0xff]
        %v895 = vld [vmem:[%s256 + $0xa8] sm:$0xff]
        %v896 = vld [vmem:[%s256 + $0xb0] sm:$0xff]
        %v897 = vld [vmem:[%s256 + $0xc0] sm:$0xff]
        %v898 = vld [vmem:[%s256 + $0xc8] sm:$0xff]
        %v899 = vld [vmem:[%s256 + $0xd8] sm:$0xff]
        %v900 = vld [vmem:[%s256 + $0xe0] sm:$0xff]
        %v901 = vld [vmem:[%s256 + $0xf0] sm:$0xff]
        %v902 = vld [vmem:[%s256 + $0xf8] sm:$0xff]
        %v903 = vld [vmem:[%s256 + $0x108] sm:$0xff]
        %v904 = vld [vmem:[%s256 + $0x110] sm:$0xff]
        %v905 = vld [vmem:[%s256 + $0x120] sm:$0xff]
        %v906 = vld [vmem:[%s256 + $0x128] sm:$0xff]
        %v907 = vld [vmem:[%s256 + $0x138] sm:$0xff]
        %v908 = vld [vmem:[%s256 + $0x140] sm:$0xff]
        %v909 = vld [vmem:[%s256 + $0x150] sm:$0xff]
        %v910 = vld [vmem:[%s256 + $0x158] sm:$0xff]
        %v911 = vld [vmem:[%s256 + $0x168] sm:$0xff]
        %v912 = vld [vmem:[%s256 + $0x170] sm:$0xff]
        %v913 = vld [vmem:[#allocation6 + $0x180] sm:$0xff]
        %v914 = vld [vmem:[#allocation6 + $0x188] sm:$0xff]
        %v915 = vld [vmem:[#allocation6 + $0x190] sm:$0xff]
        %v916 = vld [vmem:[#allocation6 + $0x198] sm:$0xff]
        %v917 = vld [vmem:[#allocation6 + $0x1a0] sm:$0xff]
        %v918 = vld [vmem:[#allocation6 + $0x1a8] sm:$0xff]
        %v919 = vld [vmem:[#allocation6 + $0x1b0] sm:$0xff]
        %v920 = vld [vmem:[#allocation6 + $0x1b8] sm:$0xff]
        %v921 = vld [vmem:[#allocation6 + $0x1c0] sm:$0xff]
        %v922 = vld [vmem:[#allocation6 + $0x1c8] sm:$0xff]
        %v923 = vld [vmem:[#allocation6 + $0x1d0] sm:$0xff]
        %v924 = vld [vmem:[#allocation6 + $0x1d8] sm:$0xff]
        %v925 = vld [vmem:[#allocation6 + $0x1e0] sm:$0xff]
        %v926 = vld [vmem:[#allocation6 + $0x1e8] sm:$0xff]
        %v927 = vld [vmem:[#allocation6 + $0x1f0] sm:$0xff]
        %v928 = vld [vmem:[#allocation6 + $0x1f8] sm:$0xff]
        %929 = vmatpush.msra.mxu0 %v928
        %930 = vmatpush.msra.mxu0 %v927
        %931 = vmatpush.msra.mxu0 %v926
        %932 = vmatpush.msra.mxu0 %v925
        %933 = vmatpush.msra.mxu0 %v924
        %934 = vmatpush.msra.mxu0 %v923
        %935 = vmatpush.msra.mxu0 %v922
        %936 = vmatpush.msra.mxu0 %v921
        %937 = vmatpush.msra.mxu0 %v920
        %938 = vmatpush.msra.mxu0 %v919
        %939 = vmatpush.msra.mxu0 %v918
        %940 = vmatpush.msra.mxu0 %v917
        %941 = vmatpush.msra.mxu0 %v916
        %942 = vmatpush.msra.mxu0 %v915
        %943 = vmatpush.msra.mxu0 %v914
        %944 = vmatpush.msra.mxu0 %v913
        %945 = vmatmul.f32.gmra.mxu0 %v881
        %v946 = vpop.f32.mrf.mxu0
        %v947 = vadd.f32 0.0, %v946
        %948 = vmatmul.f32.gmra.mxu0 %v882
        %v949 = vpop.f32.mrf.mxu0
        %v950 = vadd.f32 0.0, %v949
        %951 = vmatmul.f32.gmra.mxu0 %v883
        %v952 = vpop.f32.mrf.mxu0
        %v953 = vadd.f32 0.0, %v952
        %954 = vmatmul.f32.gmra.mxu0 %v884
        %v955 = vpop.f32.mrf.mxu0
        %v956 = vadd.f32 0.0, %v955
        %957 = vmatmul.f32.gmra.mxu0 %v885
        %v958 = vpop.f32.mrf.mxu0
        %v959 = vadd.f32 0.0, %v958
        %960 = vmatmul.f32.gmra.mxu0 %v886
        %v961 = vpop.f32.mrf.mxu0
        %v962 = vadd.f32 0.0, %v961
        %963 = vmatmul.f32.gmra.mxu0 %v887
        %v964 = vpop.f32.mrf.mxu0
        %v965 = vadd.f32 0.0, %v964
        %966 = vmatmul.f32.gmra.mxu0 %v888
        %v967 = vpop.f32.mrf.mxu0
        %v968 = vadd.f32 0.0, %v967
        %969 = vmatmul.f32.gmra.mxu0 %v889
        %v970 = vpop.f32.mrf.mxu0
        %v971 = vadd.f32 0.0, %v970
        %972 = vmatmul.f32.gmra.mxu0 %v890
        %v973 = vpop.f32.mrf.mxu0
        %v974 = vadd.f32 0.0, %v973
        %975 = vmatmul.f32.gmra.mxu0 %v891
        %v976 = vpop.f32.mrf.mxu0
        %v977 = vadd.f32 0.0, %v976
        %978 = vmatmul.f32.gmra.mxu0 %v892
        %v979 = vpop.f32.mrf.mxu0
        %v980 = vadd.f32 0.0, %v979
        %981 = vmatmul.f32.gmra.mxu0 %v893
        %v982 = vpop.f32.mrf.mxu0
        %v983 = vadd.f32 0.0, %v982
        %984 = vmatmul.f32.gmra.mxu0 %v894
        %v985 = vpop.f32.mrf.mxu0
        %v986 = vadd.f32 0.0, %v985
        %987 = vmatmul.f32.gmra.mxu0 %v895
        %v988 = vpop.f32.mrf.mxu0
        %v989 = vadd.f32 0.0, %v988
        %990 = vmatmul.f32.gmra.mxu0 %v896
        %v991 = vpop.f32.mrf.mxu0
        %v992 = vadd.f32 0.0, %v991
        %993 = vmatmul.f32.gmra.mxu0 %v897
        %v994 = vpop.f32.mrf.mxu0
        %v995 = vadd.f32 0.0, %v994
        %996 = vmatmul.f32.gmra.mxu0 %v898
        %v997 = vpop.f32.mrf.mxu0
        %v998 = vadd.f32 0.0, %v997
        %999 = vmatmul.f32.gmra.mxu0 %v899
        %v1000 = vpop.f32.mrf.mxu0
        %v1001 = vadd.f32 0.0, %v1000
        %1002 = vmatmul.f32.gmra.mxu0 %v900
        %v1003 = vpop.f32.mrf.mxu0
        %v1004 = vadd.f32 0.0, %v1003
        %1005 = vmatmul.f32.gmra.mxu0 %v901
        %v1006 = vpop.f32.mrf.mxu0
        %v1007 = vadd.f32 0.0, %v1006
        %1008 = vmatmul.f32.gmra.mxu0 %v902
        %v1009 = vpop.f32.mrf.mxu0
        %v1010 = vadd.f32 0.0, %v1009
        %1011 = vmatmul.f32.gmra.mxu0 %v903
        %v1012 = vpop.f32.mrf.mxu0
        %v1013 = vadd.f32 0.0, %v1012
        %1014 = vmatmul.f32.gmra.mxu0 %v904
        %v1015 = vpop.f32.mrf.mxu0
        %v1016 = vadd.f32 0.0, %v1015
        %1017 = vmatmul.f32.gmra.mxu0 %v905
        %v1018 = vpop.f32.mrf.mxu0
        %v1019 = vadd.f32 0.0, %v1018
        %1020 = vmatmul.f32.gmra.mxu0 %v906
        %v1021 = vpop.f32.mrf.mxu0
        %v1022 = vadd.f32 0.0, %v1021
        %1023 = vmatmul.f32.gmra.mxu0 %v907
        %v1024 = vpop.f32.mrf.mxu0
        %v1025 = vadd.f32 0.0, %v1024
        %1026 = vmatmul.f32.gmra.mxu0 %v908
        %v1027 = vpop.f32.mrf.mxu0
        %v1028 = vadd.f32 0.0, %v1027
        %1029 = vmatmul.f32.gmra.mxu0 %v909
        %v1030 = vpop.f32.mrf.mxu0
        %v1031 = vadd.f32 0.0, %v1030
        %1032 = vmatmul.f32.gmra.mxu0 %v910
        %v1033 = vpop.f32.mrf.mxu0
        %v1034 = vadd.f32 0.0, %v1033
        %1035 = vmatmul.f32.gmra.mxu0 %v911
        %v1036 = vpop.f32.mrf.mxu0
        %v1037 = vadd.f32 0.0, %v1036
        %1038 = vmatmul.f32.gmra.mxu0 %v912
        %v1039 = vpop.f32.mrf.mxu0
        %v1040 = vadd.f32 0.0, %v1039
        %1041 = vdwg.mxu0
        %v1042 = vadd.f32 %v849, %v947
        %v1043 = vadd.f32 %v850, %v950
        %v1044 = vadd.f32 %v851, %v953
        %v1045 = vadd.f32 %v852, %v956
        %v1046 = vadd.f32 %v853, %v959
        %v1047 = vadd.f32 %v854, %v962
        %v1048 = vadd.f32 %v855, %v965
        %v1049 = vadd.f32 %v856, %v968
        %v1050 = vadd.f32 %v857, %v971
        %v1051 = vadd.f32 %v858, %v974
        %v1052 = vadd.f32 %v859, %v977
        %v1053 = vadd.f32 %v860, %v980
        %v1054 = vadd.f32 %v861, %v983
        %v1055 = vadd.f32 %v862, %v986
        %v1056 = vadd.f32 %v863, %v989
        %v1057 = vadd.f32 %v864, %v992
        %v1058 = vadd.f32 %v865, %v995
        %v1059 = vadd.f32 %v866, %v998
        %v1060 = vadd.f32 %v867, %v1001
        %v1061 = vadd.f32 %v868, %v1004
        %v1062 = vadd.f32 %v869, %v1007
        %v1063 = vadd.f32 %v870, %v1010
        %v1064 = vadd.f32 %v871, %v1013
        %v1065 = vadd.f32 %v872, %v1016
        %v1066 = vadd.f32 %v873, %v1019
        %v1067 = vadd.f32 %v874, %v1022
        %v1068 = vadd.f32 %v875, %v1025
        %v1069 = vadd.f32 %v876, %v1028
        %v1070 = vadd.f32 %v877, %v1031
        %v1071 = vadd.f32 %v878, %v1034
        %v1072 = vadd.f32 %v879, %v1037
        %v1073 = vadd.f32 %v880, %v1040
        %v1074 = vld [vmem:[%s256 + $0x1] sm:$0xff]
        %v1075 = vld [vmem:[%s256 + $0x9] sm:$0xff]
        %v1076 = vld [vmem:[%s256 + $0x19] sm:$0xff]
        %v1077 = vld [vmem:[%s256 + $0x21] sm:$0xff]
        %v1078 = vld [vmem:[%s256 + $0x31] sm:$0xff]
        %v1079 = vld [vmem:[%s256 + $0x39] sm:$0xff]
        %v1080 = vld [vmem:[%s256 + $0x49] sm:$0xff]
        %v1081 = vld [vmem:[%s256 + $0x51] sm:$0xff]
        %v1082 = vld [vmem:[%s256 + $0x61] sm:$0xff]
        %v1083 = vld [vmem:[%s256 + $0x69] sm:$0xff]
        %v1084 = vld [vmem:[%s256 + $0x79] sm:$0xff]
        %v1085 = vld [vmem:[%s256 + $0x81] sm:$0xff]
        %v1086 = vld [vmem:[%s256 + $0x91] sm:$0xff]
        %v1087 = vld [vmem:[%s256 + $0x99] sm:$0xff]
        %v1088 = vld [vmem:[%s256 + $0xa9] sm:$0xff]
        %v1089 = vld [vmem:[%s256 + $0xb1] sm:$0xff]
        %v1090 = vld [vmem:[%s256 + $0xc1] sm:$0xff]
        %v1091 = vld [vmem:[%s256 + $0xc9] sm:$0xff]
        %v1092 = vld [vmem:[%s256 + $0xd9] sm:$0xff]
        %v1093 = vld [vmem:[%s256 + $0xe1] sm:$0xff]
        %v1094 = vld [vmem:[%s256 + $0xf1] sm:$0xff]
        %v1095 = vld [vmem:[%s256 + $0xf9] sm:$0xff]
        %v1096 = vld [vmem:[%s256 + $0x109] sm:$0xff]
        %v1097 = vld [vmem:[%s256 + $0x111] sm:$0xff]
        %v1098 = vld [vmem:[%s256 + $0x121] sm:$0xff]
        %v1099 = vld [vmem:[%s256 + $0x129] sm:$0xff]
        %v1100 = vld [vmem:[%s256 + $0x139] sm:$0xff]
        %v1101 = vld [vmem:[%s256 + $0x141] sm:$0xff]
        %v1102 = vld [vmem:[%s256 + $0x151] sm:$0xff]
        %v1103 = vld [vmem:[%s256 + $0x159] sm:$0xff]
        %v1104 = vld [vmem:[%s256 + $0x169] sm:$0xff]
        %v1105 = vld [vmem:[%s256 + $0x171] sm:$0xff]
        %v1106 = vld [vmem:[#allocation6 + $0x200] sm:$0xff]
        %v1107 = vld [vmem:[#allocation6 + $0x208] sm:$0xff]
        %v1108 = vld [vmem:[#allocation6 + $0x210] sm:$0xff]
        %v1109 = vld [vmem:[#allocation6 + $0x218] sm:$0xff]
        %v1110 = vld [vmem:[#allocation6 + $0x220] sm:$0xff]
        %v1111 = vld [vmem:[#allocation6 + $0x228] sm:$0xff]
        %v1112 = vld [vmem:[#allocation6 + $0x230] sm:$0xff]
        %v1113 = vld [vmem:[#allocation6 + $0x238] sm:$0xff]
        %v1114 = vld [vmem:[#allocation6 + $0x240] sm:$0xff]
        %v1115 = vld [vmem:[#allocation6 + $0x248] sm:$0xff]
        %v1116 = vld [vmem:[#allocation6 + $0x250] sm:$0xff]
        %v1117 = vld [vmem:[#allocation6 + $0x258] sm:$0xff]
        %v1118 = vld [vmem:[#allocation6 + $0x260] sm:$0xff]
        %v1119 = vld [vmem:[#allocation6 + $0x268] sm:$0xff]
        %v1120 = vld [vmem:[#allocation6 + $0x270] sm:$0xff]
        %v1121 = vld [vmem:[#allocation6 + $0x278] sm:$0xff]
        %1122 = vmatpush.msra.mxu0 %v1121
        %1123 = vmatpush.msra.mxu0 %v1120
        %1124 = vmatpush.msra.mxu0 %v1119
        %1125 = vmatpush.msra.mxu0 %v1118
        %1126 = vmatpush.msra.mxu0 %v1117
        %1127 = vmatpush.msra.mxu0 %v1116
        %1128 = vmatpush.msra.mxu0 %v1115
        %1129 = vmatpush.msra.mxu0 %v1114
        %1130 = vmatpush.msra.mxu0 %v1113
        %1131 = vmatpush.msra.mxu0 %v1112
        %1132 = vmatpush.msra.mxu0 %v1111
        %1133 = vmatpush.msra.mxu0 %v1110
        %1134 = vmatpush.msra.mxu0 %v1109
        %1135 = vmatpush.msra.mxu0 %v1108
        %1136 = vmatpush.msra.mxu0 %v1107
        %1137 = vmatpush.msra.mxu0 %v1106
        %1138 = vmatmul.f32.gmra.mxu0 %v1074
        %v1139 = vpop.f32.mrf.mxu0
        %v1140 = vadd.f32 0.0, %v1139
        %1141 = vmatmul.f32.gmra.mxu0 %v1075
        %v1142 = vpop.f32.mrf.mxu0
        %v1143 = vadd.f32 0.0, %v1142
        %1144 = vmatmul.f32.gmra.mxu0 %v1076
        %v1145 = vpop.f32.mrf.mxu0
        %v1146 = vadd.f32 0.0, %v1145
        %1147 = vmatmul.f32.gmra.mxu0 %v1077
        %v1148 = vpop.f32.mrf.mxu0
        %v1149 = vadd.f32 0.0, %v1148
        %1150 = vmatmul.f32.gmra.mxu0 %v1078
        %v1151 = vpop.f32.mrf.mxu0
        %v1152 = vadd.f32 0.0, %v1151
        %1153 = vmatmul.f32.gmra.mxu0 %v1079
        %v1154 = vpop.f32.mrf.mxu0
        %v1155 = vadd.f32 0.0, %v1154
        %1156 = vmatmul.f32.gmra.mxu0 %v1080
        %v1157 = vpop.f32.mrf.mxu0
        %v1158 = vadd.f32 0.0, %v1157
        %1159 = vmatmul.f32.gmra.mxu0 %v1081
        %v1160 = vpop.f32.mrf.mxu0
        %v1161 = vadd.f32 0.0, %v1160
        %1162 = vmatmul.f32.gmra.mxu0 %v1082
        %v1163 = vpop.f32.mrf.mxu0
        %v1164 = vadd.f32 0.0, %v1163
        %1165 = vmatmul.f32.gmra.mxu0 %v1083
        %v1166 = vpop.f32.mrf.mxu0
        %v1167 = vadd.f32 0.0, %v1166
        %1168 = vmatmul.f32.gmra.mxu0 %v1084
        %v1169 = vpop.f32.mrf.mxu0
        %v1170 = vadd.f32 0.0, %v1169
        %1171 = vmatmul.f32.gmra.mxu0 %v1085
        %v1172 = vpop.f32.mrf.mxu0
        %v1173 = vadd.f32 0.0, %v1172
        %1174 = vmatmul.f32.gmra.mxu0 %v1086
        %v1175 = vpop.f32.mrf.mxu0
        %v1176 = vadd.f32 0.0, %v1175
        %1177 = vmatmul.f32.gmra.mxu0 %v1087
        %v1178 = vpop.f32.mrf.mxu0
        %v1179 = vadd.f32 0.0, %v1178
        %1180 = vmatmul.f32.gmra.mxu0 %v1088
        %v1181 = vpop.f32.mrf.mxu0
        %v1182 = vadd.f32 0.0, %v1181
        %1183 = vmatmul.f32.gmra.mxu0 %v1089
        %v1184 = vpop.f32.mrf.mxu0
        %v1185 = vadd.f32 0.0, %v1184
        %1186 = vmatmul.f32.gmra.mxu0 %v1090
        %v1187 = vpop.f32.mrf.mxu0
        %v1188 = vadd.f32 0.0, %v1187
        %1189 = vmatmul.f32.gmra.mxu0 %v1091
        %v1190 = vpop.f32.mrf.mxu0
        %v1191 = vadd.f32 0.0, %v1190
        %1192 = vmatmul.f32.gmra.mxu0 %v1092
        %v1193 = vpop.f32.mrf.mxu0
        %v1194 = vadd.f32 0.0, %v1193
        %1195 = vmatmul.f32.gmra.mxu0 %v1093
        %v1196 = vpop.f32.mrf.mxu0
        %v1197 = vadd.f32 0.0, %v1196
        %1198 = vmatmul.f32.gmra.mxu0 %v1094
        %v1199 = vpop.f32.mrf.mxu0
        %v1200 = vadd.f32 0.0, %v1199
        %1201 = vmatmul.f32.gmra.mxu0 %v1095
        %v1202 = vpop.f32.mrf.mxu0
        %v1203 = vadd.f32 0.0, %v1202
        %1204 = vmatmul.f32.gmra.mxu0 %v1096
        %v1205 = vpop.f32.mrf.mxu0
        %v1206 = vadd.f32 0.0, %v1205
        %1207 = vmatmul.f32.gmra.mxu0 %v1097
        %v1208 = vpop.f32.mrf.mxu0
        %v1209 = vadd.f32 0.0, %v1208
        %1210 = vmatmul.f32.gmra.mxu0 %v1098
        %v1211 = vpop.f32.mrf.mxu0
        %v1212 = vadd.f32 0.0, %v1211
        %1213 = vmatmul.f32.gmra.mxu0 %v1099
        %v1214 = vpop.f32.mrf.mxu0
        %v1215 = vadd.f32 0.0, %v1214
        %1216 = vmatmul.f32.gmra.mxu0 %v1100
        %v1217 = vpop.f32.mrf.mxu0
        %v1218 = vadd.f32 0.0, %v1217
        %1219 = vmatmul.f32.gmra.mxu0 %v1101
        %v1220 = vpop.f32.mrf.mxu0
        %v1221 = vadd.f32 0.0, %v1220
        %1222 = vmatmul.f32.gmra.mxu0 %v1102
        %v1223 = vpop.f32.mrf.mxu0
        %v1224 = vadd.f32 0.0, %v1223
        %1225 = vmatmul.f32.gmra.mxu0 %v1103
        %v1226 = vpop.f32.mrf.mxu0
        %v1227 = vadd.f32 0.0, %v1226
        %1228 = vmatmul.f32.gmra.mxu0 %v1104
        %v1229 = vpop.f32.mrf.mxu0
        %v1230 = vadd.f32 0.0, %v1229
        %1231 = vmatmul.f32.gmra.mxu0 %v1105
        %v1232 = vpop.f32.mrf.mxu0
        %v1233 = vadd.f32 0.0, %v1232
        %1234 = vdwg.mxu0
        %v1235 = vadd.f32 %v1042, %v1140
        %v1236 = vadd.f32 %v1043, %v1143
        %v1237 = vadd.f32 %v1044, %v1146
        %v1238 = vadd.f32 %v1045, %v1149
        %v1239 = vadd.f32 %v1046, %v1152
        %v1240 = vadd.f32 %v1047, %v1155
        %v1241 = vadd.f32 %v1048, %v1158
        %v1242 = vadd.f32 %v1049, %v1161
        %v1243 = vadd.f32 %v1050, %v1164
        %v1244 = vadd.f32 %v1051, %v1167
        %v1245 = vadd.f32 %v1052, %v1170
        %v1246 = vadd.f32 %v1053, %v1173
        %v1247 = vadd.f32 %v1054, %v1176
        %v1248 = vadd.f32 %v1055, %v1179
        %v1249 = vadd.f32 %v1056, %v1182
        %v1250 = vadd.f32 %v1057, %v1185
        %v1251 = vadd.f32 %v1058, %v1188
        %v1252 = vadd.f32 %v1059, %v1191
        %v1253 = vadd.f32 %v1060, %v1194
        %v1254 = vadd.f32 %v1061, %v1197
        %v1255 = vadd.f32 %v1062, %v1200
        %v1256 = vadd.f32 %v1063, %v1203
        %v1257 = vadd.f32 %v1064, %v1206
        %v1258 = vadd.f32 %v1065, %v1209
        %v1259 = vadd.f32 %v1066, %v1212
        %v1260 = vadd.f32 %v1067, %v1215
        %v1261 = vadd.f32 %v1068, %v1218
        %v1262 = vadd.f32 %v1069, %v1221
        %v1263 = vadd.f32 %v1070, %v1224
        %v1264 = vadd.f32 %v1071, %v1227
        %v1265 = vadd.f32 %v1072, %v1230
        %v1266 = vadd.f32 %v1073, %v1233
        %v1267 = vld [vmem:[%s256 + $0x2] sm:$0xff]
        %v1268 = vld [vmem:[%s256 + $0xa] sm:$0xff]
        %v1269 = vld [vmem:[%s256 + $0x1a] sm:$0xff]
        %v1270 = vld [vmem:[%s256 + $0x22] sm:$0xff]
        %v1271 = vld [vmem:[%s256 + $0x32] sm:$0xff]
        %v1272 = vld [vmem:[%s256 + $0x3a] sm:$0xff]
        %v1273 = vld [vmem:[%s256 + $0x4a] sm:$0xff]
        %v1274 = vld [vmem:[%s256 + $0x52] sm:$0xff]
        %v1275 = vld [vmem:[%s256 + $0x62] sm:$0xff]
        %v1276 = vld [vmem:[%s256 + $0x6a] sm:$0xff]
        %v1277 = vld [vmem:[%s256 + $0x7a] sm:$0xff]
        %v1278 = vld [vmem:[%s256 + $0x82] sm:$0xff]
        %v1279 = vld [vmem:[%s256 + $0x92] sm:$0xff]
        %v1280 = vld [vmem:[%s256 + $0x9a] sm:$0xff]
        %v1281 = vld [vmem:[%s256 + $0xaa] sm:$0xff]
        %v1282 = vld [vmem:[%s256 + $0xb2] sm:$0xff]
        %v1283 = vld [vmem:[%s256 + $0xc2] sm:$0xff]
        %v1284 = vld [vmem:[%s256 + $0xca] sm:$0xff]
        %v1285 = vld [vmem:[%s256 + $0xda] sm:$0xff]
        %v1286 = vld [vmem:[%s256 + $0xe2] sm:$0xff]
        %v1287 = vld [vmem:[%s256 + $0xf2] sm:$0xff]
        %v1288 = vld [vmem:[%s256 + $0xfa] sm:$0xff]
        %v1289 = vld [vmem:[%s256 + $0x10a] sm:$0xff]
        %v1290 = vld [vmem:[%s256 + $0x112] sm:$0xff]
        %v1291 = vld [vmem:[%s256 + $0x122] sm:$0xff]
        %v1292 = vld [vmem:[%s256 + $0x12a] sm:$0xff]
        %v1293 = vld [vmem:[%s256 + $0x13a] sm:$0xff]
        %v1294 = vld [vmem:[%s256 + $0x142] sm:$0xff]
        %v1295 = vld [vmem:[%s256 + $0x152] sm:$0xff]
        %v1296 = vld [vmem:[%s256 + $0x15a] sm:$0xff]
        %v1297 = vld [vmem:[%s256 + $0x16a] sm:$0xff]
        %v1298 = vld [vmem:[%s256 + $0x172] sm:$0xff]
        %v1299 = vld [vmem:[#allocation6 + $0x280] sm:$0xff]
        %v1300 = vld [vmem:[#allocation6 + $0x288] sm:$0xff]
        %v1301 = vld [vmem:[#allocation6 + $0x290] sm:$0xff]
        %v1302 = vld [vmem:[#allocation6 + $0x298] sm:$0xff]
        %v1303 = vld [vmem:[#allocation6 + $0x2a0] sm:$0xff]
        %v1304 = vld [vmem:[#allocation6 + $0x2a8] sm:$0xff]
        %v1305 = vld [vmem:[#allocation6 + $0x2b0] sm:$0xff]
        %v1306 = vld [vmem:[#allocation6 + $0x2b8] sm:$0xff]
        %v1307 = vld [vmem:[#allocation6 + $0x2c0] sm:$0xff]
        %v1308 = vld [vmem:[#allocation6 + $0x2c8] sm:$0xff]
        %v1309 = vld [vmem:[#allocation6 + $0x2d0] sm:$0xff]
        %v1310 = vld [vmem:[#allocation6 + $0x2d8] sm:$0xff]
        %v1311 = vld [vmem:[#allocation6 + $0x2e0] sm:$0xff]
        %v1312 = vld [vmem:[#allocation6 + $0x2e8] sm:$0xff]
        %v1313 = vld [vmem:[#allocation6 + $0x2f0] sm:$0xff]
        %v1314 = vld [vmem:[#allocation6 + $0x2f8] sm:$0xff]
        %1315 = vmatpush.msra.mxu0 %v1314
        %1316 = vmatpush.msra.mxu0 %v1313
        %1317 = vmatpush.msra.mxu0 %v1312
        %1318 = vmatpush.msra.mxu0 %v1311
        %1319 = vmatpush.msra.mxu0 %v1310
        %1320 = vmatpush.msra.mxu0 %v1309
        %1321 = vmatpush.msra.mxu0 %v1308
        %1322 = vmatpush.msra.mxu0 %v1307
        %1323 = vmatpush.msra.mxu0 %v1306
        %1324 = vmatpush.msra.mxu0 %v1305
        %1325 = vmatpush.msra.mxu0 %v1304
        %1326 = vmatpush.msra.mxu0 %v1303
        %1327 = vmatpush.msra.mxu0 %v1302
        %1328 = vmatpush.msra.mxu0 %v1301
        %1329 = vmatpush.msra.mxu0 %v1300
        %1330 = vmatpush.msra.mxu0 %v1299
        %1331 = vmatmul.f32.gmra.mxu0 %v1267
        %v1332 = vpop.f32.mrf.mxu0
        %v1333 = vadd.f32 0.0, %v1332
        %1334 = vmatmul.f32.gmra.mxu0 %v1268
        %v1335 = vpop.f32.mrf.mxu0
        %v1336 = vadd.f32 0.0, %v1335
        %1337 = vmatmul.f32.gmra.mxu0 %v1269
        %v1338 = vpop.f32.mrf.mxu0
        %v1339 = vadd.f32 0.0, %v1338
        %1340 = vmatmul.f32.gmra.mxu0 %v1270
        %v1341 = vpop.f32.mrf.mxu0
        %v1342 = vadd.f32 0.0, %v1341
        %1343 = vmatmul.f32.gmra.mxu0 %v1271
        %v1344 = vpop.f32.mrf.mxu0
        %v1345 = vadd.f32 0.0, %v1344
        %1346 = vmatmul.f32.gmra.mxu0 %v1272
        %v1347 = vpop.f32.mrf.mxu0
        %v1348 = vadd.f32 0.0, %v1347
        %1349 = vmatmul.f32.gmra.mxu0 %v1273
        %v1350 = vpop.f32.mrf.mxu0
        %v1351 = vadd.f32 0.0, %v1350
        %1352 = vmatmul.f32.gmra.mxu0 %v1274
        %v1353 = vpop.f32.mrf.mxu0
        %v1354 = vadd.f32 0.0, %v1353
        %1355 = vmatmul.f32.gmra.mxu0 %v1275
        %v1356 = vpop.f32.mrf.mxu0
        %v1357 = vadd.f32 0.0, %v1356
        %1358 = vmatmul.f32.gmra.mxu0 %v1276
        %v1359 = vpop.f32.mrf.mxu0
        %v1360 = vadd.f32 0.0, %v1359
        %1361 = vmatmul.f32.gmra.mxu0 %v1277
        %v1362 = vpop.f32.mrf.mxu0
        %v1363 = vadd.f32 0.0, %v1362
        %1364 = vmatmul.f32.gmra.mxu0 %v1278
        %v1365 = vpop.f32.mrf.mxu0
        %v1366 = vadd.f32 0.0, %v1365
        %1367 = vmatmul.f32.gmra.mxu0 %v1279
        %v1368 = vpop.f32.mrf.mxu0
        %v1369 = vadd.f32 0.0, %v1368
        %1370 = vmatmul.f32.gmra.mxu0 %v1280
        %v1371 = vpop.f32.mrf.mxu0
        %v1372 = vadd.f32 0.0, %v1371
        %1373 = vmatmul.f32.gmra.mxu0 %v1281
        %v1374 = vpop.f32.mrf.mxu0
        %v1375 = vadd.f32 0.0, %v1374
        %1376 = vmatmul.f32.gmra.mxu0 %v1282
        %v1377 = vpop.f32.mrf.mxu0
        %v1378 = vadd.f32 0.0, %v1377
        %1379 = vmatmul.f32.gmra.mxu0 %v1283
        %v1380 = vpop.f32.mrf.mxu0
        %v1381 = vadd.f32 0.0, %v1380
        %1382 = vmatmul.f32.gmra.mxu0 %v1284
        %v1383 = vpop.f32.mrf.mxu0
        %v1384 = vadd.f32 0.0, %v1383
        %1385 = vmatmul.f32.gmra.mxu0 %v1285
        %v1386 = vpop.f32.mrf.mxu0
        %v1387 = vadd.f32 0.0, %v1386
        %1388 = vmatmul.f32.gmra.mxu0 %v1286
        %v1389 = vpop.f32.mrf.mxu0
        %v1390 = vadd.f32 0.0, %v1389
        %1391 = vmatmul.f32.gmra.mxu0 %v1287
        %v1392 = vpop.f32.mrf.mxu0
        %v1393 = vadd.f32 0.0, %v1392
        %1394 = vmatmul.f32.gmra.mxu0 %v1288
        %v1395 = vpop.f32.mrf.mxu0
        %v1396 = vadd.f32 0.0, %v1395
        %1397 = vmatmul.f32.gmra.mxu0 %v1289
        %v1398 = vpop.f32.mrf.mxu0
        %v1399 = vadd.f32 0.0, %v1398
        %1400 = vmatmul.f32.gmra.mxu0 %v1290
        %v1401 = vpop.f32.mrf.mxu0
        %v1402 = vadd.f32 0.0, %v1401
        %1403 = vmatmul.f32.gmra.mxu0 %v1291
        %v1404 = vpop.f32.mrf.mxu0
        %v1405 = vadd.f32 0.0, %v1404
        %1406 = vmatmul.f32.gmra.mxu0 %v1292
        %v1407 = vpop.f32.mrf.mxu0
        %v1408 = vadd.f32 0.0, %v1407
        %1409 = vmatmul.f32.gmra.mxu0 %v1293
        %v1410 = vpop.f32.mrf.mxu0
        %v1411 = vadd.f32 0.0, %v1410
        %1412 = vmatmul.f32.gmra.mxu0 %v1294
        %v1413 = vpop.f32.mrf.mxu0
        %v1414 = vadd.f32 0.0, %v1413
        %1415 = vmatmul.f32.gmra.mxu0 %v1295
        %v1416 = vpop.f32.mrf.mxu0
        %v1417 = vadd.f32 0.0, %v1416
        %1418 = vmatmul.f32.gmra.mxu0 %v1296
        %v1419 = vpop.f32.mrf.mxu0
        %v1420 = vadd.f32 0.0, %v1419
        %1421 = vmatmul.f32.gmra.mxu0 %v1297
        %v1422 = vpop.f32.mrf.mxu0
        %v1423 = vadd.f32 0.0, %v1422
        %1424 = vmatmul.f32.gmra.mxu0 %v1298
        %v1425 = vpop.f32.mrf.mxu0
        %v1426 = vadd.f32 0.0, %v1425
        %1427 = vdwg.mxu0
        %v1428 = vadd.f32 %v1235, %v1333
        %v1429 = vadd.f32 %v1236, %v1336
        %v1430 = vadd.f32 %v1237, %v1339
        %v1431 = vadd.f32 %v1238, %v1342
        %v1432 = vadd.f32 %v1239, %v1345
        %v1433 = vadd.f32 %v1240, %v1348
        %v1434 = vadd.f32 %v1241, %v1351
        %v1435 = vadd.f32 %v1242, %v1354
        %v1436 = vadd.f32 %v1243, %v1357
        %v1437 = vadd.f32 %v1244, %v1360
        %v1438 = vadd.f32 %v1245, %v1363
        %v1439 = vadd.f32 %v1246, %v1366
        %v1440 = vadd.f32 %v1247, %v1369
        %v1441 = vadd.f32 %v1248, %v1372
        %v1442 = vadd.f32 %v1249, %v1375
        %v1443 = vadd.f32 %v1250, %v1378
        %v1444 = vadd.f32 %v1251, %v1381
        %v1445 = vadd.f32 %v1252, %v1384
        %v1446 = vadd.f32 %v1253, %v1387
        %v1447 = vadd.f32 %v1254, %v1390
        %v1448 = vadd.f32 %v1255, %v1393
        %v1449 = vadd.f32 %v1256, %v1396
        %v1450 = vadd.f32 %v1257, %v1399
        %v1451 = vadd.f32 %v1258, %v1402
        %v1452 = vadd.f32 %v1259, %v1405
        %v1453 = vadd.f32 %v1260, %v1408
        %v1454 = vadd.f32 %v1261, %v1411
        %v1455 = vadd.f32 %v1262, %v1414
        %v1456 = vadd.f32 %v1263, %v1417
        %v1457 = vadd.f32 %v1264, %v1420
        %v1458 = vadd.f32 %v1265, %v1423
        %v1459 = vadd.f32 %v1266, %v1426
        %s1460 = scalar_lea.vmem [#allocation2], 48
        %v1461 = vld [vmem:[%s1460] sm:$0xff]
        %v1462 = vld [vmem:[%s1460 + $0x8] sm:$0xff]
        %v1463 = vld [vmem:[%s1460 + $0x18] sm:$0xff]
        %v1464 = vld [vmem:[%s1460 + $0x20] sm:$0xff]
        %v1465 = vld [vmem:[%s1460 + $0x30] sm:$0xff]
        %v1466 = vld [vmem:[%s1460 + $0x38] sm:$0xff]
        %v1467 = vld [vmem:[%s1460 + $0x48] sm:$0xff]
        %v1468 = vld [vmem:[%s1460 + $0x50] sm:$0xff]
        %v1469 = vld [vmem:[%s1460 + $0x60] sm:$0xff]
        %v1470 = vld [vmem:[%s1460 + $0x68] sm:$0xff]
        %v1471 = vld [vmem:[%s1460 + $0x78] sm:$0xff]
        %v1472 = vld [vmem:[%s1460 + $0x80] sm:$0xff]
        %v1473 = vld [vmem:[%s1460 + $0x90] sm:$0xff]
        %v1474 = vld [vmem:[%s1460 + $0x98] sm:$0xff]
        %v1475 = vld [vmem:[%s1460 + $0xa8] sm:$0xff]
        %v1476 = vld [vmem:[%s1460 + $0xb0] sm:$0xff]
        %v1477 = vld [vmem:[%s1460 + $0xc0] sm:$0xff]
        %v1478 = vld [vmem:[%s1460 + $0xc8] sm:$0xff]
        %v1479 = vld [vmem:[%s1460 + $0xd8] sm:$0xff]
        %v1480 = vld [vmem:[%s1460 + $0xe0] sm:$0xff]
        %v1481 = vld [vmem:[%s1460 + $0xf0] sm:$0xff]
        %v1482 = vld [vmem:[%s1460 + $0xf8] sm:$0xff]
        %v1483 = vld [vmem:[%s1460 + $0x108] sm:$0xff]
        %v1484 = vld [vmem:[%s1460 + $0x110] sm:$0xff]
        %v1485 = vld [vmem:[%s1460 + $0x120] sm:$0xff]
        %v1486 = vld [vmem:[%s1460 + $0x128] sm:$0xff]
        %v1487 = vld [vmem:[%s1460 + $0x138] sm:$0xff]
        %v1488 = vld [vmem:[%s1460 + $0x140] sm:$0xff]
        %v1489 = vld [vmem:[%s1460 + $0x150] sm:$0xff]
        %v1490 = vld [vmem:[%s1460 + $0x158] sm:$0xff]
        %v1491 = vld [vmem:[%s1460 + $0x168] sm:$0xff]
        %v1492 = vld [vmem:[%s1460 + $0x170] sm:$0xff]
        %v1493 = vld [vmem:[#allocation6 + $0x300] sm:$0xff]
        %v1494 = vld [vmem:[#allocation6 + $0x308] sm:$0xff]
        %v1495 = vld [vmem:[#allocation6 + $0x310] sm:$0xff]
        %v1496 = vld [vmem:[#allocation6 + $0x318] sm:$0xff]
        %v1497 = vld [vmem:[#allocation6 + $0x320] sm:$0xff]
        %v1498 = vld [vmem:[#allocation6 + $0x328] sm:$0xff]
        %v1499 = vld [vmem:[#allocation6 + $0x330] sm:$0xff]
        %v1500 = vld [vmem:[#allocation6 + $0x338] sm:$0xff]
        %v1501 = vld [vmem:[#allocation6 + $0x340] sm:$0xff]
        %v1502 = vld [vmem:[#allocation6 + $0x348] sm:$0xff]
        %v1503 = vld [vmem:[#allocation6 + $0x350] sm:$0xff]
        %v1504 = vld [vmem:[#allocation6 + $0x358] sm:$0xff]
        %v1505 = vld [vmem:[#allocation6 + $0x360] sm:$0xff]
        %v1506 = vld [vmem:[#allocation6 + $0x368] sm:$0xff]
        %v1507 = vld [vmem:[#allocation6 + $0x370] sm:$0xff]
        %v1508 = vld [vmem:[#allocation6 + $0x378] sm:$0xff]
        %1509 = vmatpush.msra.mxu0 %v1508
        %1510 = vmatpush.msra.mxu0 %v1507
        %1511 = vmatpush.msra.mxu0 %v1506
        %1512 = vmatpush.msra.mxu0 %v1505
        %1513 = vmatpush.msra.mxu0 %v1504
        %1514 = vmatpush.msra.mxu0 %v1503
        %1515 = vmatpush.msra.mxu0 %v1502
        %1516 = vmatpush.msra.mxu0 %v1501
        %1517 = vmatpush.msra.mxu0 %v1500
        %1518 = vmatpush.msra.mxu0 %v1499
        %1519 = vmatpush.msra.mxu0 %v1498
        %1520 = vmatpush.msra.mxu0 %v1497
        %1521 = vmatpush.msra.mxu0 %v1496
        %1522 = vmatpush.msra.mxu0 %v1495
        %1523 = vmatpush.msra.mxu0 %v1494
        %1524 = vmatpush.msra.mxu0 %v1493
        %1525 = vmatmul.f32.gmra.mxu0 %v1461
        %v1526 = vpop.f32.mrf.mxu0
        %v1527 = vadd.f32 0.0, %v1526
        %1528 = vmatmul.f32.gmra.mxu0 %v1462
        %v1529 = vpop.f32.mrf.mxu0
        %v1530 = vadd.f32 0.0, %v1529
        %1531 = vmatmul.f32.gmra.mxu0 %v1463
        %v1532 = vpop.f32.mrf.mxu0
        %v1533 = vadd.f32 0.0, %v1532
        %1534 = vmatmul.f32.gmra.mxu0 %v1464
        %v1535 = vpop.f32.mrf.mxu0
        %v1536 = vadd.f32 0.0, %v1535
        %1537 = vmatmul.f32.gmra.mxu0 %v1465
        %v1538 = vpop.f32.mrf.mxu0
        %v1539 = vadd.f32 0.0, %v1538
        %1540 = vmatmul.f32.gmra.mxu0 %v1466
        %v1541 = vpop.f32.mrf.mxu0
        %v1542 = vadd.f32 0.0, %v1541
        %1543 = vmatmul.f32.gmra.mxu0 %v1467
        %v1544 = vpop.f32.mrf.mxu0
        %v1545 = vadd.f32 0.0, %v1544
        %1546 = vmatmul.f32.gmra.mxu0 %v1468
        %v1547 = vpop.f32.mrf.mxu0
        %v1548 = vadd.f32 0.0, %v1547
        %1549 = vmatmul.f32.gmra.mxu0 %v1469
        %v1550 = vpop.f32.mrf.mxu0
        %v1551 = vadd.f32 0.0, %v1550
        %1552 = vmatmul.f32.gmra.mxu0 %v1470
        %v1553 = vpop.f32.mrf.mxu0
        %v1554 = vadd.f32 0.0, %v1553
        %1555 = vmatmul.f32.gmra.mxu0 %v1471
        %v1556 = vpop.f32.mrf.mxu0
        %v1557 = vadd.f32 0.0, %v1556
        %1558 = vmatmul.f32.gmra.mxu0 %v1472
        %v1559 = vpop.f32.mrf.mxu0
        %v1560 = vadd.f32 0.0, %v1559
        %1561 = vmatmul.f32.gmra.mxu0 %v1473
        %v1562 = vpop.f32.mrf.mxu0
        %v1563 = vadd.f32 0.0, %v1562
        %1564 = vmatmul.f32.gmra.mxu0 %v1474
        %v1565 = vpop.f32.mrf.mxu0
        %v1566 = vadd.f32 0.0, %v1565
        %1567 = vmatmul.f32.gmra.mxu0 %v1475
        %v1568 = vpop.f32.mrf.mxu0
        %v1569 = vadd.f32 0.0, %v1568
        %1570 = vmatmul.f32.gmra.mxu0 %v1476
        %v1571 = vpop.f32.mrf.mxu0
        %v1572 = vadd.f32 0.0, %v1571
        %1573 = vmatmul.f32.gmra.mxu0 %v1477
        %v1574 = vpop.f32.mrf.mxu0
        %v1575 = vadd.f32 0.0, %v1574
        %1576 = vmatmul.f32.gmra.mxu0 %v1478
        %v1577 = vpop.f32.mrf.mxu0
        %v1578 = vadd.f32 0.0, %v1577
        %1579 = vmatmul.f32.gmra.mxu0 %v1479
        %v1580 = vpop.f32.mrf.mxu0
        %v1581 = vadd.f32 0.0, %v1580
        %1582 = vmatmul.f32.gmra.mxu0 %v1480
        %v1583 = vpop.f32.mrf.mxu0
        %v1584 = vadd.f32 0.0, %v1583
        %1585 = vmatmul.f32.gmra.mxu0 %v1481
        %v1586 = vpop.f32.mrf.mxu0
        %v1587 = vadd.f32 0.0, %v1586
        %1588 = vmatmul.f32.gmra.mxu0 %v1482
        %v1589 = vpop.f32.mrf.mxu0
        %v1590 = vadd.f32 0.0, %v1589
        %1591 = vmatmul.f32.gmra.mxu0 %v1483
        %v1592 = vpop.f32.mrf.mxu0
        %v1593 = vadd.f32 0.0, %v1592
        %1594 = vmatmul.f32.gmra.mxu0 %v1484
        %v1595 = vpop.f32.mrf.mxu0
        %v1596 = vadd.f32 0.0, %v1595
        %1597 = vmatmul.f32.gmra.mxu0 %v1485
        %v1598 = vpop.f32.mrf.mxu0
        %v1599 = vadd.f32 0.0, %v1598
        %1600 = vmatmul.f32.gmra.mxu0 %v1486
        %v1601 = vpop.f32.mrf.mxu0
        %v1602 = vadd.f32 0.0, %v1601
        %1603 = vmatmul.f32.gmra.mxu0 %v1487
        %v1604 = vpop.f32.mrf.mxu0
        %v1605 = vadd.f32 0.0, %v1604
        %1606 = vmatmul.f32.gmra.mxu0 %v1488
        %v1607 = vpop.f32.mrf.mxu0
        %v1608 = vadd.f32 0.0, %v1607
        %1609 = vmatmul.f32.gmra.mxu0 %v1489
        %v1610 = vpop.f32.mrf.mxu0
        %v1611 = vadd.f32 0.0, %v1610
        %1612 = vmatmul.f32.gmra.mxu0 %v1490
        %v1613 = vpop.f32.mrf.mxu0
        %v1614 = vadd.f32 0.0, %v1613
        %1615 = vmatmul.f32.gmra.mxu0 %v1491
        %v1616 = vpop.f32.mrf.mxu0
        %v1617 = vadd.f32 0.0, %v1616
        %1618 = vmatmul.f32.gmra.mxu0 %v1492
        %v1619 = vpop.f32.mrf.mxu0
        %v1620 = vadd.f32 0.0, %v1619
        %1621 = vdwg.mxu0
        %v1622 = vadd.f32 %v1428, %v1527
        %v1623 = vadd.f32 %v1429, %v1530
        %v1624 = vadd.f32 %v1430, %v1533
        %v1625 = vadd.f32 %v1431, %v1536
        %v1626 = vadd.f32 %v1432, %v1539
        %v1627 = vadd.f32 %v1433, %v1542
        %v1628 = vadd.f32 %v1434, %v1545
        %v1629 = vadd.f32 %v1435, %v1548
        %v1630 = vadd.f32 %v1436, %v1551
        %v1631 = vadd.f32 %v1437, %v1554
        %v1632 = vadd.f32 %v1438, %v1557
        %v1633 = vadd.f32 %v1439, %v1560
        %v1634 = vadd.f32 %v1440, %v1563
        %v1635 = vadd.f32 %v1441, %v1566
        %v1636 = vadd.f32 %v1442, %v1569
        %v1637 = vadd.f32 %v1443, %v1572
        %v1638 = vadd.f32 %v1444, %v1575
        %v1639 = vadd.f32 %v1445, %v1578
        %v1640 = vadd.f32 %v1446, %v1581
        %v1641 = vadd.f32 %v1447, %v1584
        %v1642 = vadd.f32 %v1448, %v1587
        %v1643 = vadd.f32 %v1449, %v1590
        %v1644 = vadd.f32 %v1450, %v1593
        %v1645 = vadd.f32 %v1451, %v1596
        %v1646 = vadd.f32 %v1452, %v1599
        %v1647 = vadd.f32 %v1453, %v1602
        %v1648 = vadd.f32 %v1454, %v1605
        %v1649 = vadd.f32 %v1455, %v1608
        %v1650 = vadd.f32 %v1456, %v1611
        %v1651 = vadd.f32 %v1457, %v1614
        %v1652 = vadd.f32 %v1458, %v1617
        %v1653 = vadd.f32 %v1459, %v1620
        %v1654 = vld [vmem:[%s1460 + $0x1] sm:$0xff]
        %v1655 = vld [vmem:[%s1460 + $0x9] sm:$0xff]
        %v1656 = vld [vmem:[%s1460 + $0x19] sm:$0xff]
        %v1657 = vld [vmem:[%s1460 + $0x21] sm:$0xff]
        %v1658 = vld [vmem:[%s1460 + $0x31] sm:$0xff]
        %v1659 = vld [vmem:[%s1460 + $0x39] sm:$0xff]
        %v1660 = vld [vmem:[%s1460 + $0x49] sm:$0xff]
        %v1661 = vld [vmem:[%s1460 + $0x51] sm:$0xff]
        %v1662 = vld [vmem:[%s1460 + $0x61] sm:$0xff]
        %v1663 = vld [vmem:[%s1460 + $0x69] sm:$0xff]
        %v1664 = vld [vmem:[%s1460 + $0x79] sm:$0xff]
        %v1665 = vld [vmem:[%s1460 + $0x81] sm:$0xff]
        %v1666 = vld [vmem:[%s1460 + $0x91] sm:$0xff]
        %v1667 = vld [vmem:[%s1460 + $0x99] sm:$0xff]
        %v1668 = vld [vmem:[%s1460 + $0xa9] sm:$0xff]
        %v1669 = vld [vmem:[%s1460 + $0xb1] sm:$0xff]
        %v1670 = vld [vmem:[%s1460 + $0xc1] sm:$0xff]
        %v1671 = vld [vmem:[%s1460 + $0xc9] sm:$0xff]
        %v1672 = vld [vmem:[%s1460 + $0xd9] sm:$0xff]
        %v1673 = vld [vmem:[%s1460 + $0xe1] sm:$0xff]
        %v1674 = vld [vmem:[%s1460 + $0xf1] sm:$0xff]
        %v1675 = vld [vmem:[%s1460 + $0xf9] sm:$0xff]
        %v1676 = vld [vmem:[%s1460 + $0x109] sm:$0xff]
        %v1677 = vld [vmem:[%s1460 + $0x111] sm:$0xff]
        %v1678 = vld [vmem:[%s1460 + $0x121] sm:$0xff]
        %v1679 = vld [vmem:[%s1460 + $0x129] sm:$0xff]
        %v1680 = vld [vmem:[%s1460 + $0x139] sm:$0xff]
        %v1681 = vld [vmem:[%s1460 + $0x141] sm:$0xff]
        %v1682 = vld [vmem:[%s1460 + $0x151] sm:$0xff]
        %v1683 = vld [vmem:[%s1460 + $0x159] sm:$0xff]
        %v1684 = vld [vmem:[%s1460 + $0x169] sm:$0xff]
        %v1685 = vld [vmem:[%s1460 + $0x171] sm:$0xff]
        %v1686 = vld [vmem:[#allocation6 + $0x380] sm:$0xff]
        %v1687 = vld [vmem:[#allocation6 + $0x388] sm:$0xff]
        %v1688 = vld [vmem:[#allocation6 + $0x390] sm:$0xff]
        %v1689 = vld [vmem:[#allocation6 + $0x398] sm:$0xff]
        %v1690 = vld [vmem:[#allocation6 + $0x3a0] sm:$0xff]
        %v1691 = vld [vmem:[#allocation6 + $0x3a8] sm:$0xff]
        %v1692 = vld [vmem:[#allocation6 + $0x3b0] sm:$0xff]
        %v1693 = vld [vmem:[#allocation6 + $0x3b8] sm:$0xff]
        %v1694 = vld [vmem:[#allocation6 + $0x3c0] sm:$0xff]
        %v1695 = vld [vmem:[#allocation6 + $0x3c8] sm:$0xff]
        %v1696 = vld [vmem:[#allocation6 + $0x3d0] sm:$0xff]
        %v1697 = vld [vmem:[#allocation6 + $0x3d8] sm:$0xff]
        %v1698 = vld [vmem:[#allocation6 + $0x3e0] sm:$0xff]
        %v1699 = vld [vmem:[#allocation6 + $0x3e8] sm:$0xff]
        %v1700 = vld [vmem:[#allocation6 + $0x3f0] sm:$0xff]
        %v1701 = vld [vmem:[#allocation6 + $0x3f8] sm:$0xff]
        %1702 = vmatpush.msra.mxu0 %v1701
        %1703 = vmatpush.msra.mxu0 %v1700
        %1704 = vmatpush.msra.mxu0 %v1699
        %1705 = vmatpush.msra.mxu0 %v1698
        %1706 = vmatpush.msra.mxu0 %v1697
        %1707 = vmatpush.msra.mxu0 %v1696
        %1708 = vmatpush.msra.mxu0 %v1695
        %1709 = vmatpush.msra.mxu0 %v1694
        %1710 = vmatpush.msra.mxu0 %v1693
        %1711 = vmatpush.msra.mxu0 %v1692
        %1712 = vmatpush.msra.mxu0 %v1691
        %1713 = vmatpush.msra.mxu0 %v1690
        %1714 = vmatpush.msra.mxu0 %v1689
        %1715 = vmatpush.msra.mxu0 %v1688
        %1716 = vmatpush.msra.mxu0 %v1687
        %1717 = vmatpush.msra.mxu0 %v1686
        %1718 = vmatmul.f32.gmra.mxu0 %v1654
        %v1719 = vpop.f32.mrf.mxu0
        %v1720 = vadd.f32 0.0, %v1719
        %1721 = vmatmul.f32.gmra.mxu0 %v1655
        %v1722 = vpop.f32.mrf.mxu0
        %v1723 = vadd.f32 0.0, %v1722
        %1724 = vmatmul.f32.gmra.mxu0 %v1656
        %v1725 = vpop.f32.mrf.mxu0
        %v1726 = vadd.f32 0.0, %v1725
        %1727 = vmatmul.f32.gmra.mxu0 %v1657
        %v1728 = vpop.f32.mrf.mxu0
        %v1729 = vadd.f32 0.0, %v1728
        %1730 = vmatmul.f32.gmra.mxu0 %v1658
        %v1731 = vpop.f32.mrf.mxu0
        %v1732 = vadd.f32 0.0, %v1731
        %1733 = vmatmul.f32.gmra.mxu0 %v1659
        %v1734 = vpop.f32.mrf.mxu0
        %v1735 = vadd.f32 0.0, %v1734
        %1736 = vmatmul.f32.gmra.mxu0 %v1660
        %v1737 = vpop.f32.mrf.mxu0
        %v1738 = vadd.f32 0.0, %v1737
        %1739 = vmatmul.f32.gmra.mxu0 %v1661
        %v1740 = vpop.f32.mrf.mxu0
        %v1741 = vadd.f32 0.0, %v1740
        %1742 = vmatmul.f32.gmra.mxu0 %v1662
        %v1743 = vpop.f32.mrf.mxu0
        %v1744 = vadd.f32 0.0, %v1743
        %1745 = vmatmul.f32.gmra.mxu0 %v1663
        %v1746 = vpop.f32.mrf.mxu0
        %v1747 = vadd.f32 0.0, %v1746
        %1748 = vmatmul.f32.gmra.mxu0 %v1664
        %v1749 = vpop.f32.mrf.mxu0
        %v1750 = vadd.f32 0.0, %v1749
        %1751 = vmatmul.f32.gmra.mxu0 %v1665
        %v1752 = vpop.f32.mrf.mxu0
        %v1753 = vadd.f32 0.0, %v1752
        %1754 = vmatmul.f32.gmra.mxu0 %v1666
        %v1755 = vpop.f32.mrf.mxu0
        %v1756 = vadd.f32 0.0, %v1755
        %1757 = vmatmul.f32.gmra.mxu0 %v1667
        %v1758 = vpop.f32.mrf.mxu0
        %v1759 = vadd.f32 0.0, %v1758
        %1760 = vmatmul.f32.gmra.mxu0 %v1668
        %v1761 = vpop.f32.mrf.mxu0
        %v1762 = vadd.f32 0.0, %v1761
        %1763 = vmatmul.f32.gmra.mxu0 %v1669
        %v1764 = vpop.f32.mrf.mxu0
        %v1765 = vadd.f32 0.0, %v1764
        %1766 = vmatmul.f32.gmra.mxu0 %v1670
        %v1767 = vpop.f32.mrf.mxu0
        %v1768 = vadd.f32 0.0, %v1767
        %1769 = vmatmul.f32.gmra.mxu0 %v1671
        %v1770 = vpop.f32.mrf.mxu0
        %v1771 = vadd.f32 0.0, %v1770
        %1772 = vmatmul.f32.gmra.mxu0 %v1672
        %v1773 = vpop.f32.mrf.mxu0
        %v1774 = vadd.f32 0.0, %v1773
        %1775 = vmatmul.f32.gmra.mxu0 %v1673
        %v1776 = vpop.f32.mrf.mxu0
        %v1777 = vadd.f32 0.0, %v1776
        %1778 = vmatmul.f32.gmra.mxu0 %v1674
        %v1779 = vpop.f32.mrf.mxu0
        %v1780 = vadd.f32 0.0, %v1779
        %1781 = vmatmul.f32.gmra.mxu0 %v1675
        %v1782 = vpop.f32.mrf.mxu0
        %v1783 = vadd.f32 0.0, %v1782
        %1784 = vmatmul.f32.gmra.mxu0 %v1676
        %v1785 = vpop.f32.mrf.mxu0
        %v1786 = vadd.f32 0.0, %v1785
        %1787 = vmatmul.f32.gmra.mxu0 %v1677
        %v1788 = vpop.f32.mrf.mxu0
        %v1789 = vadd.f32 0.0, %v1788
        %1790 = vmatmul.f32.gmra.mxu0 %v1678
        %v1791 = vpop.f32.mrf.mxu0
        %v1792 = vadd.f32 0.0, %v1791
        %1793 = vmatmul.f32.gmra.mxu0 %v1679
        %v1794 = vpop.f32.mrf.mxu0
        %v1795 = vadd.f32 0.0, %v1794
        %1796 = vmatmul.f32.gmra.mxu0 %v1680
        %v1797 = vpop.f32.mrf.mxu0
        %v1798 = vadd.f32 0.0, %v1797
        %1799 = vmatmul.f32.gmra.mxu0 %v1681
        %v1800 = vpop.f32.mrf.mxu0
        %v1801 = vadd.f32 0.0, %v1800
        %1802 = vmatmul.f32.gmra.mxu0 %v1682
        %v1803 = vpop.f32.mrf.mxu0
        %v1804 = vadd.f32 0.0, %v1803
        %1805 = vmatmul.f32.gmra.mxu0 %v1683
        %v1806 = vpop.f32.mrf.mxu0
        %v1807 = vadd.f32 0.0, %v1806
        %1808 = vmatmul.f32.gmra.mxu0 %v1684
        %v1809 = vpop.f32.mrf.mxu0
        %v1810 = vadd.f32 0.0, %v1809
        %1811 = vmatmul.f32.gmra.mxu0 %v1685
        %v1812 = vpop.f32.mrf.mxu0
        %v1813 = vadd.f32 0.0, %v1812
        %1814 = vdwg.mxu0
        %v1815 = vadd.f32 %v1622, %v1720
        %v1816 = vadd.f32 %v1623, %v1723
        %v1817 = vadd.f32 %v1624, %v1726
        %v1818 = vadd.f32 %v1625, %v1729
        %v1819 = vadd.f32 %v1626, %v1732
        %v1820 = vadd.f32 %v1627, %v1735
        %v1821 = vadd.f32 %v1628, %v1738
        %v1822 = vadd.f32 %v1629, %v1741
        %v1823 = vadd.f32 %v1630, %v1744
        %v1824 = vadd.f32 %v1631, %v1747
        %v1825 = vadd.f32 %v1632, %v1750
        %v1826 = vadd.f32 %v1633, %v1753
        %v1827 = vadd.f32 %v1634, %v1756
        %v1828 = vadd.f32 %v1635, %v1759
        %v1829 = vadd.f32 %v1636, %v1762
        %v1830 = vadd.f32 %v1637, %v1765
        %v1831 = vadd.f32 %v1638, %v1768
        %v1832 = vadd.f32 %v1639, %v1771
        %v1833 = vadd.f32 %v1640, %v1774
        %v1834 = vadd.f32 %v1641, %v1777
        %v1835 = vadd.f32 %v1642, %v1780
        %v1836 = vadd.f32 %v1643, %v1783
        %v1837 = vadd.f32 %v1644, %v1786
        %v1838 = vadd.f32 %v1645, %v1789
        %v1839 = vadd.f32 %v1646, %v1792
        %v1840 = vadd.f32 %v1647, %v1795
        %v1841 = vadd.f32 %v1648, %v1798
        %v1842 = vadd.f32 %v1649, %v1801
        %v1843 = vadd.f32 %v1650, %v1804
        %v1844 = vadd.f32 %v1651, %v1807
        %v1845 = vadd.f32 %v1652, %v1810
        %v1846 = vadd.f32 %v1653, %v1813
        %v1847 = vld [vmem:[%s1460 + $0x2] sm:$0xff]
        %v1848 = vld [vmem:[%s1460 + $0xa] sm:$0xff]
        %v1849 = vld [vmem:[%s1460 + $0x1a] sm:$0xff]
        %v1850 = vld [vmem:[%s1460 + $0x22] sm:$0xff]
        %v1851 = vld [vmem:[%s1460 + $0x32] sm:$0xff]
        %v1852 = vld [vmem:[%s1460 + $0x3a] sm:$0xff]
        %v1853 = vld [vmem:[%s1460 + $0x4a] sm:$0xff]
        %v1854 = vld [vmem:[%s1460 + $0x52] sm:$0xff]
        %v1855 = vld [vmem:[%s1460 + $0x62] sm:$0xff]
        %v1856 = vld [vmem:[%s1460 + $0x6a] sm:$0xff]
        %v1857 = vld [vmem:[%s1460 + $0x7a] sm:$0xff]
        %v1858 = vld [vmem:[%s1460 + $0x82] sm:$0xff]
        %v1859 = vld [vmem:[%s1460 + $0x92] sm:$0xff]
        %v1860 = vld [vmem:[%s1460 + $0x9a] sm:$0xff]
        %v1861 = vld [vmem:[%s1460 + $0xaa] sm:$0xff]
        %v1862 = vld [vmem:[%s1460 + $0xb2] sm:$0xff]
        %v1863 = vld [vmem:[%s1460 + $0xc2] sm:$0xff]
        %v1864 = vld [vmem:[%s1460 + $0xca] sm:$0xff]
        %v1865 = vld [vmem:[%s1460 + $0xda] sm:$0xff]
        %v1866 = vld [vmem:[%s1460 + $0xe2] sm:$0xff]
        %v1867 = vld [vmem:[%s1460 + $0xf2] sm:$0xff]
        %v1868 = vld [vmem:[%s1460 + $0xfa] sm:$0xff]
        %v1869 = vld [vmem:[%s1460 + $0x10a] sm:$0xff]
        %v1870 = vld [vmem:[%s1460 + $0x112] sm:$0xff]
        %v1871 = vld [vmem:[%s1460 + $0x122] sm:$0xff]
        %v1872 = vld [vmem:[%s1460 + $0x12a] sm:$0xff]
        %v1873 = vld [vmem:[%s1460 + $0x13a] sm:$0xff]
        %v1874 = vld [vmem:[%s1460 + $0x142] sm:$0xff]
        %v1875 = vld [vmem:[%s1460 + $0x152] sm:$0xff]
        %v1876 = vld [vmem:[%s1460 + $0x15a] sm:$0xff]
        %v1877 = vld [vmem:[%s1460 + $0x16a] sm:$0xff]
        %v1878 = vld [vmem:[%s1460 + $0x172] sm:$0xff]
        %v1879 = vld [vmem:[#allocation6 + $0x400] sm:$0xff]
        %v1880 = vld [vmem:[#allocation6 + $0x408] sm:$0xff]
        %v1881 = vld [vmem:[#allocation6 + $0x410] sm:$0xff]
        %v1882 = vld [vmem:[#allocation6 + $0x418] sm:$0xff]
        %v1883 = vld [vmem:[#allocation6 + $0x420] sm:$0xff]
        %v1884 = vld [vmem:[#allocation6 + $0x428] sm:$0xff]
        %v1885 = vld [vmem:[#allocation6 + $0x430] sm:$0xff]
        %v1886 = vld [vmem:[#allocation6 + $0x438] sm:$0xff]
        %v1887 = vld [vmem:[#allocation6 + $0x440] sm:$0xff]
        %v1888 = vld [vmem:[#allocation6 + $0x448] sm:$0xff]
        %v1889 = vld [vmem:[#allocation6 + $0x450] sm:$0xff]
        %v1890 = vld [vmem:[#allocation6 + $0x458] sm:$0xff]
        %v1891 = vld [vmem:[#allocation6 + $0x460] sm:$0xff]
        %v1892 = vld [vmem:[#allocation6 + $0x468] sm:$0xff]
        %v1893 = vld [vmem:[#allocation6 + $0x470] sm:$0xff]
        %v1894 = vld [vmem:[#allocation6 + $0x478] sm:$0xff]
        %1895 = vmatpush.msra.mxu0 %v1894
        %1896 = vmatpush.msra.mxu0 %v1893
        %1897 = vmatpush.msra.mxu0 %v1892
        %1898 = vmatpush.msra.mxu0 %v1891
        %1899 = vmatpush.msra.mxu0 %v1890
        %1900 = vmatpush.msra.mxu0 %v1889
        %1901 = vmatpush.msra.mxu0 %v1888
        %1902 = vmatpush.msra.mxu0 %v1887
        %1903 = vmatpush.msra.mxu0 %v1886
        %1904 = vmatpush.msra.mxu0 %v1885
        %1905 = vmatpush.msra.mxu0 %v1884
        %1906 = vmatpush.msra.mxu0 %v1883
        %1907 = vmatpush.msra.mxu0 %v1882
        %1908 = vmatpush.msra.mxu0 %v1881
        %1909 = vmatpush.msra.mxu0 %v1880
        %1910 = vmatpush.msra.mxu0 %v1879
        %1911 = vmatmul.f32.gmra.mxu0 %v1847
        %v1912 = vpop.f32.mrf.mxu0
        %v1913 = vadd.f32 0.0, %v1912
        %1914 = vmatmul.f32.gmra.mxu0 %v1848
        %v1915 = vpop.f32.mrf.mxu0
        %v1916 = vadd.f32 0.0, %v1915
        %1917 = vmatmul.f32.gmra.mxu0 %v1849
        %v1918 = vpop.f32.mrf.mxu0
        %v1919 = vadd.f32 0.0, %v1918
        %1920 = vmatmul.f32.gmra.mxu0 %v1850
        %v1921 = vpop.f32.mrf.mxu0
        %v1922 = vadd.f32 0.0, %v1921
        %1923 = vmatmul.f32.gmra.mxu0 %v1851
        %v1924 = vpop.f32.mrf.mxu0
        %v1925 = vadd.f32 0.0, %v1924
        %1926 = vmatmul.f32.gmra.mxu0 %v1852
        %v1927 = vpop.f32.mrf.mxu0
        %v1928 = vadd.f32 0.0, %v1927
        %1929 = vmatmul.f32.gmra.mxu0 %v1853
        %v1930 = vpop.f32.mrf.mxu0
        %v1931 = vadd.f32 0.0, %v1930
        %1932 = vmatmul.f32.gmra.mxu0 %v1854
        %v1933 = vpop.f32.mrf.mxu0
        %v1934 = vadd.f32 0.0, %v1933
        %1935 = vmatmul.f32.gmra.mxu0 %v1855
        %v1936 = vpop.f32.mrf.mxu0
        %v1937 = vadd.f32 0.0, %v1936
        %1938 = vmatmul.f32.gmra.mxu0 %v1856
        %v1939 = vpop.f32.mrf.mxu0
        %v1940 = vadd.f32 0.0, %v1939
        %1941 = vmatmul.f32.gmra.mxu0 %v1857
        %v1942 = vpop.f32.mrf.mxu0
        %v1943 = vadd.f32 0.0, %v1942
        %1944 = vmatmul.f32.gmra.mxu0 %v1858
        %v1945 = vpop.f32.mrf.mxu0
        %v1946 = vadd.f32 0.0, %v1945
        %1947 = vmatmul.f32.gmra.mxu0 %v1859
        %v1948 = vpop.f32.mrf.mxu0
        %v1949 = vadd.f32 0.0, %v1948
        %1950 = vmatmul.f32.gmra.mxu0 %v1860
        %v1951 = vpop.f32.mrf.mxu0
        %v1952 = vadd.f32 0.0, %v1951
        %1953 = vmatmul.f32.gmra.mxu0 %v1861
        %v1954 = vpop.f32.mrf.mxu0
        %v1955 = vadd.f32 0.0, %v1954
        %1956 = vmatmul.f32.gmra.mxu0 %v1862
        %v1957 = vpop.f32.mrf.mxu0
        %v1958 = vadd.f32 0.0, %v1957
        %1959 = vmatmul.f32.gmra.mxu0 %v1863
        %v1960 = vpop.f32.mrf.mxu0
        %v1961 = vadd.f32 0.0, %v1960
        %1962 = vmatmul.f32.gmra.mxu0 %v1864
        %v1963 = vpop.f32.mrf.mxu0
        %v1964 = vadd.f32 0.0, %v1963
        %1965 = vmatmul.f32.gmra.mxu0 %v1865
        %v1966 = vpop.f32.mrf.mxu0
        %v1967 = vadd.f32 0.0, %v1966
        %1968 = vmatmul.f32.gmra.mxu0 %v1866
        %v1969 = vpop.f32.mrf.mxu0
        %v1970 = vadd.f32 0.0, %v1969
        %1971 = vmatmul.f32.gmra.mxu0 %v1867
        %v1972 = vpop.f32.mrf.mxu0
        %v1973 = vadd.f32 0.0, %v1972
        %1974 = vmatmul.f32.gmra.mxu0 %v1868
        %v1975 = vpop.f32.mrf.mxu0
        %v1976 = vadd.f32 0.0, %v1975
        %1977 = vmatmul.f32.gmra.mxu0 %v1869
        %v1978 = vpop.f32.mrf.mxu0
        %v1979 = vadd.f32 0.0, %v1978
        %1980 = vmatmul.f32.gmra.mxu0 %v1870
        %v1981 = vpop.f32.mrf.mxu0
        %v1982 = vadd.f32 0.0, %v1981
        %1983 = vmatmul.f32.gmra.mxu0 %v1871
        %v1984 = vpop.f32.mrf.mxu0
        %v1985 = vadd.f32 0.0, %v1984
        %1986 = vmatmul.f32.gmra.mxu0 %v1872
        %v1987 = vpop.f32.mrf.mxu0
        %v1988 = vadd.f32 0.0, %v1987
        %1989 = vmatmul.f32.gmra.mxu0 %v1873
        %v1990 = vpop.f32.mrf.mxu0
        %v1991 = vadd.f32 0.0, %v1990
        %1992 = vmatmul.f32.gmra.mxu0 %v1874
        %v1993 = vpop.f32.mrf.mxu0
        %v1994 = vadd.f32 0.0, %v1993
        %1995 = vmatmul.f32.gmra.mxu0 %v1875
        %v1996 = vpop.f32.mrf.mxu0
        %v1997 = vadd.f32 0.0, %v1996
        %1998 = vmatmul.f32.gmra.mxu0 %v1876
        %v1999 = vpop.f32.mrf.mxu0
        %v2000 = vadd.f32 0.0, %v1999
        %2001 = vmatmul.f32.gmra.mxu0 %v1877
        %v2002 = vpop.f32.mrf.mxu0
        %v2003 = vadd.f32 0.0, %v2002
        %2004 = vmatmul.f32.gmra.mxu0 %v1878
        %v2005 = vpop.f32.mrf.mxu0
        %v2006 = vadd.f32 0.0, %v2005
        %2007 = vdwg.mxu0
        %v2008 = vadd.f32 %v1815, %v1913
        %v2009 = vadd.f32 %v1816, %v1916
        %v2010 = vadd.f32 %v1817, %v1919
        %v2011 = vadd.f32 %v1818, %v1922
        %v2012 = vadd.f32 %v1819, %v1925
        %v2013 = vadd.f32 %v1820, %v1928
        %v2014 = vadd.f32 %v1821, %v1931
        %v2015 = vadd.f32 %v1822, %v1934
        %v2016 = vadd.f32 %v1823, %v1937
        %v2017 = vadd.f32 %v1824, %v1940
        %v2018 = vadd.f32 %v1825, %v1943
        %v2019 = vadd.f32 %v1826, %v1946
        %v2020 = vadd.f32 %v1827, %v1949
        %v2021 = vadd.f32 %v1828, %v1952
        %v2022 = vadd.f32 %v1829, %v1955
        %v2023 = vadd.f32 %v1830, %v1958
        %v2024 = vadd.f32 %v1831, %v1961
        %v2025 = vadd.f32 %v1832, %v1964
        %v2026 = vadd.f32 %v1833, %v1967
        %v2027 = vadd.f32 %v1834, %v1970
        %v2028 = vadd.f32 %v1835, %v1973
        %v2029 = vadd.f32 %v1836, %v1976
        %v2030 = vadd.f32 %v1837, %v1979
        %v2031 = vadd.f32 %v1838, %v1982
        %v2032 = vadd.f32 %v1839, %v1985
        %v2033 = vadd.f32 %v1840, %v1988
        %v2034 = vadd.f32 %v1841, %v1991
        %v2035 = vadd.f32 %v1842, %v1994
        %v2036 = vadd.f32 %v1843, %v1997
        %v2037 = vadd.f32 %v1844, %v2000
        %v2038 = vadd.f32 %v1845, %v2003
        %v2039 = vadd.f32 %v1846, %v2006
        %v2040 = vadd.f32 %v2008, %v2009
        %v2041 = vadd.f32 %v2040, %v2010
        %v2042 = vadd.f32 %v2041, %v2011
        %v2043 = vadd.f32 %v2042, %v2012
        %v2044 = vadd.f32 %v2043, %v2013
        %v2045 = vadd.f32 %v2044, %v2014
        %v2046 = vadd.f32 %v2045, %v2015
        %v2047 = vadd.f32 %v2046, %v2016
        %v2048 = vadd.f32 %v2047, %v2017
        %v2049 = vadd.f32 %v2048, %v2018
        %v2050 = vadd.f32 %v2049, %v2019
        %v2051 = vadd.f32 %v2050, %v2020
        %v2052 = vadd.f32 %v2051, %v2021
        %v2053 = vadd.f32 %v2052, %v2022
        %v2054 = vadd.f32 %v2053, %v2023
        %v2055 = vadd.f32 %v2054, %v2024
        %v2056 = vadd.f32 %v2055, %v2025
        %v2057 = vadd.f32 %v2056, %v2026
        %v2058 = vadd.f32 %v2057, %v2027
        %v2059 = vadd.f32 %v2058, %v2028
        %v2060 = vadd.f32 %v2059, %v2029
        %v2061 = vadd.f32 %v2060, %v2030
        %v2062 = vadd.f32 %v2061, %v2031
        %v2063 = vadd.f32 %v2062, %v2032
        %v2064 = vadd.f32 %v2063, %v2033
        %v2065 = vadd.f32 %v2064, %v2034
        %v2066 = vadd.f32 %v2065, %v2035
        %v2067 = vadd.f32 %v2066, %v2036
        %v2068 = vadd.f32 %v2067, %v2037
        %v2069 = vadd.f32 %v2068, %v2038
        %v2070 = vadd.f32 %v2069, %v2039
        %v2071 = vrot.slane %v2070, 4
        %v2072 = vadd.f32 %v2070, %v2071
        %v2073 = vrot.slane %v2072, 2
        %v2074 = vadd.f32 %v2072, %v2073
        %v2075 = vrot.slane %v2074, 1
        %v2076 = vadd.f32 %v2074, %v2075
        %v2077 = vrcp.pop 256.0
        %v2078 = vmul.f32 256.0, %v2077
        %v2079 = vsub.f32 1.0, %v2078
        %v2080 = vmul.f32 %v2077, %v2079
        %v2081 = vadd.f32 %v2077, %v2080
        %vm2082 = vweird.f32 %v2077
        %v2083 = vsel %vm2082, %v2077, %v2081
        %v2084 = vmul.f32 %v2076, %v2083
        %v2085 = vsub.f32 %v2008, %v2084
        %v2086 = vsub.f32 %v2009, %v2084
        %v2087 = vsub.f32 %v2010, %v2084
        %v2088 = vsub.f32 %v2011, %v2084
        %v2089 = vsub.f32 %v2012, %v2084
        %v2090 = vsub.f32 %v2013, %v2084
        %v2091 = vsub.f32 %v2014, %v2084
        %v2092 = vsub.f32 %v2015, %v2084
        %v2093 = vsub.f32 %v2016, %v2084
        %v2094 = vsub.f32 %v2017, %v2084
        %v2095 = vsub.f32 %v2018, %v2084
        %v2096 = vsub.f32 %v2019, %v2084
        %v2097 = vsub.f32 %v2020, %v2084
        %v2098 = vsub.f32 %v2021, %v2084
        %v2099 = vsub.f32 %v2022, %v2084
        %v2100 = vsub.f32 %v2023, %v2084
        %v2101 = vsub.f32 %v2024, %v2084
        %v2102 = vsub.f32 %v2025, %v2084
        %v2103 = vsub.f32 %v2026, %v2084
        %v2104 = vsub.f32 %v2027, %v2084
        %v2105 = vsub.f32 %v2028, %v2084
        %v2106 = vsub.f32 %v2029, %v2084
        %v2107 = vsub.f32 %v2030, %v2084
        %v2108 = vsub.f32 %v2031, %v2084
        %v2109 = vsub.f32 %v2032, %v2084
        %v2110 = vsub.f32 %v2033, %v2084
        %v2111 = vsub.f32 %v2034, %v2084
        %v2112 = vsub.f32 %v2035, %v2084
        %v2113 = vsub.f32 %v2036, %v2084
        %v2114 = vsub.f32 %v2037, %v2084
        %v2115 = vsub.f32 %v2038, %v2084
        %v2116 = vsub.f32 %v2039, %v2084
        %v2117 = vmul.f32 %v2085, %v2085
        %v2118 = vmul.f32 %v2086, %v2086
        %v2119 = vmul.f32 %v2087, %v2087
        %v2120 = vmul.f32 %v2088, %v2088
        %v2121 = vmul.f32 %v2089, %v2089
        %v2122 = vmul.f32 %v2090, %v2090
        %v2123 = vmul.f32 %v2091, %v2091
        %v2124 = vmul.f32 %v2092, %v2092
        %v2125 = vmul.f32 %v2093, %v2093
        %v2126 = vmul.f32 %v2094, %v2094
        %v2127 = vmul.f32 %v2095, %v2095
        %v2128 = vmul.f32 %v2096, %v2096
        %v2129 = vmul.f32 %v2097, %v2097
        %v2130 = vmul.f32 %v2098, %v2098
        %v2131 = vmul.f32 %v2099, %v2099
        %v2132 = vmul.f32 %v2100, %v2100
        %v2133 = vmul.f32 %v2101, %v2101
        %v2134 = vmul.f32 %v2102, %v2102
        %v2135 = vmul.f32 %v2103, %v2103
        %v2136 = vmul.f32 %v2104, %v2104
        %v2137 = vmul.f32 %v2105, %v2105
        %v2138 = vmul.f32 %v2106, %v2106
        %v2139 = vmul.f32 %v2107, %v2107
        %v2140 = vmul.f32 %v2108, %v2108
        %v2141 = vmul.f32 %v2109, %v2109
        %v2142 = vmul.f32 %v2110, %v2110
        %v2143 = vmul.f32 %v2111, %v2111
        %v2144 = vmul.f32 %v2112, %v2112
        %v2145 = vmul.f32 %v2113, %v2113
        %v2146 = vmul.f32 %v2114, %v2114
        %v2147 = vmul.f32 %v2115, %v2115
        %v2148 = vmul.f32 %v2116, %v2116
        %v2149 = vadd.f32 %v2117, %v2118
        %v2150 = vadd.f32 %v2149, %v2119
        %v2151 = vadd.f32 %v2150, %v2120
        %v2152 = vadd.f32 %v2151, %v2121
        %v2153 = vadd.f32 %v2152, %v2122
        %v2154 = vadd.f32 %v2153, %v2123
        %v2155 = vadd.f32 %v2154, %v2124
        %v2156 = vadd.f32 %v2155, %v2125
        %v2157 = vadd.f32 %v2156, %v2126
        %v2158 = vadd.f32 %v2157, %v2127
        %v2159 = vadd.f32 %v2158, %v2128
        %v2160 = vadd.f32 %v2159, %v2129
        %v2161 = vadd.f32 %v2160, %v2130
        %v2162 = vadd.f32 %v2161, %v2131
        %v2163 = vadd.f32 %v2162, %v2132
        %v2164 = vadd.f32 %v2163, %v2133
        %v2165 = vadd.f32 %v2164, %v2134
        %v2166 = vadd.f32 %v2165, %v2135
        %v2167 = vadd.f32 %v2166, %v2136
        %v2168 = vadd.f32 %v2167, %v2137
        %v2169 = vadd.f32 %v2168, %v2138
        %v2170 = vadd.f32 %v2169, %v2139
        %v2171 = vadd.f32 %v2170, %v2140
        %v2172 = vadd.f32 %v2171, %v2141
        %v2173 = vadd.f32 %v2172, %v2142
        %v2174 = vadd.f32 %v2173, %v2143
        %v2175 = vadd.f32 %v2174, %v2144
        %v2176 = vadd.f32 %v2175, %v2145
        %v2177 = vadd.f32 %v2176, %v2146
        %v2178 = vadd.f32 %v2177, %v2147
        %v2179 = vadd.f32 %v2178, %v2148
        %v2180 = vrot.slane %v2179, 4
        %v2181 = vadd.f32 %v2179, %v2180
        %v2182 = vrot.slane %v2181, 2
        %v2183 = vadd.f32 %v2181, %v2182
        %v2184 = vrot.slane %v2183, 1
        %v2185 = vadd.f32 %v2183, %v2184
        %v2186 = vmul.f32 %v2185, %v2083
        %v2187 = vadd.f32 %v2186, 1e-05
        %v2188 = vrsqrt.pop %v2187
        %v2189 = vmul.f32 %v2188, %v2187
        %v2190 = vmul.f32 %v2189, %v2188
        %v2191 = vmul.f32 0.5, %v2190
        %v2192 = vsub.f32 1.5, %v2191
        %v2193 = vmul.f32 %v2188, %v2192
        %vm2194 = vweird.f32 %v2187
        %vm2195 = vweird.f32 %v2188
        %vm2196 = vmor %vm2194, %vm2195
        %v2197 = vsel %vm2196, %v2188, %v2193
        %v2198 = vmul.f32 %v2085, %v2197
        %v2199 = vmul.f32 %v2086, %v2197
        %v2200 = vmul.f32 %v2087, %v2197
        %v2201 = vmul.f32 %v2088, %v2197
        %v2202 = vmul.f32 %v2089, %v2197
        %v2203 = vmul.f32 %v2090, %v2197
        %v2204 = vmul.f32 %v2091, %v2197
        %v2205 = vmul.f32 %v2092, %v2197
        %v2206 = vmul.f32 %v2093, %v2197
        %v2207 = vmul.f32 %v2094, %v2197
        %v2208 = vmul.f32 %v2095, %v2197
        %v2209 = vmul.f32 %v2096, %v2197
        %v2210 = vmul.f32 %v2097, %v2197
        %v2211 = vmul.f32 %v2098, %v2197
        %v2212 = vmul.f32 %v2099, %v2197
        %v2213 = vmul.f32 %v2100, %v2197
        %v2214 = vmul.f32 %v2101, %v2197
        %v2215 = vmul.f32 %v2102, %v2197
        %v2216 = vmul.f32 %v2103, %v2197
        %v2217 = vmul.f32 %v2104, %v2197
        %v2218 = vmul.f32 %v2105, %v2197
        %v2219 = vmul.f32 %v2106, %v2197
        %v2220 = vmul.f32 %v2107, %v2197
        %v2221 = vmul.f32 %v2108, %v2197
        %v2222 = vmul.f32 %v2109, %v2197
        %v2223 = vmul.f32 %v2110, %v2197
        %v2224 = vmul.f32 %v2111, %v2197
        %v2225 = vmul.f32 %v2112, %v2197
        %v2226 = vmul.f32 %v2113, %v2197
        %v2227 = vmul.f32 %v2114, %v2197
        %v2228 = vmul.f32 %v2115, %v2197
        %v2229 = vmul.f32 %v2116, %v2197
        %v2230 = vmax.f32 %v2198, 0.0
        %v2231 = vmax.f32 %v2199, 0.0
        %v2232 = vmax.f32 %v2200, 0.0
        %v2233 = vmax.f32 %v2201, 0.0
        %v2234 = vmax.f32 %v2202, 0.0
        %v2235 = vmax.f32 %v2203, 0.0
        %v2236 = vmax.f32 %v2204, 0.0
        %v2237 = vmax.f32 %v2205, 0.0
        %v2238 = vmax.f32 %v2206, 0.0
        %v2239 = vmax.f32 %v2207, 0.0
        %v2240 = vmax.f32 %v2208, 0.0
        %v2241 = vmax.f32 %v2209, 0.0
        %v2242 = vmax.f32 %v2210, 0.0
        %v2243 = vmax.f32 %v2211, 0.0
        %v2244 = vmax.f32 %v2212, 0.0
        %v2245 = vmax.f32 %v2213, 0.0
        %v2246 = vmax.f32 %v2214, 0.0
        %v2247 = vmax.f32 %v2215, 0.0
        %v2248 = vmax.f32 %v2216, 0.0
        %v2249 = vmax.f32 %v2217, 0.0
        %v2250 = vmax.f32 %v2218, 0.0
        %v2251 = vmax.f32 %v2219, 0.0
        %v2252 = vmax.f32 %v2220, 0.0
        %v2253 = vmax.f32 %v2221, 0.0
        %v2254 = vmax.f32 %v2222, 0.0
        %v2255 = vmax.f32 %v2223, 0.0
        %v2256 = vmax.f32 %v2224, 0.0
        %v2257 = vmax.f32 %v2225, 0.0
        %v2258 = vmax.f32 %v2226, 0.0
        %v2259 = vmax.f32 %v2227, 0.0
        %v2260 = vmax.f32 %v2228, 0.0
        %v2261 = vmax.f32 %v2229, 0.0
        %2262 = vst [vmem:[%s256 + $0x1] sm:$0xff] %v2230
        %2263 = vst [vmem:[%s256 + $0x9] sm:$0xff] %v2231
        %2264 = vst [vmem:[%s256 + $0x19] sm:$0xff] %v2232
        %2265 = vst [vmem:[%s256 + $0x21] sm:$0xff] %v2233
        %2266 = vst [vmem:[%s256 + $0x31] sm:$0xff] %v2234
        %2267 = vst [vmem:[%s256 + $0x39] sm:$0xff] %v2235
        %2268 = vst [vmem:[%s256 + $0x49] sm:$0xff] %v2236
        %2269 = vst [vmem:[%s256 + $0x51] sm:$0xff] %v2237
        %2270 = vst [vmem:[%s256 + $0x61] sm:$0xff] %v2238
        %2271 = vst [vmem:[%s256 + $0x69] sm:$0xff] %v2239
        %2272 = vst [vmem:[%s256 + $0x79] sm:$0xff] %v2240
        %2273 = vst [vmem:[%s256 + $0x81] sm:$0xff] %v2241
        %2274 = vst [vmem:[%s256 + $0x91] sm:$0xff] %v2242
        %2275 = vst [vmem:[%s256 + $0x99] sm:$0xff] %v2243
        %2276 = vst [vmem:[%s256 + $0xa9] sm:$0xff] %v2244
        %2277 = vst [vmem:[%s256 + $0xb1] sm:$0xff] %v2245
        %2278 = vst [vmem:[%s256 + $0xc1] sm:$0xff] %v2246
        %2279 = vst [vmem:[%s256 + $0xc9] sm:$0xff] %v2247
        %2280 = vst [vmem:[%s256 + $0xd9] sm:$0xff] %v2248
        %2281 = vst [vmem:[%s256 + $0xe1] sm:$0xff] %v2249
        %2282 = vst [vmem:[%s256 + $0xf1] sm:$0xff] %v2250
        %2283 = vst [vmem:[%s256 + $0xf9] sm:$0xff] %v2251
        %2284 = vst [vmem:[%s256 + $0x109] sm:$0xff] %v2252
        %2285 = vst [vmem:[%s256 + $0x111] sm:$0xff] %v2253
        %2286 = vst [vmem:[%s256 + $0x121] sm:$0xff] %v2254
        %2287 = vst [vmem:[%s256 + $0x129] sm:$0xff] %v2255
        %2288 = vst [vmem:[%s256 + $0x139] sm:$0xff] %v2256
        %2289 = vst [vmem:[%s256 + $0x141] sm:$0xff] %v2257
        %2290 = vst [vmem:[%s256 + $0x151] sm:$0xff] %v2258
        %2291 = vst [vmem:[%s256 + $0x159] sm:$0xff] %v2259
        %2292 = vst [vmem:[%s256 + $0x169] sm:$0xff] %v2260
        %2293 = vst [vmem:[%s256 + $0x171] sm:$0xff] %v2261
        %2294 = vst [vmem:[#allocation2 + $0x1] sm:$0xff] %v2232
        %2295 = vst [vmem:[#allocation2 + $0x9] sm:$0xff] %v2233
        %2296 = vst [vmem:[%s291 + $0x1] sm:$0xff] %v2258
        %2297 = vst [vmem:[%s291 + $0x9] sm:$0xff] %v2259
        %v2298 = vld [vmem:[#allocation2 + $0x2] sm:$0x1]
        %v2299 = vld [vmem:[#allocation2 + $0x1a] sm:$0x1]
        %v2300 = vld [vmem:[#allocation2 + $0x32] sm:$0x1]
        %v2301 = vld [vmem:[#allocation2 + $0x4a] sm:$0x1]
        %v2302 = vld [vmem:[#allocation2 + $0x62] sm:$0x1]
        %v2303 = vld [vmem:[#allocation2 + $0x7a] sm:$0x1]
        %v2304 = vld [vmem:[#allocation2 + $0x92] sm:$0x1]
        %v2305 = vld [vmem:[#allocation2 + $0xaa] sm:$0x1]
        %v2306 = vld [vmem:[#allocation2 + $0xc2] sm:$0x1]
        %v2307 = vld [vmem:[#allocation2 + $0xda] sm:$0x1]
        %v2308 = vld [vmem:[#allocation2 + $0xf2] sm:$0x1]
        %v2309 = vld [vmem:[#allocation2 + $0x10a] sm:$0x1]
        %v2310 = vld [vmem:[#allocation2 + $0x122] sm:$0x1]
        %v2311 = vld [vmem:[#allocation2 + $0x13a] sm:$0x1]
        %v2312 = vld [vmem:[#allocation2 + $0x152] sm:$0x1]
        %v2313 = vld [vmem:[#allocation2 + $0x16a] sm:$0x1]
        %v2314 = vld [vmem:[#allocation2 + $0x182] sm:$0x1]
        %v2315 = vld [vmem:[#allocation2 + $0x19a] sm:$0x1]
        %2316 = vst [vmem:[#allocation2] sm:$0x1] %v2298
        %2317 = vst [vmem:[#allocation2 + $0x18] sm:$0x1] %v2299
        %2318 = vst [vmem:[#allocation2 + $0x30] sm:$0x1] %v2300
        %2319 = vst [vmem:[#allocation2 + $0x48] sm:$0x1] %v2301
        %2320 = vst [vmem:[#allocation2 + $0x60] sm:$0x1] %v2302
        %2321 = vst [vmem:[#allocation2 + $0x78] sm:$0x1] %v2303
        %2322 = vst [vmem:[#allocation2 + $0x90] sm:$0x1] %v2304
        %2323 = vst [vmem:[#allocation2 + $0xa8] sm:$0x1] %v2305
        %2324 = vst [vmem:[#allocation2 + $0xc0] sm:$0x1] %v2306
        %2325 = vst [vmem:[#allocation2 + $0xd8] sm:$0x1] %v2307
        %2326 = vst [vmem:[#allocation2 + $0xf0] sm:$0x1] %v2308
        %2327 = vst [vmem:[#allocation2 + $0x108] sm:$0x1] %v2309
        %2328 = vst [vmem:[#allocation2 + $0x120] sm:$0x1] %v2310
        %2329 = vst [vmem:[#allocation2 + $0x138] sm:$0x1] %v2311
        %2330 = vst [vmem:[#allocation2 + $0x150] sm:$0x1] %v2312
        %2331 = vst [vmem:[#allocation2 + $0x168] sm:$0x1] %v2313
        %2332 = vst [vmem:[#allocation2 + $0x180] sm:$0x1] %v2314
        %2333 = vst [vmem:[#allocation2 + $0x198] sm:$0x1] %v2315
        %v2334 = vld [vmem:[#allocation2 + $0xf] sm:$0x1]
        %v2335 = vld [vmem:[#allocation2 + $0x27] sm:$0x1]
        %v2336 = vld [vmem:[#allocation2 + $0x3f] sm:$0x1]
        %v2337 = vld [vmem:[#allocation2 + $0x57] sm:$0x1]
        %v2338 = vld [vmem:[#allocation2 + $0x6f] sm:$0x1]
        %v2339 = vld [vmem:[#allocation2 + $0x87] sm:$0x1]
        %v2340 = vld [vmem:[#allocation2 + $0x9f] sm:$0x1]
        %v2341 = vld [vmem:[#allocation2 + $0xb7] sm:$0x1]
        %v2342 = vld [vmem:[#allocation2 + $0xcf] sm:$0x1]
        %v2343 = vld [vmem:[#allocation2 + $0xe7] sm:$0x1]
        %v2344 = vld [vmem:[#allocation2 + $0xff] sm:$0x1]
        %v2345 = vld [vmem:[#allocation2 + $0x117] sm:$0x1]
        %v2346 = vld [vmem:[#allocation2 + $0x12f] sm:$0x1]
        %v2347 = vld [vmem:[#allocation2 + $0x147] sm:$0x1]
        %v2348 = vld [vmem:[#allocation2 + $0x15f] sm:$0x1]
        %v2349 = vld [vmem:[#allocation2 + $0x177] sm:$0x1]
        %v2350 = vld [vmem:[#allocation2 + $0x18f] sm:$0x1]
        %v2351 = vld [vmem:[#allocation2 + $0x1a7] sm:$0x1]
        %2352 = vst [vmem:[#allocation2 + $0x11] sm:$0x1] %v2334
        %2353 = vst [vmem:[#allocation2 + $0x29] sm:$0x1] %v2335
        %2354 = vst [vmem:[#allocation2 + $0x41] sm:$0x1] %v2336
        %2355 = vst [vmem:[#allocation2 + $0x59] sm:$0x1] %v2337
        %2356 = vst [vmem:[#allocation2 + $0x71] sm:$0x1] %v2338
        %2357 = vst [vmem:[#allocation2 + $0x89] sm:$0x1] %v2339
        %2358 = vst [vmem:[#allocation2 + $0xa1] sm:$0x1] %v2340
        %2359 = vst [vmem:[#allocation2 + $0xb9] sm:$0x1] %v2341
        %2360 = vst [vmem:[#allocation2 + $0xd1] sm:$0x1] %v2342
        %2361 = vst [vmem:[#allocation2 + $0xe9] sm:$0x1] %v2343
        %2362 = vst [vmem:[#allocation2 + $0x101] sm:$0x1] %v2344
        %2363 = vst [vmem:[#allocation2 + $0x119] sm:$0x1] %v2345
        %2364 = vst [vmem:[#allocation2 + $0x131] sm:$0x1] %v2346
        %2365 = vst [vmem:[#allocation2 + $0x149] sm:$0x1] %v2347
        %2366 = vst [vmem:[#allocation2 + $0x161] sm:$0x1] %v2348
        %2367 = vst [vmem:[#allocation2 + $0x179] sm:$0x1] %v2349
        %2368 = vst [vmem:[#allocation2 + $0x191] sm:$0x1] %v2350
        %2369 = vst [vmem:[#allocation2 + $0x1a9] sm:$0x1] %v2351
        %v2370 = vld [vmem:[#allocation2] sm:$0xff]
        %v2371 = vld [vmem:[#allocation2 + $0x8] sm:$0xff]
        %v2372 = vld [vmem:[#allocation2 + $0x18] sm:$0xff]
        %v2373 = vld [vmem:[#allocation2 + $0x20] sm:$0xff]
        %v2374 = vld [vmem:[#allocation2 + $0x30] sm:$0xff]
        %v2375 = vld [vmem:[#allocation2 + $0x38] sm:$0xff]
        %v2376 = vld [vmem:[#allocation2 + $0x48] sm:$0xff]
        %v2377 = vld [vmem:[#allocation2 + $0x50] sm:$0xff]
        %v2378 = vld [vmem:[#allocation2 + $0x60] sm:$0xff]
        %v2379 = vld [vmem:[#allocation2 + $0x68] sm:$0xff]
        %v2380 = vld [vmem:[#allocation2 + $0x78] sm:$0xff]
        %v2381 = vld [vmem:[#allocation2 + $0x80] sm:$0xff]
        %v2382 = vld [vmem:[#allocation2 + $0x90] sm:$0xff]
        %v2383 = vld [vmem:[#allocation2 + $0x98] sm:$0xff]
        %v2384 = vld [vmem:[#allocation2 + $0xa8] sm:$0xff]
        %v2385 = vld [vmem:[#allocation2 + $0xb0] sm:$0xff]
        %v2386 = vld [vmem:[#allocation2 + $0xc0] sm:$0xff]
        %v2387 = vld [vmem:[#allocation2 + $0xc8] sm:$0xff]
        %v2388 = vld [vmem:[#allocation2 + $0xd8] sm:$0xff]
        %v2389 = vld [vmem:[#allocation2 + $0xe0] sm:$0xff]
        %v2390 = vld [vmem:[#allocation2 + $0xf0] sm:$0xff]
        %v2391 = vld [vmem:[#allocation2 + $0xf8] sm:$0xff]
        %v2392 = vld [vmem:[#allocation2 + $0x108] sm:$0xff]
        %v2393 = vld [vmem:[#allocation2 + $0x110] sm:$0xff]
        %v2394 = vld [vmem:[#allocation2 + $0x120] sm:$0xff]
        %v2395 = vld [vmem:[#allocation2 + $0x128] sm:$0xff]
        %v2396 = vld [vmem:[#allocation2 + $0x138] sm:$0xff]
        %v2397 = vld [vmem:[#allocation2 + $0x140] sm:$0xff]
        %v2398 = vld [vmem:[#allocation2 + $0x150] sm:$0xff]
        %v2399 = vld [vmem:[#allocation2 + $0x158] sm:$0xff]
        %v2400 = vld [vmem:[#allocation2 + $0x168] sm:$0xff]
        %v2401 = vld [vmem:[#allocation2 + $0x170] sm:$0xff]
        %v2402 = vld [vmem:[#allocation8] sm:$0xff]
        %v2403 = vld [vmem:[#allocation8 + $0x8] sm:$0xff]
        %v2404 = vld [vmem:[#allocation8 + $0x10] sm:$0xff]
        %v2405 = vld [vmem:[#allocation8 + $0x18] sm:$0xff]
        %v2406 = vld [vmem:[#allocation8 + $0x20] sm:$0xff]
        %v2407 = vld [vmem:[#allocation8 + $0x28] sm:$0xff]
        %v2408 = vld [vmem:[#allocation8 + $0x30] sm:$0xff]
        %v2409 = vld [vmem:[#allocation8 + $0x38] sm:$0xff]
        %v2410 = vld [vmem:[#allocation8 + $0x40] sm:$0xff]
        %v2411 = vld [vmem:[#allocation8 + $0x48] sm:$0xff]
        %v2412 = vld [vmem:[#allocation8 + $0x50] sm:$0xff]
        %v2413 = vld [vmem:[#allocation8 + $0x58] sm:$0xff]
        %v2414 = vld [vmem:[#allocation8 + $0x60] sm:$0xff]
        %v2415 = vld [vmem:[#allocation8 + $0x68] sm:$0xff]
        %v2416 = vld [vmem:[#allocation8 + $0x70] sm:$0xff]
        %v2417 = vld [vmem:[#allocation8 + $0x78] sm:$0xff]
        %v2418 = vld [vmem:[#allocation2 + $0x1] sm:$0xff]
        %v2419 = vld [vmem:[#allocation2 + $0x9] sm:$0xff]
        %v2420 = vld [vmem:[#allocation2 + $0x19] sm:$0xff]
        %v2421 = vld [vmem:[#allocation2 + $0x21] sm:$0xff]
        %v2422 = vld [vmem:[#allocation2 + $0x31] sm:$0xff]
        %v2423 = vld [vmem:[#allocation2 + $0x39] sm:$0xff]
        %v2424 = vld [vmem:[#allocation2 + $0x49] sm:$0xff]
        %v2425 = vld [vmem:[#allocation2 + $0x51] sm:$0xff]
        %v2426 = vld [vmem:[#allocation2 + $0x61] sm:$0xff]
        %v2427 = vld [vmem:[#allocation2 + $0x69] sm:$0xff]
        %v2428 = vld [vmem:[#allocation2 + $0x79] sm:$0xff]
        %v2429 = vld [vmem:[#allocation2 + $0x81] sm:$0xff]
        %v2430 = vld [vmem:[#allocation2 + $0x91] sm:$0xff]
        %v2431 = vld [vmem:[#allocation2 + $0x99] sm:$0xff]
        %v2432 = vld [vmem:[#allocation2 + $0xa9] sm:$0xff]
        %v2433 = vld [vmem:[#allocation2 + $0xb1] sm:$0xff]
        %v2434 = vld [vmem:[#allocation2 + $0xc1] sm:$0xff]
        %v2435 = vld [vmem:[#allocation2 + $0xc9] sm:$0xff]
        %v2436 = vld [vmem:[#allocation2 + $0xd9] sm:$0xff]
        %v2437 = vld [vmem:[#allocation2 + $0xe1] sm:$0xff]
        %v2438 = vld [vmem:[#allocation2 + $0xf1] sm:$0xff]
        %v2439 = vld [vmem:[#allocation2 + $0xf9] sm:$0xff]
        %v2440 = vld [vmem:[#allocation2 + $0x109] sm:$0xff]
        %v2441 = vld [vmem:[#allocation2 + $0x111] sm:$0xff]
        %v2442 = vld [vmem:[#allocation2 + $0x121] sm:$0xff]
        %v2443 = vld [vmem:[#allocation2 + $0x129] sm:$0xff]
        %v2444 = vld [vmem:[#allocation2 + $0x139] sm:$0xff]
        %v2445 = vld [vmem:[#allocation2 + $0x141] sm:$0xff]
        %v2446 = vld [vmem:[#allocation2 + $0x151] sm:$0xff]
        %v2447 = vld [vmem:[#allocation2 + $0x159] sm:$0xff]
        %v2448 = vld [vmem:[#allocation2 + $0x169] sm:$0xff]
        %v2449 = vld [vmem:[#allocation2 + $0x171] sm:$0xff]
        %v2450 = vld [vmem:[#allocation8 + $0x80] sm:$0xff]
        %v2451 = vld [vmem:[#allocation8 + $0x88] sm:$0xff]
        %v2452 = vld [vmem:[#allocation8 + $0x90] sm:$0xff]
        %v2453 = vld [vmem:[#allocation8 + $0x98] sm:$0xff]
        %v2454 = vld [vmem:[#allocation8 + $0xa0] sm:$0xff]
        %v2455 = vld [vmem:[#allocation8 + $0xa8] sm:$0xff]
        %v2456 = vld [vmem:[#allocation8 + $0xb0] sm:$0xff]
        %v2457 = vld [vmem:[#allocation8 + $0xb8] sm:$0xff]
        %v2458 = vld [vmem:[#allocation8 + $0xc0] sm:$0xff]
        %v2459 = vld [vmem:[#allocation8 + $0xc8] sm:$0xff]
        %v2460 = vld [vmem:[#allocation8 + $0xd0] sm:$0xff]
        %v2461 = vld [vmem:[#allocation8 + $0xd8] sm:$0xff]
        %v2462 = vld [vmem:[#allocation8 + $0xe0] sm:$0xff]
        %v2463 = vld [vmem:[#allocation8 + $0xe8] sm:$0xff]
        %v2464 = vld [vmem:[#allocation8 + $0xf0] sm:$0xff]
        %v2465 = vld [vmem:[#allocation8 + $0xf8] sm:$0xff]
        %2466 = vmatpush.msra.mxu0 %v2465
        %2467 = vmatpush.msra.mxu0 %v2464
        %2468 = vmatpush.msra.mxu0 %v2463
        %2469 = vmatpush.msra.mxu0 %v2462
        %2470 = vmatpush.msra.mxu0 %v2461
        %2471 = vmatpush.msra.mxu0 %v2460
        %2472 = vmatpush.msra.mxu0 %v2459
        %2473 = vmatpush.msra.mxu0 %v2458
        %2474 = vmatpush.msra.mxu0 %v2457
        %2475 = vmatpush.msra.mxu0 %v2456
        %2476 = vmatpush.msra.mxu0 %v2455
        %2477 = vmatpush.msra.mxu0 %v2454
        %2478 = vmatpush.msra.mxu0 %v2453
        %2479 = vmatpush.msra.mxu0 %v2452
        %2480 = vmatpush.msra.mxu0 %v2451
        %2481 = vmatpush.msra.mxu0 %v2450
        %2482 = vmatmul.f32.gmra.mxu0 %v2418
        %v2483 = vpop.f32.mrf.mxu0
        %v2484 = vadd.f32 0.0, %v2483
        %2485 = vmatmul.f32.gmra.mxu0 %v2419
        %v2486 = vpop.f32.mrf.mxu0
        %v2487 = vadd.f32 0.0, %v2486
        %2488 = vmatmul.f32.gmra.mxu0 %v2420
        %v2489 = vpop.f32.mrf.mxu0
        %v2490 = vadd.f32 0.0, %v2489
        %2491 = vmatmul.f32.gmra.mxu0 %v2421
        %v2492 = vpop.f32.mrf.mxu0
        %v2493 = vadd.f32 0.0, %v2492
        %2494 = vmatmul.f32.gmra.mxu0 %v2422
        %v2495 = vpop.f32.mrf.mxu0
        %v2496 = vadd.f32 0.0, %v2495
        %2497 = vmatmul.f32.gmra.mxu0 %v2423
        %v2498 = vpop.f32.mrf.mxu0
        %v2499 = vadd.f32 0.0, %v2498
        %2500 = vmatmul.f32.gmra.mxu0 %v2424
        %v2501 = vpop.f32.mrf.mxu0
        %v2502 = vadd.f32 0.0, %v2501
        %2503 = vmatmul.f32.gmra.mxu0 %v2425
        %v2504 = vpop.f32.mrf.mxu0
        %v2505 = vadd.f32 0.0, %v2504
        %2506 = vmatmul.f32.gmra.mxu0 %v2426
        %v2507 = vpop.f32.mrf.mxu0
        %v2508 = vadd.f32 0.0, %v2507
        %2509 = vmatmul.f32.gmra.mxu0 %v2427
        %v2510 = vpop.f32.mrf.mxu0
        %v2511 = vadd.f32 0.0, %v2510
        %2512 = vmatmul.f32.gmra.mxu0 %v2428
        %v2513 = vpop.f32.mrf.mxu0
        %v2514 = vadd.f32 0.0, %v2513
        %2515 = vmatmul.f32.gmra.mxu0 %v2429
        %v2516 = vpop.f32.mrf.mxu0
        %v2517 = vadd.f32 0.0, %v2516
        %2518 = vmatmul.f32.gmra.mxu0 %v2430
        %v2519 = vpop.f32.mrf.mxu0
        %v2520 = vadd.f32 0.0, %v2519
        %2521 = vmatmul.f32.gmra.mxu0 %v2431
        %v2522 = vpop.f32.mrf.mxu0
        %v2523 = vadd.f32 0.0, %v2522
        %2524 = vmatmul.f32.gmra.mxu0 %v2432
        %v2525 = vpop.f32.mrf.mxu0
        %v2526 = vadd.f32 0.0, %v2525
        %2527 = vmatmul.f32.gmra.mxu0 %v2433
        %v2528 = vpop.f32.mrf.mxu0
        %v2529 = vadd.f32 0.0, %v2528
        %2530 = vmatmul.f32.gmra.mxu0 %v2434
        %v2531 = vpop.f32.mrf.mxu0
        %v2532 = vadd.f32 0.0, %v2531
        %2533 = vmatmul.f32.gmra.mxu0 %v2435
        %v2534 = vpop.f32.mrf.mxu0
        %v2535 = vadd.f32 0.0, %v2534
        %2536 = vmatmul.f32.gmra.mxu0 %v2436
        %v2537 = vpop.f32.mrf.mxu0
        %v2538 = vadd.f32 0.0, %v2537
        %2539 = vmatmul.f32.gmra.mxu0 %v2437
        %v2540 = vpop.f32.mrf.mxu0
        %v2541 = vadd.f32 0.0, %v2540
        %2542 = vmatmul.f32.gmra.mxu0 %v2438
        %v2543 = vpop.f32.mrf.mxu0
        %v2544 = vadd.f32 0.0, %v2543
        %2545 = vmatmul.f32.gmra.mxu0 %v2439
        %v2546 = vpop.f32.mrf.mxu0
        %v2547 = vadd.f32 0.0, %v2546
        %2548 = vmatmul.f32.gmra.mxu0 %v2440
        %v2549 = vpop.f32.mrf.mxu0
        %v2550 = vadd.f32 0.0, %v2549
        %2551 = vmatmul.f32.gmra.mxu0 %v2441
        %v2552 = vpop.f32.mrf.mxu0
        %v2553 = vadd.f32 0.0, %v2552
        %2554 = vmatmul.f32.gmra.mxu0 %v2442
        %v2555 = vpop.f32.mrf.mxu0
        %v2556 = vadd.f32 0.0, %v2555
        %2557 = vmatmul.f32.gmra.mxu0 %v2443
        %v2558 = vpop.f32.mrf.mxu0
        %v2559 = vadd.f32 0.0, %v2558
        %2560 = vmatmul.f32.gmra.mxu0 %v2444
        %v2561 = vpop.f32.mrf.mxu0
        %v2562 = vadd.f32 0.0, %v2561
        %2563 = vmatmul.f32.gmra.mxu0 %v2445
        %v2564 = vpop.f32.mrf.mxu0
        %v2565 = vadd.f32 0.0, %v2564
        %2566 = vmatmul.f32.gmra.mxu0 %v2446
        %v2567 = vpop.f32.mrf.mxu0
        %v2568 = vadd.f32 0.0, %v2567
        %2569 = vmatmul.f32.gmra.mxu0 %v2447
        %v2570 = vpop.f32.mrf.mxu0
        %v2571 = vadd.f32 0.0, %v2570
        %2572 = vmatmul.f32.gmra.mxu0 %v2448
        %v2573 = vpop.f32.mrf.mxu0
        %v2574 = vadd.f32 0.0, %v2573
        %2575 = vmatmul.f32.gmra.mxu0 %v2449
        %v2576 = vpop.f32.mrf.mxu0
        %v2577 = vadd.f32 0.0, %v2576
        %2578 = vdwg.mxu0
        %2579 = vmatpush.msra.mxu0 %v2417
        %2580 = vmatpush.msra.mxu0 %v2416
        %2581 = vmatpush.msra.mxu0 %v2415
        %2582 = vmatpush.msra.mxu0 %v2414
        %2583 = vmatpush.msra.mxu0 %v2413
        %2584 = vmatpush.msra.mxu0 %v2412
        %2585 = vmatpush.msra.mxu0 %v2411
        %2586 = vmatpush.msra.mxu0 %v2410
        %2587 = vmatpush.msra.mxu0 %v2409
        %2588 = vmatpush.msra.mxu0 %v2408
        %2589 = vmatpush.msra.mxu0 %v2407
        %2590 = vmatpush.msra.mxu0 %v2406
        %2591 = vmatpush.msra.mxu0 %v2405
        %2592 = vmatpush.msra.mxu0 %v2404
        %2593 = vmatpush.msra.mxu0 %v2403
        %2594 = vmatpush.msra.mxu0 %v2402
        %2595 = vmatmul.f32.gmra.mxu0 %v2370
        %v2596 = vpop.f32.mrf.mxu0
        %v2597 = vadd.f32 %v2484, %v2596
        %2598 = vmatmul.f32.gmra.mxu0 %v2371
        %v2599 = vpop.f32.mrf.mxu0
        %v2600 = vadd.f32 %v2487, %v2599
        %2601 = vmatmul.f32.gmra.mxu0 %v2372
        %v2602 = vpop.f32.mrf.mxu0
        %v2603 = vadd.f32 %v2490, %v2602
        %2604 = vmatmul.f32.gmra.mxu0 %v2373
        %v2605 = vpop.f32.mrf.mxu0
        %v2606 = vadd.f32 %v2493, %v2605
        %2607 = vmatmul.f32.gmra.mxu0 %v2374
        %v2608 = vpop.f32.mrf.mxu0
        %v2609 = vadd.f32 %v2496, %v2608
        %2610 = vmatmul.f32.gmra.mxu0 %v2375
        %v2611 = vpop.f32.mrf.mxu0
        %v2612 = vadd.f32 %v2499, %v2611
        %2613 = vmatmul.f32.gmra.mxu0 %v2376
        %v2614 = vpop.f32.mrf.mxu0
        %v2615 = vadd.f32 %v2502, %v2614
        %2616 = vmatmul.f32.gmra.mxu0 %v2377
        %v2617 = vpop.f32.mrf.mxu0
        %v2618 = vadd.f32 %v2505, %v2617
        %2619 = vmatmul.f32.gmra.mxu0 %v2378
        %v2620 = vpop.f32.mrf.mxu0
        %v2621 = vadd.f32 %v2508, %v2620
        %2622 = vmatmul.f32.gmra.mxu0 %v2379
        %v2623 = vpop.f32.mrf.mxu0
        %v2624 = vadd.f32 %v2511, %v2623
        %2625 = vmatmul.f32.gmra.mxu0 %v2380
        %v2626 = vpop.f32.mrf.mxu0
        %v2627 = vadd.f32 %v2514, %v2626
        %2628 = vmatmul.f32.gmra.mxu0 %v2381
        %v2629 = vpop.f32.mrf.mxu0
        %v2630 = vadd.f32 %v2517, %v2629
        %2631 = vmatmul.f32.gmra.mxu0 %v2382
        %v2632 = vpop.f32.mrf.mxu0
        %v2633 = vadd.f32 %v2520, %v2632
        %2634 = vmatmul.f32.gmra.mxu0 %v2383
        %v2635 = vpop.f32.mrf.mxu0
        %v2636 = vadd.f32 %v2523, %v2635
        %2637 = vmatmul.f32.gmra.mxu0 %v2384
        %v2638 = vpop.f32.mrf.mxu0
        %v2639 = vadd.f32 %v2526, %v2638
        %2640 = vmatmul.f32.gmra.mxu0 %v2385
        %v2641 = vpop.f32.mrf.mxu0
        %v2642 = vadd.f32 %v2529, %v2641
        %2643 = vmatmul.f32.gmra.mxu0 %v2386
        %v2644 = vpop.f32.mrf.mxu0
        %v2645 = vadd.f32 %v2532, %v2644
        %2646 = vmatmul.f32.gmra.mxu0 %v2387
        %v2647 = vpop.f32.mrf.mxu0
        %v2648 = vadd.f32 %v2535, %v2647
        %2649 = vmatmul.f32.gmra.mxu0 %v2388
        %v2650 = vpop.f32.mrf.mxu0
        %v2651 = vadd.f32 %v2538, %v2650
        %2652 = vmatmul.f32.gmra.mxu0 %v2389
        %v2653 = vpop.f32.mrf.mxu0
        %v2654 = vadd.f32 %v2541, %v2653
        %2655 = vmatmul.f32.gmra.mxu0 %v2390
        %v2656 = vpop.f32.mrf.mxu0
        %v2657 = vadd.f32 %v2544, %v2656
        %2658 = vmatmul.f32.gmra.mxu0 %v2391
        %v2659 = vpop.f32.mrf.mxu0
        %v2660 = vadd.f32 %v2547, %v2659
        %2661 = vmatmul.f32.gmra.mxu0 %v2392
        %v2662 = vpop.f32.mrf.mxu0
        %v2663 = vadd.f32 %v2550, %v2662
        %2664 = vmatmul.f32.gmra.mxu0 %v2393
        %v2665 = vpop.f32.mrf.mxu0
        %v2666 = vadd.f32 %v2553, %v2665
        %2667 = vmatmul.f32.gmra.mxu0 %v2394
        %v2668 = vpop.f32.mrf.mxu0
        %v2669 = vadd.f32 %v2556, %v2668
        %2670 = vmatmul.f32.gmra.mxu0 %v2395
        %v2671 = vpop.f32.mrf.mxu0
        %v2672 = vadd.f32 %v2559, %v2671
        %2673 = vmatmul.f32.gmra.mxu0 %v2396
        %v2674 = vpop.f32.mrf.mxu0
        %v2675 = vadd.f32 %v2562, %v2674
        %2676 = vmatmul.f32.gmra.mxu0 %v2397
        %v2677 = vpop.f32.mrf.mxu0
        %v2678 = vadd.f32 %v2565, %v2677
        %2679 = vmatmul.f32.gmra.mxu0 %v2398
        %v2680 = vpop.f32.mrf.mxu0
        %v2681 = vadd.f32 %v2568, %v2680
        %2682 = vmatmul.f32.gmra.mxu0 %v2399
        %v2683 = vpop.f32.mrf.mxu0
        %v2684 = vadd.f32 %v2571, %v2683
        %2685 = vmatmul.f32.gmra.mxu0 %v2400
        %v2686 = vpop.f32.mrf.mxu0
        %v2687 = vadd.f32 %v2574, %v2686
        %2688 = vmatmul.f32.gmra.mxu0 %v2401
        %v2689 = vpop.f32.mrf.mxu0
        %v2690 = vadd.f32 %v2577, %v2689
        %2691 = vdwg.mxu0
        %v2692 = vld [vmem:[#allocation2 + $0x2] sm:$0xff]
        %v2693 = vld [vmem:[#allocation2 + $0xa] sm:$0xff]
        %v2694 = vld [vmem:[#allocation2 + $0x1a] sm:$0xff]
        %v2695 = vld [vmem:[#allocation2 + $0x22] sm:$0xff]
        %v2696 = vld [vmem:[#allocation2 + $0x32] sm:$0xff]
        %v2697 = vld [vmem:[#allocation2 + $0x3a] sm:$0xff]
        %v2698 = vld [vmem:[#allocation2 + $0x4a] sm:$0xff]
        %v2699 = vld [vmem:[#allocation2 + $0x52] sm:$0xff]
        %v2700 = vld [vmem:[#allocation2 + $0x62] sm:$0xff]
        %v2701 = vld [vmem:[#allocation2 + $0x6a] sm:$0xff]
        %v2702 = vld [vmem:[#allocation2 + $0x7a] sm:$0xff]
        %v2703 = vld [vmem:[#allocation2 + $0x82] sm:$0xff]
        %v2704 = vld [vmem:[#allocation2 + $0x92] sm:$0xff]
        %v2705 = vld [vmem:[#allocation2 + $0x9a] sm:$0xff]
        %v2706 = vld [vmem:[#allocation2 + $0xaa] sm:$0xff]
        %v2707 = vld [vmem:[#allocation2 + $0xb2] sm:$0xff]
        %v2708 = vld [vmem:[#allocation2 + $0xc2] sm:$0xff]
        %v2709 = vld [vmem:[#allocation2 + $0xca] sm:$0xff]
        %v2710 = vld [vmem:[#allocation2 + $0xda] sm:$0xff]
        %v2711 = vld [vmem:[#allocation2 + $0xe2] sm:$0xff]
        %v2712 = vld [vmem:[#allocation2 + $0xf2] sm:$0xff]
        %v2713 = vld [vmem:[#allocation2 + $0xfa] sm:$0xff]
        %v2714 = vld [vmem:[#allocation2 + $0x10a] sm:$0xff]
        %v2715 = vld [vmem:[#allocation2 + $0x112] sm:$0xff]
        %v2716 = vld [vmem:[#allocation2 + $0x122] sm:$0xff]
        %v2717 = vld [vmem:[#allocation2 + $0x12a] sm:$0xff]
        %v2718 = vld [vmem:[#allocation2 + $0x13a] sm:$0xff]
        %v2719 = vld [vmem:[#allocation2 + $0x142] sm:$0xff]
        %v2720 = vld [vmem:[#allocation2 + $0x152] sm:$0xff]
        %v2721 = vld [vmem:[#allocation2 + $0x15a] sm:$0xff]
        %v2722 = vld [vmem:[#allocation2 + $0x16a] sm:$0xff]
        %v2723 = vld [vmem:[#allocation2 + $0x172] sm:$0xff]
        %v2724 = vld [vmem:[#allocation8 + $0x100] sm:$0xff]
        %v2725 = vld [vmem:[#allocation8 + $0x108] sm:$0xff]
        %v2726 = vld [vmem:[#allocation8 + $0x110] sm:$0xff]
        %v2727 = vld [vmem:[#allocation8 + $0x118] sm:$0xff]
        %v2728 = vld [vmem:[#allocation8 + $0x120] sm:$0xff]
        %v2729 = vld [vmem:[#allocation8 + $0x128] sm:$0xff]
        %v2730 = vld [vmem:[#allocation8 + $0x130] sm:$0xff]
        %v2731 = vld [vmem:[#allocation8 + $0x138] sm:$0xff]
        %v2732 = vld [vmem:[#allocation8 + $0x140] sm:$0xff]
        %v2733 = vld [vmem:[#allocation8 + $0x148] sm:$0xff]
        %v2734 = vld [vmem:[#allocation8 + $0x150] sm:$0xff]
        %v2735 = vld [vmem:[#allocation8 + $0x158] sm:$0xff]
        %v2736 = vld [vmem:[#allocation8 + $0x160] sm:$0xff]
        %v2737 = vld [vmem:[#allocation8 + $0x168] sm:$0xff]
        %v2738 = vld [vmem:[#allocation8 + $0x170] sm:$0xff]
        %v2739 = vld [vmem:[#allocation8 + $0x178] sm:$0xff]
        %2740 = vmatpush.msra.mxu0 %v2739
        %2741 = vmatpush.msra.mxu0 %v2738
        %2742 = vmatpush.msra.mxu0 %v2737
        %2743 = vmatpush.msra.mxu0 %v2736
        %2744 = vmatpush.msra.mxu0 %v2735
        %2745 = vmatpush.msra.mxu0 %v2734
        %2746 = vmatpush.msra.mxu0 %v2733
        %2747 = vmatpush.msra.mxu0 %v2732
        %2748 = vmatpush.msra.mxu0 %v2731
        %2749 = vmatpush.msra.mxu0 %v2730
        %2750 = vmatpush.msra.mxu0 %v2729
        %2751 = vmatpush.msra.mxu0 %v2728
        %2752 = vmatpush.msra.mxu0 %v2727
        %2753 = vmatpush.msra.mxu0 %v2726
        %2754 = vmatpush.msra.mxu0 %v2725
        %2755 = vmatpush.msra.mxu0 %v2724
        %2756 = vmatmul.f32.gmra.mxu0 %v2692
        %v2757 = vpop.f32.mrf.mxu0
        %v2758 = vadd.f32 0.0, %v2757
        %2759 = vmatmul.f32.gmra.mxu0 %v2693
        %v2760 = vpop.f32.mrf.mxu0
        %v2761 = vadd.f32 0.0, %v2760
        %2762 = vmatmul.f32.gmra.mxu0 %v2694
        %v2763 = vpop.f32.mrf.mxu0
        %v2764 = vadd.f32 0.0, %v2763
        %2765 = vmatmul.f32.gmra.mxu0 %v2695
        %v2766 = vpop.f32.mrf.mxu0
        %v2767 = vadd.f32 0.0, %v2766
        %2768 = vmatmul.f32.gmra.mxu0 %v2696
        %v2769 = vpop.f32.mrf.mxu0
        %v2770 = vadd.f32 0.0, %v2769
        %2771 = vmatmul.f32.gmra.mxu0 %v2697
        %v2772 = vpop.f32.mrf.mxu0
        %v2773 = vadd.f32 0.0, %v2772
        %2774 = vmatmul.f32.gmra.mxu0 %v2698
        %v2775 = vpop.f32.mrf.mxu0
        %v2776 = vadd.f32 0.0, %v2775
        %2777 = vmatmul.f32.gmra.mxu0 %v2699
        %v2778 = vpop.f32.mrf.mxu0
        %v2779 = vadd.f32 0.0, %v2778
        %2780 = vmatmul.f32.gmra.mxu0 %v2700
        %v2781 = vpop.f32.mrf.mxu0
        %v2782 = vadd.f32 0.0, %v2781
        %2783 = vmatmul.f32.gmra.mxu0 %v2701
        %v2784 = vpop.f32.mrf.mxu0
        %v2785 = vadd.f32 0.0, %v2784
        %2786 = vmatmul.f32.gmra.mxu0 %v2702
        %v2787 = vpop.f32.mrf.mxu0
        %v2788 = vadd.f32 0.0, %v2787
        %2789 = vmatmul.f32.gmra.mxu0 %v2703
        %v2790 = vpop.f32.mrf.mxu0
        %v2791 = vadd.f32 0.0, %v2790
        %2792 = vmatmul.f32.gmra.mxu0 %v2704
        %v2793 = vpop.f32.mrf.mxu0
        %v2794 = vadd.f32 0.0, %v2793
        %2795 = vmatmul.f32.gmra.mxu0 %v2705
        %v2796 = vpop.f32.mrf.mxu0
        %v2797 = vadd.f32 0.0, %v2796
        %2798 = vmatmul.f32.gmra.mxu0 %v2706
        %v2799 = vpop.f32.mrf.mxu0
        %v2800 = vadd.f32 0.0, %v2799
        %2801 = vmatmul.f32.gmra.mxu0 %v2707
        %v2802 = vpop.f32.mrf.mxu0
        %v2803 = vadd.f32 0.0, %v2802
        %2804 = vmatmul.f32.gmra.mxu0 %v2708
        %v2805 = vpop.f32.mrf.mxu0
        %v2806 = vadd.f32 0.0, %v2805
        %2807 = vmatmul.f32.gmra.mxu0 %v2709
        %v2808 = vpop.f32.mrf.mxu0
        %v2809 = vadd.f32 0.0, %v2808
        %2810 = vmatmul.f32.gmra.mxu0 %v2710
        %v2811 = vpop.f32.mrf.mxu0
        %v2812 = vadd.f32 0.0, %v2811
        %2813 = vmatmul.f32.gmra.mxu0 %v2711
        %v2814 = vpop.f32.mrf.mxu0
        %v2815 = vadd.f32 0.0, %v2814
        %2816 = vmatmul.f32.gmra.mxu0 %v2712
        %v2817 = vpop.f32.mrf.mxu0
        %v2818 = vadd.f32 0.0, %v2817
        %2819 = vmatmul.f32.gmra.mxu0 %v2713
        %v2820 = vpop.f32.mrf.mxu0
        %v2821 = vadd.f32 0.0, %v2820
        %2822 = vmatmul.f32.gmra.mxu0 %v2714
        %v2823 = vpop.f32.mrf.mxu0
        %v2824 = vadd.f32 0.0, %v2823
        %2825 = vmatmul.f32.gmra.mxu0 %v2715
        %v2826 = vpop.f32.mrf.mxu0
        %v2827 = vadd.f32 0.0, %v2826
        %2828 = vmatmul.f32.gmra.mxu0 %v2716
        %v2829 = vpop.f32.mrf.mxu0
        %v2830 = vadd.f32 0.0, %v2829
        %2831 = vmatmul.f32.gmra.mxu0 %v2717
        %v2832 = vpop.f32.mrf.mxu0
        %v2833 = vadd.f32 0.0, %v2832
        %2834 = vmatmul.f32.gmra.mxu0 %v2718
        %v2835 = vpop.f32.mrf.mxu0
        %v2836 = vadd.f32 0.0, %v2835
        %2837 = vmatmul.f32.gmra.mxu0 %v2719
        %v2838 = vpop.f32.mrf.mxu0
        %v2839 = vadd.f32 0.0, %v2838
        %2840 = vmatmul.f32.gmra.mxu0 %v2720
        %v2841 = vpop.f32.mrf.mxu0
        %v2842 = vadd.f32 0.0, %v2841
        %2843 = vmatmul.f32.gmra.mxu0 %v2721
        %v2844 = vpop.f32.mrf.mxu0
        %v2845 = vadd.f32 0.0, %v2844
        %2846 = vmatmul.f32.gmra.mxu0 %v2722
        %v2847 = vpop.f32.mrf.mxu0
        %v2848 = vadd.f32 0.0, %v2847
        %2849 = vmatmul.f32.gmra.mxu0 %v2723
        %v2850 = vpop.f32.mrf.mxu0
        %v2851 = vadd.f32 0.0, %v2850
        %2852 = vdwg.mxu0
        %v2853 = vadd.f32 %v2597, %v2758
        %v2854 = vadd.f32 %v2600, %v2761
        %v2855 = vadd.f32 %v2603, %v2764
        %v2856 = vadd.f32 %v2606, %v2767
        %v2857 = vadd.f32 %v2609, %v2770
        %v2858 = vadd.f32 %v2612, %v2773
        %v2859 = vadd.f32 %v2615, %v2776
        %v2860 = vadd.f32 %v2618, %v2779
        %v2861 = vadd.f32 %v2621, %v2782
        %v2862 = vadd.f32 %v2624, %v2785
        %v2863 = vadd.f32 %v2627, %v2788
        %v2864 = vadd.f32 %v2630, %v2791
        %v2865 = vadd.f32 %v2633, %v2794
        %v2866 = vadd.f32 %v2636, %v2797
        %v2867 = vadd.f32 %v2639, %v2800
        %v2868 = vadd.f32 %v2642, %v2803
        %v2869 = vadd.f32 %v2645, %v2806
        %v2870 = vadd.f32 %v2648, %v2809
        %v2871 = vadd.f32 %v2651, %v2812
        %v2872 = vadd.f32 %v2654, %v2815
        %v2873 = vadd.f32 %v2657, %v2818
        %v2874 = vadd.f32 %v2660, %v2821
        %v2875 = vadd.f32 %v2663, %v2824
        %v2876 = vadd.f32 %v2666, %v2827
        %v2877 = vadd.f32 %v2669, %v2830
        %v2878 = vadd.f32 %v2672, %v2833
        %v2879 = vadd.f32 %v2675, %v2836
        %v2880 = vadd.f32 %v2678, %v2839
        %v2881 = vadd.f32 %v2681, %v2842
        %v2882 = vadd.f32 %v2684, %v2845
        %v2883 = vadd.f32 %v2687, %v2848
        %v2884 = vadd.f32 %v2690, %v2851
        %v2885 = vld [vmem:[%s256] sm:$0xff]
        %v2886 = vld [vmem:[%s256 + $0x8] sm:$0xff]
        %v2887 = vld [vmem:[%s256 + $0x18] sm:$0xff]
        %v2888 = vld [vmem:[%s256 + $0x20] sm:$0xff]
        %v2889 = vld [vmem:[%s256 + $0x30] sm:$0xff]
        %v2890 = vld [vmem:[%s256 + $0x38] sm:$0xff]
        %v2891 = vld [vmem:[%s256 + $0x48] sm:$0xff]
        %v2892 = vld [vmem:[%s256 + $0x50] sm:$0xff]
        %v2893 = vld [vmem:[%s256 + $0x60] sm:$0xff]
        %v2894 = vld [vmem:[%s256 + $0x68] sm:$0xff]
        %v2895 = vld [vmem:[%s256 + $0x78] sm:$0xff]
        %v2896 = vld [vmem:[%s256 + $0x80] sm:$0xff]
        %v2897 = vld [vmem:[%s256 + $0x90] sm:$0xff]
        %v2898 = vld [vmem:[%s256 + $0x98] sm:$0xff]
        %v2899 = vld [vmem:[%s256 + $0xa8] sm:$0xff]
        %v2900 = vld [vmem:[%s256 + $0xb0] sm:$0xff]
        %v2901 = vld [vmem:[%s256 + $0xc0] sm:$0xff]
        %v2902 = vld [vmem:[%s256 + $0xc8] sm:$0xff]
        %v2903 = vld [vmem:[%s256 + $0xd8] sm:$0xff]
        %v2904 = vld [vmem:[%s256 + $0xe0] sm:$0xff]
        %v2905 = vld [vmem:[%s256 + $0xf0] sm:$0xff]
        %v2906 = vld [vmem:[%s256 + $0xf8] sm:$0xff]
        %v2907 = vld [vmem:[%s256 + $0x108] sm:$0xff]
        %v2908 = vld [vmem:[%s256 + $0x110] sm:$0xff]
        %v2909 = vld [vmem:[%s256 + $0x120] sm:$0xff]
        %v2910 = vld [vmem:[%s256 + $0x128] sm:$0xff]
        %v2911 = vld [vmem:[%s256 + $0x138] sm:$0xff]
        %v2912 = vld [vmem:[%s256 + $0x140] sm:$0xff]
        %v2913 = vld [vmem:[%s256 + $0x150] sm:$0xff]
        %v2914 = vld [vmem:[%s256 + $0x158] sm:$0xff]
        %v2915 = vld [vmem:[%s256 + $0x168] sm:$0xff]
        %v2916 = vld [vmem:[%s256 + $0x170] sm:$0xff]
        %v2917 = vld [vmem:[#allocation8 + $0x180] sm:$0xff]
        %v2918 = vld [vmem:[#allocation8 + $0x188] sm:$0xff]
        %v2919 = vld [vmem:[#allocation8 + $0x190] sm:$0xff]
        %v2920 = vld [vmem:[#allocation8 + $0x198] sm:$0xff]
        %v2921 = vld [vmem:[#allocation8 + $0x1a0] sm:$0xff]
        %v2922 = vld [vmem:[#allocation8 + $0x1a8] sm:$0xff]
        %v2923 = vld [vmem:[#allocation8 + $0x1b0] sm:$0xff]
        %v2924 = vld [vmem:[#allocation8 + $0x1b8] sm:$0xff]
        %v2925 = vld [vmem:[#allocation8 + $0x1c0] sm:$0xff]
        %v2926 = vld [vmem:[#allocation8 + $0x1c8] sm:$0xff]
        %v2927 = vld [vmem:[#allocation8 + $0x1d0] sm:$0xff]
        %v2928 = vld [vmem:[#allocation8 + $0x1d8] sm:$0xff]
        %v2929 = vld [vmem:[#allocation8 + $0x1e0] sm:$0xff]
        %v2930 = vld [vmem:[#allocation8 + $0x1e8] sm:$0xff]
        %v2931 = vld [vmem:[#allocation8 + $0x1f0] sm:$0xff]
        %v2932 = vld [vmem:[#allocation8 + $0x1f8] sm:$0xff]
        %2933 = vmatpush.msra.mxu0 %v2932
        %2934 = vmatpush.msra.mxu0 %v2931
        %2935 = vmatpush.msra.mxu0 %v2930
        %2936 = vmatpush.msra.mxu0 %v2929
        %2937 = vmatpush.msra.mxu0 %v2928
        %2938 = vmatpush.msra.mxu0 %v2927
        %2939 = vmatpush.msra.mxu0 %v2926
        %2940 = vmatpush.msra.mxu0 %v2925
        %2941 = vmatpush.msra.mxu0 %v2924
        %2942 = vmatpush.msra.mxu0 %v2923
        %2943 = vmatpush.msra.mxu0 %v2922
        %2944 = vmatpush.msra.mxu0 %v2921
        %2945 = vmatpush.msra.mxu0 %v2920
        %2946 = vmatpush.msra.mxu0 %v2919
        %2947 = vmatpush.msra.mxu0 %v2918
        %2948 = vmatpush.msra.mxu0 %v2917
        %2949 = vmatmul.f32.gmra.mxu0 %v2885
        %v2950 = vpop.f32.mrf.mxu0
        %v2951 = vadd.f32 0.0, %v2950
        %2952 = vmatmul.f32.gmra.mxu0 %v2886
        %v2953 = vpop.f32.mrf.mxu0
        %v2954 = vadd.f32 0.0, %v2953
        %2955 = vmatmul.f32.gmra.mxu0 %v2887
        %v2956 = vpop.f32.mrf.mxu0
        %v2957 = vadd.f32 0.0, %v2956
        %2958 = vmatmul.f32.gmra.mxu0 %v2888
        %v2959 = vpop.f32.mrf.mxu0
        %v2960 = vadd.f32 0.0, %v2959
        %2961 = vmatmul.f32.gmra.mxu0 %v2889
        %v2962 = vpop.f32.mrf.mxu0
        %v2963 = vadd.f32 0.0, %v2962
        %2964 = vmatmul.f32.gmra.mxu0 %v2890
        %v2965 = vpop.f32.mrf.mxu0
        %v2966 = vadd.f32 0.0, %v2965
        %2967 = vmatmul.f32.gmra.mxu0 %v2891
        %v2968 = vpop.f32.mrf.mxu0
        %v2969 = vadd.f32 0.0, %v2968
        %2970 = vmatmul.f32.gmra.mxu0 %v2892
        %v2971 = vpop.f32.mrf.mxu0
        %v2972 = vadd.f32 0.0, %v2971
        %2973 = vmatmul.f32.gmra.mxu0 %v2893
        %v2974 = vpop.f32.mrf.mxu0
        %v2975 = vadd.f32 0.0, %v2974
        %2976 = vmatmul.f32.gmra.mxu0 %v2894
        %v2977 = vpop.f32.mrf.mxu0
        %v2978 = vadd.f32 0.0, %v2977
        %2979 = vmatmul.f32.gmra.mxu0 %v2895
        %v2980 = vpop.f32.mrf.mxu0
        %v2981 = vadd.f32 0.0, %v2980
        %2982 = vmatmul.f32.gmra.mxu0 %v2896
        %v2983 = vpop.f32.mrf.mxu0
        %v2984 = vadd.f32 0.0, %v2983
        %2985 = vmatmul.f32.gmra.mxu0 %v2897
        %v2986 = vpop.f32.mrf.mxu0
        %v2987 = vadd.f32 0.0, %v2986
        %2988 = vmatmul.f32.gmra.mxu0 %v2898
        %v2989 = vpop.f32.mrf.mxu0
        %v2990 = vadd.f32 0.0, %v2989
        %2991 = vmatmul.f32.gmra.mxu0 %v2899
        %v2992 = vpop.f32.mrf.mxu0
        %v2993 = vadd.f32 0.0, %v2992
        %2994 = vmatmul.f32.gmra.mxu0 %v2900
        %v2995 = vpop.f32.mrf.mxu0
        %v2996 = vadd.f32 0.0, %v2995
        %2997 = vmatmul.f32.gmra.mxu0 %v2901
        %v2998 = vpop.f32.mrf.mxu0
        %v2999 = vadd.f32 0.0, %v2998
        %3000 = vmatmul.f32.gmra.mxu0 %v2902
        %v3001 = vpop.f32.mrf.mxu0
        %v3002 = vadd.f32 0.0, %v3001
        %3003 = vmatmul.f32.gmra.mxu0 %v2903
        %v3004 = vpop.f32.mrf.mxu0
        %v3005 = vadd.f32 0.0, %v3004
        %3006 = vmatmul.f32.gmra.mxu0 %v2904
        %v3007 = vpop.f32.mrf.mxu0
        %v3008 = vadd.f32 0.0, %v3007
        %3009 = vmatmul.f32.gmra.mxu0 %v2905
        %v3010 = vpop.f32.mrf.mxu0
        %v3011 = vadd.f32 0.0, %v3010
        %3012 = vmatmul.f32.gmra.mxu0 %v2906
        %v3013 = vpop.f32.mrf.mxu0
        %v3014 = vadd.f32 0.0, %v3013
        %3015 = vmatmul.f32.gmra.mxu0 %v2907
        %v3016 = vpop.f32.mrf.mxu0
        %v3017 = vadd.f32 0.0, %v3016
        %3018 = vmatmul.f32.gmra.mxu0 %v2908
        %v3019 = vpop.f32.mrf.mxu0
        %v3020 = vadd.f32 0.0, %v3019
        %3021 = vmatmul.f32.gmra.mxu0 %v2909
        %v3022 = vpop.f32.mrf.mxu0
        %v3023 = vadd.f32 0.0, %v3022
        %3024 = vmatmul.f32.gmra.mxu0 %v2910
        %v3025 = vpop.f32.mrf.mxu0
        %v3026 = vadd.f32 0.0, %v3025
        %3027 = vmatmul.f32.gmra.mxu0 %v2911
        %v3028 = vpop.f32.mrf.mxu0
        %v3029 = vadd.f32 0.0, %v3028
        %3030 = vmatmul.f32.gmra.mxu0 %v2912
        %v3031 = vpop.f32.mrf.mxu0
        %v3032 = vadd.f32 0.0, %v3031
        %3033 = vmatmul.f32.gmra.mxu0 %v2913
        %v3034 = vpop.f32.mrf.mxu0
        %v3035 = vadd.f32 0.0, %v3034
        %3036 = vmatmul.f32.gmra.mxu0 %v2914
        %v3037 = vpop.f32.mrf.mxu0
        %v3038 = vadd.f32 0.0, %v3037
        %3039 = vmatmul.f32.gmra.mxu0 %v2915
        %v3040 = vpop.f32.mrf.mxu0
        %v3041 = vadd.f32 0.0, %v3040
        %3042 = vmatmul.f32.gmra.mxu0 %v2916
        %v3043 = vpop.f32.mrf.mxu0
        %v3044 = vadd.f32 0.0, %v3043
        %3045 = vdwg.mxu0
        %v3046 = vadd.f32 %v2853, %v2951
        %v3047 = vadd.f32 %v2854, %v2954
        %v3048 = vadd.f32 %v2855, %v2957
        %v3049 = vadd.f32 %v2856, %v2960
        %v3050 = vadd.f32 %v2857, %v2963
        %v3051 = vadd.f32 %v2858, %v2966
        %v3052 = vadd.f32 %v2859, %v2969
        %v3053 = vadd.f32 %v2860, %v2972
        %v3054 = vadd.f32 %v2861, %v2975
        %v3055 = vadd.f32 %v2862, %v2978
        %v3056 = vadd.f32 %v2863, %v2981
        %v3057 = vadd.f32 %v2864, %v2984
        %v3058 = vadd.f32 %v2865, %v2987
        %v3059 = vadd.f32 %v2866, %v2990
        %v3060 = vadd.f32 %v2867, %v2993
        %v3061 = vadd.f32 %v2868, %v2996
        %v3062 = vadd.f32 %v2869, %v2999
        %v3063 = vadd.f32 %v2870, %v3002
        %v3064 = vadd.f32 %v2871, %v3005
        %v3065 = vadd.f32 %v2872, %v3008
        %v3066 = vadd.f32 %v2873, %v3011
        %v3067 = vadd.f32 %v2874, %v3014
        %v3068 = vadd.f32 %v2875, %v3017
        %v3069 = vadd.f32 %v2876, %v3020
        %v3070 = vadd.f32 %v2877, %v3023
        %v3071 = vadd.f32 %v2878, %v3026
        %v3072 = vadd.f32 %v2879, %v3029
        %v3073 = vadd.f32 %v2880, %v3032
        %v3074 = vadd.f32 %v2881, %v3035
        %v3075 = vadd.f32 %v2882, %v3038
        %v3076 = vadd.f32 %v2883, %v3041
        %v3077 = vadd.f32 %v2884, %v3044
        %v3078 = vld [vmem:[%s256 + $0x1] sm:$0xff]
        %v3079 = vld [vmem:[%s256 + $0x9] sm:$0xff]
        %v3080 = vld [vmem:[%s256 + $0x19] sm:$0xff]
        %v3081 = vld [vmem:[%s256 + $0x21] sm:$0xff]
        %v3082 = vld [vmem:[%s256 + $0x31] sm:$0xff]
        %v3083 = vld [vmem:[%s256 + $0x39] sm:$0xff]
        %v3084 = vld [vmem:[%s256 + $0x49] sm:$0xff]
        %v3085 = vld [vmem:[%s256 + $0x51] sm:$0xff]
        %v3086 = vld [vmem:[%s256 + $0x61] sm:$0xff]
        %v3087 = vld [vmem:[%s256 + $0x69] sm:$0xff]
        %v3088 = vld [vmem:[%s256 + $0x79] sm:$0xff]
        %v3089 = vld [vmem:[%s256 + $0x81] sm:$0xff]
        %v3090 = vld [vmem:[%s256 + $0x91] sm:$0xff]
        %v3091 = vld [vmem:[%s256 + $0x99] sm:$0xff]
        %v3092 = vld [vmem:[%s256 + $0xa9] sm:$0xff]
        %v3093 = vld [vmem:[%s256 + $0xb1] sm:$0xff]
        %v3094 = vld [vmem:[%s256 + $0xc1] sm:$0xff]
        %v3095 = vld [vmem:[%s256 + $0xc9] sm:$0xff]
        %v3096 = vld [vmem:[%s256 + $0xd9] sm:$0xff]
        %v3097 = vld [vmem:[%s256 + $0xe1] sm:$0xff]
        %v3098 = vld [vmem:[%s256 + $0xf1] sm:$0xff]
        %v3099 = vld [vmem:[%s256 + $0xf9] sm:$0xff]
        %v3100 = vld [vmem:[%s256 + $0x109] sm:$0xff]
        %v3101 = vld [vmem:[%s256 + $0x111] sm:$0xff]
        %v3102 = vld [vmem:[%s256 + $0x121] sm:$0xff]
        %v3103 = vld [vmem:[%s256 + $0x129] sm:$0xff]
        %v3104 = vld [vmem:[%s256 + $0x139] sm:$0xff]
        %v3105 = vld [vmem:[%s256 + $0x141] sm:$0xff]
        %v3106 = vld [vmem:[%s256 + $0x151] sm:$0xff]
        %v3107 = vld [vmem:[%s256 + $0x159] sm:$0xff]
        %v3108 = vld [vmem:[%s256 + $0x169] sm:$0xff]
        %v3109 = vld [vmem:[%s256 + $0x171] sm:$0xff]
        %v3110 = vld [vmem:[#allocation8 + $0x200] sm:$0xff]
        %v3111 = vld [vmem:[#allocation8 + $0x208] sm:$0xff]
        %v3112 = vld [vmem:[#allocation8 + $0x210] sm:$0xff]
        %v3113 = vld [vmem:[#allocation8 + $0x218] sm:$0xff]
        %v3114 = vld [vmem:[#allocation8 + $0x220] sm:$0xff]
        %v3115 = vld [vmem:[#allocation8 + $0x228] sm:$0xff]
        %v3116 = vld [vmem:[#allocation8 + $0x230] sm:$0xff]
        %v3117 = vld [vmem:[#allocation8 + $0x238] sm:$0xff]
        %v3118 = vld [vmem:[#allocation8 + $0x240] sm:$0xff]
        %v3119 = vld [vmem:[#allocation8 + $0x248] sm:$0xff]
        %v3120 = vld [vmem:[#allocation8 + $0x250] sm:$0xff]
        %v3121 = vld [vmem:[#allocation8 + $0x258] sm:$0xff]
        %v3122 = vld [vmem:[#allocation8 + $0x260] sm:$0xff]
        %v3123 = vld [vmem:[#allocation8 + $0x268] sm:$0xff]
        %v3124 = vld [vmem:[#allocation8 + $0x270] sm:$0xff]
        %v3125 = vld [vmem:[#allocation8 + $0x278] sm:$0xff]
        %3126 = vmatpush.msra.mxu0 %v3125
        %3127 = vmatpush.msra.mxu0 %v3124
        %3128 = vmatpush.msra.mxu0 %v3123
        %3129 = vmatpush.msra.mxu0 %v3122
        %3130 = vmatpush.msra.mxu0 %v3121
        %3131 = vmatpush.msra.mxu0 %v3120
        %3132 = vmatpush.msra.mxu0 %v3119
        %3133 = vmatpush.msra.mxu0 %v3118
        %3134 = vmatpush.msra.mxu0 %v3117
        %3135 = vmatpush.msra.mxu0 %v3116
        %3136 = vmatpush.msra.mxu0 %v3115
        %3137 = vmatpush.msra.mxu0 %v3114
        %3138 = vmatpush.msra.mxu0 %v3113
        %3139 = vmatpush.msra.mxu0 %v3112
        %3140 = vmatpush.msra.mxu0 %v3111
        %3141 = vmatpush.msra.mxu0 %v3110
        %3142 = vmatmul.f32.gmra.mxu0 %v3078
        %v3143 = vpop.f32.mrf.mxu0
        %v3144 = vadd.f32 0.0, %v3143
        %3145 = vmatmul.f32.gmra.mxu0 %v3079
        %v3146 = vpop.f32.mrf.mxu0
        %v3147 = vadd.f32 0.0, %v3146
        %3148 = vmatmul.f32.gmra.mxu0 %v3080
        %v3149 = vpop.f32.mrf.mxu0
        %v3150 = vadd.f32 0.0, %v3149
        %3151 = vmatmul.f32.gmra.mxu0 %v3081
        %v3152 = vpop.f32.mrf.mxu0
        %v3153 = vadd.f32 0.0, %v3152
        %3154 = vmatmul.f32.gmra.mxu0 %v3082
        %v3155 = vpop.f32.mrf.mxu0
        %v3156 = vadd.f32 0.0, %v3155
        %3157 = vmatmul.f32.gmra.mxu0 %v3083
        %v3158 = vpop.f32.mrf.mxu0
        %v3159 = vadd.f32 0.0, %v3158
        %3160 = vmatmul.f32.gmra.mxu0 %v3084
        %v3161 = vpop.f32.mrf.mxu0
        %v3162 = vadd.f32 0.0, %v3161
        %3163 = vmatmul.f32.gmra.mxu0 %v3085
        %v3164 = vpop.f32.mrf.mxu0
        %v3165 = vadd.f32 0.0, %v3164
        %3166 = vmatmul.f32.gmra.mxu0 %v3086
        %v3167 = vpop.f32.mrf.mxu0
        %v3168 = vadd.f32 0.0, %v3167
        %3169 = vmatmul.f32.gmra.mxu0 %v3087
        %v3170 = vpop.f32.mrf.mxu0
        %v3171 = vadd.f32 0.0, %v3170
        %3172 = vmatmul.f32.gmra.mxu0 %v3088
        %v3173 = vpop.f32.mrf.mxu0
        %v3174 = vadd.f32 0.0, %v3173
        %3175 = vmatmul.f32.gmra.mxu0 %v3089
        %v3176 = vpop.f32.mrf.mxu0
        %v3177 = vadd.f32 0.0, %v3176
        %3178 = vmatmul.f32.gmra.mxu0 %v3090
        %v3179 = vpop.f32.mrf.mxu0
        %v3180 = vadd.f32 0.0, %v3179
        %3181 = vmatmul.f32.gmra.mxu0 %v3091
        %v3182 = vpop.f32.mrf.mxu0
        %v3183 = vadd.f32 0.0, %v3182
        %3184 = vmatmul.f32.gmra.mxu0 %v3092
        %v3185 = vpop.f32.mrf.mxu0
        %v3186 = vadd.f32 0.0, %v3185
        %3187 = vmatmul.f32.gmra.mxu0 %v3093
        %v3188 = vpop.f32.mrf.mxu0
        %v3189 = vadd.f32 0.0, %v3188
        %3190 = vmatmul.f32.gmra.mxu0 %v3094
        %v3191 = vpop.f32.mrf.mxu0
        %v3192 = vadd.f32 0.0, %v3191
        %3193 = vmatmul.f32.gmra.mxu0 %v3095
        %v3194 = vpop.f32.mrf.mxu0
        %v3195 = vadd.f32 0.0, %v3194
        %3196 = vmatmul.f32.gmra.mxu0 %v3096
        %v3197 = vpop.f32.mrf.mxu0
        %v3198 = vadd.f32 0.0, %v3197
        %3199 = vmatmul.f32.gmra.mxu0 %v3097
        %v3200 = vpop.f32.mrf.mxu0
        %v3201 = vadd.f32 0.0, %v3200
        %3202 = vmatmul.f32.gmra.mxu0 %v3098
        %v3203 = vpop.f32.mrf.mxu0
        %v3204 = vadd.f32 0.0, %v3203
        %3205 = vmatmul.f32.gmra.mxu0 %v3099
        %v3206 = vpop.f32.mrf.mxu0
        %v3207 = vadd.f32 0.0, %v3206
        %3208 = vmatmul.f32.gmra.mxu0 %v3100
        %v3209 = vpop.f32.mrf.mxu0
        %v3210 = vadd.f32 0.0, %v3209
        %3211 = vmatmul.f32.gmra.mxu0 %v3101
        %v3212 = vpop.f32.mrf.mxu0
        %v3213 = vadd.f32 0.0, %v3212
        %3214 = vmatmul.f32.gmra.mxu0 %v3102
        %v3215 = vpop.f32.mrf.mxu0
        %v3216 = vadd.f32 0.0, %v3215
        %3217 = vmatmul.f32.gmra.mxu0 %v3103
        %v3218 = vpop.f32.mrf.mxu0
        %v3219 = vadd.f32 0.0, %v3218
        %3220 = vmatmul.f32.gmra.mxu0 %v3104
        %v3221 = vpop.f32.mrf.mxu0
        %v3222 = vadd.f32 0.0, %v3221
        %3223 = vmatmul.f32.gmra.mxu0 %v3105
        %v3224 = vpop.f32.mrf.mxu0
        %v3225 = vadd.f32 0.0, %v3224
        %3226 = vmatmul.f32.gmra.mxu0 %v3106
        %v3227 = vpop.f32.mrf.mxu0
        %v3228 = vadd.f32 0.0, %v3227
        %3229 = vmatmul.f32.gmra.mxu0 %v3107
        %v3230 = vpop.f32.mrf.mxu0
        %v3231 = vadd.f32 0.0, %v3230
        %3232 = vmatmul.f32.gmra.mxu0 %v3108
        %v3233 = vpop.f32.mrf.mxu0
        %v3234 = vadd.f32 0.0, %v3233
        %3235 = vmatmul.f32.gmra.mxu0 %v3109
        %v3236 = vpop.f32.mrf.mxu0
        %v3237 = vadd.f32 0.0, %v3236
        %3238 = vdwg.mxu0
        %v3239 = vadd.f32 %v3046, %v3144
        %v3240 = vadd.f32 %v3047, %v3147
        %v3241 = vadd.f32 %v3048, %v3150
        %v3242 = vadd.f32 %v3049, %v3153
        %v3243 = vadd.f32 %v3050, %v3156
        %v3244 = vadd.f32 %v3051, %v3159
        %v3245 = vadd.f32 %v3052, %v3162
        %v3246 = vadd.f32 %v3053, %v3165
        %v3247 = vadd.f32 %v3054, %v3168
        %v3248 = vadd.f32 %v3055, %v3171
        %v3249 = vadd.f32 %v3056, %v3174
        %v3250 = vadd.f32 %v3057, %v3177
        %v3251 = vadd.f32 %v3058, %v3180
        %v3252 = vadd.f32 %v3059, %v3183
        %v3253 = vadd.f32 %v3060, %v3186
        %v3254 = vadd.f32 %v3061, %v3189
        %v3255 = vadd.f32 %v3062, %v3192
        %v3256 = vadd.f32 %v3063, %v3195
        %v3257 = vadd.f32 %v3064, %v3198
        %v3258 = vadd.f32 %v3065, %v3201
        %v3259 = vadd.f32 %v3066, %v3204
        %v3260 = vadd.f32 %v3067, %v3207
        %v3261 = vadd.f32 %v3068, %v3210
        %v3262 = vadd.f32 %v3069, %v3213
        %v3263 = vadd.f32 %v3070, %v3216
        %v3264 = vadd.f32 %v3071, %v3219
        %v3265 = vadd.f32 %v3072, %v3222
        %v3266 = vadd.f32 %v3073, %v3225
        %v3267 = vadd.f32 %v3074, %v3228
        %v3268 = vadd.f32 %v3075, %v3231
        %v3269 = vadd.f32 %v3076, %v3234
        %v3270 = vadd.f32 %v3077, %v3237
        %v3271 = vld [vmem:[%s256 + $0x2] sm:$0xff]
        %v3272 = vld [vmem:[%s256 + $0xa] sm:$0xff]
        %v3273 = vld [vmem:[%s256 + $0x1a] sm:$0xff]
        %v3274 = vld [vmem:[%s256 + $0x22] sm:$0xff]
        %v3275 = vld [vmem:[%s256 + $0x32] sm:$0xff]
        %v3276 = vld [vmem:[%s256 + $0x3a] sm:$0xff]
        %v3277 = vld [vmem:[%s256 + $0x4a] sm:$0xff]
        %v3278 = vld [vmem:[%s256 + $0x52] sm:$0xff]
        %v3279 = vld [vmem:[%s256 + $0x62] sm:$0xff]
        %v3280 = vld [vmem:[%s256 + $0x6a] sm:$0xff]
        %v3281 = vld [vmem:[%s256 + $0x7a] sm:$0xff]
        %v3282 = vld [vmem:[%s256 + $0x82] sm:$0xff]
        %v3283 = vld [vmem:[%s256 + $0x92] sm:$0xff]
        %v3284 = vld [vmem:[%s256 + $0x9a] sm:$0xff]
        %v3285 = vld [vmem:[%s256 + $0xaa] sm:$0xff]
        %v3286 = vld [vmem:[%s256 + $0xb2] sm:$0xff]
        %v3287 = vld [vmem:[%s256 + $0xc2] sm:$0xff]
        %v3288 = vld [vmem:[%s256 + $0xca] sm:$0xff]
        %v3289 = vld [vmem:[%s256 + $0xda] sm:$0xff]
        %v3290 = vld [vmem:[%s256 + $0xe2] sm:$0xff]
        %v3291 = vld [vmem:[%s256 + $0xf2] sm:$0xff]
        %v3292 = vld [vmem:[%s256 + $0xfa] sm:$0xff]
        %v3293 = vld [vmem:[%s256 + $0x10a] sm:$0xff]
        %v3294 = vld [vmem:[%s256 + $0x112] sm:$0xff]
        %v3295 = vld [vmem:[%s256 + $0x122] sm:$0xff]
        %v3296 = vld [vmem:[%s256 + $0x12a] sm:$0xff]
        %v3297 = vld [vmem:[%s256 + $0x13a] sm:$0xff]
        %v3298 = vld [vmem:[%s256 + $0x142] sm:$0xff]
        %v3299 = vld [vmem:[%s256 + $0x152] sm:$0xff]
        %v3300 = vld [vmem:[%s256 + $0x15a] sm:$0xff]
        %v3301 = vld [vmem:[%s256 + $0x16a] sm:$0xff]
        %v3302 = vld [vmem:[%s256 + $0x172] sm:$0xff]
        %v3303 = vld [vmem:[#allocation8 + $0x280] sm:$0xff]
        %v3304 = vld [vmem:[#allocation8 + $0x288] sm:$0xff]
        %v3305 = vld [vmem:[#allocation8 + $0x290] sm:$0xff]
        %v3306 = vld [vmem:[#allocation8 + $0x298] sm:$0xff]
        %v3307 = vld [vmem:[#allocation8 + $0x2a0] sm:$0xff]
        %v3308 = vld [vmem:[#allocation8 + $0x2a8] sm:$0xff]
        %v3309 = vld [vmem:[#allocation8 + $0x2b0] sm:$0xff]
        %v3310 = vld [vmem:[#allocation8 + $0x2b8] sm:$0xff]
        %v3311 = vld [vmem:[#allocation8 + $0x2c0] sm:$0xff]
        %v3312 = vld [vmem:[#allocation8 + $0x2c8] sm:$0xff]
        %v3313 = vld [vmem:[#allocation8 + $0x2d0] sm:$0xff]
        %v3314 = vld [vmem:[#allocation8 + $0x2d8] sm:$0xff]
        %v3315 = vld [vmem:[#allocation8 + $0x2e0] sm:$0xff]
        %v3316 = vld [vmem:[#allocation8 + $0x2e8] sm:$0xff]
        %v3317 = vld [vmem:[#allocation8 + $0x2f0] sm:$0xff]
        %v3318 = vld [vmem:[#allocation8 + $0x2f8] sm:$0xff]
        %3319 = vmatpush.msra.mxu0 %v3318
        %3320 = vmatpush.msra.mxu0 %v3317
        %3321 = vmatpush.msra.mxu0 %v3316
        %3322 = vmatpush.msra.mxu0 %v3315
        %3323 = vmatpush.msra.mxu0 %v3314
        %3324 = vmatpush.msra.mxu0 %v3313
        %3325 = vmatpush.msra.mxu0 %v3312
        %3326 = vmatpush.msra.mxu0 %v3311
        %3327 = vmatpush.msra.mxu0 %v3310
        %3328 = vmatpush.msra.mxu0 %v3309
        %3329 = vmatpush.msra.mxu0 %v3308
        %3330 = vmatpush.msra.mxu0 %v3307
        %3331 = vmatpush.msra.mxu0 %v3306
        %3332 = vmatpush.msra.mxu0 %v3305
        %3333 = vmatpush.msra.mxu0 %v3304
        %3334 = vmatpush.msra.mxu0 %v3303
        %3335 = vmatmul.f32.gmra.mxu0 %v3271
        %v3336 = vpop.f32.mrf.mxu0
        %v3337 = vadd.f32 0.0, %v3336
        %3338 = vmatmul.f32.gmra.mxu0 %v3272
        %v3339 = vpop.f32.mrf.mxu0
        %v3340 = vadd.f32 0.0, %v3339
        %3341 = vmatmul.f32.gmra.mxu0 %v3273
        %v3342 = vpop.f32.mrf.mxu0
        %v3343 = vadd.f32 0.0, %v3342
        %3344 = vmatmul.f32.gmra.mxu0 %v3274
        %v3345 = vpop.f32.mrf.mxu0
        %v3346 = vadd.f32 0.0, %v3345
        %3347 = vmatmul.f32.gmra.mxu0 %v3275
        %v3348 = vpop.f32.mrf.mxu0
        %v3349 = vadd.f32 0.0, %v3348
        %3350 = vmatmul.f32.gmra.mxu0 %v3276
        %v3351 = vpop.f32.mrf.mxu0
        %v3352 = vadd.f32 0.0, %v3351
        %3353 = vmatmul.f32.gmra.mxu0 %v3277
        %v3354 = vpop.f32.mrf.mxu0
        %v3355 = vadd.f32 0.0, %v3354
        %3356 = vmatmul.f32.gmra.mxu0 %v3278
        %v3357 = vpop.f32.mrf.mxu0
        %v3358 = vadd.f32 0.0, %v3357
        %3359 = vmatmul.f32.gmra.mxu0 %v3279
        %v3360 = vpop.f32.mrf.mxu0
        %v3361 = vadd.f32 0.0, %v3360
        %3362 = vmatmul.f32.gmra.mxu0 %v3280
        %v3363 = vpop.f32.mrf.mxu0
        %v3364 = vadd.f32 0.0, %v3363
        %3365 = vmatmul.f32.gmra.mxu0 %v3281
        %v3366 = vpop.f32.mrf.mxu0
        %v3367 = vadd.f32 0.0, %v3366
        %3368 = vmatmul.f32.gmra.mxu0 %v3282
        %v3369 = vpop.f32.mrf.mxu0
        %v3370 = vadd.f32 0.0, %v3369
        %3371 = vmatmul.f32.gmra.mxu0 %v3283
        %v3372 = vpop.f32.mrf.mxu0
        %v3373 = vadd.f32 0.0, %v3372
        %3374 = vmatmul.f32.gmra.mxu0 %v3284
        %v3375 = vpop.f32.mrf.mxu0
        %v3376 = vadd.f32 0.0, %v3375
        %3377 = vmatmul.f32.gmra.mxu0 %v3285
        %v3378 = vpop.f32.mrf.mxu0
        %v3379 = vadd.f32 0.0, %v3378
        %3380 = vmatmul.f32.gmra.mxu0 %v3286
        %v3381 = vpop.f32.mrf.mxu0
        %v3382 = vadd.f32 0.0, %v3381
        %3383 = vmatmul.f32.gmra.mxu0 %v3287
        %v3384 = vpop.f32.mrf.mxu0
        %v3385 = vadd.f32 0.0, %v3384
        %3386 = vmatmul.f32.gmra.mxu0 %v3288
        %v3387 = vpop.f32.mrf.mxu0
        %v3388 = vadd.f32 0.0, %v3387
        %3389 = vmatmul.f32.gmra.mxu0 %v3289
        %v3390 = vpop.f32.mrf.mxu0
        %v3391 = vadd.f32 0.0, %v3390
        %3392 = vmatmul.f32.gmra.mxu0 %v3290
        %v3393 = vpop.f32.mrf.mxu0
        %v3394 = vadd.f32 0.0, %v3393
        %3395 = vmatmul.f32.gmra.mxu0 %v3291
        %v3396 = vpop.f32.mrf.mxu0
        %v3397 = vadd.f32 0.0, %v3396
        %3398 = vmatmul.f32.gmra.mxu0 %v3292
        %v3399 = vpop.f32.mrf.mxu0
        %v3400 = vadd.f32 0.0, %v3399
        %3401 = vmatmul.f32.gmra.mxu0 %v3293
        %v3402 = vpop.f32.mrf.mxu0
        %v3403 = vadd.f32 0.0, %v3402
        %3404 = vmatmul.f32.gmra.mxu0 %v3294
        %v3405 = vpop.f32.mrf.mxu0
        %v3406 = vadd.f32 0.0, %v3405
        %3407 = vmatmul.f32.gmra.mxu0 %v3295
        %v3408 = vpop.f32.mrf.mxu0
        %v3409 = vadd.f32 0.0, %v3408
        %3410 = vmatmul.f32.gmra.mxu0 %v3296
        %v3411 = vpop.f32.mrf.mxu0
        %v3412 = vadd.f32 0.0, %v3411
        %3413 = vmatmul.f32.gmra.mxu0 %v3297
        %v3414 = vpop.f32.mrf.mxu0
        %v3415 = vadd.f32 0.0, %v3414
        %3416 = vmatmul.f32.gmra.mxu0 %v3298
        %v3417 = vpop.f32.mrf.mxu0
        %v3418 = vadd.f32 0.0, %v3417
        %3419 = vmatmul.f32.gmra.mxu0 %v3299
        %v3420 = vpop.f32.mrf.mxu0
        %v3421 = vadd.f32 0.0, %v3420
        %3422 = vmatmul.f32.gmra.mxu0 %v3300
        %v3423 = vpop.f32.mrf.mxu0
        %v3424 = vadd.f32 0.0, %v3423
        %3425 = vmatmul.f32.gmra.mxu0 %v3301
        %v3426 = vpop.f32.mrf.mxu0
        %v3427 = vadd.f32 0.0, %v3426
        %3428 = vmatmul.f32.gmra.mxu0 %v3302
        %v3429 = vpop.f32.mrf.mxu0
        %v3430 = vadd.f32 0.0, %v3429
        %3431 = vdwg.mxu0
        %v3432 = vadd.f32 %v3239, %v3337
        %v3433 = vadd.f32 %v3240, %v3340
        %v3434 = vadd.f32 %v3241, %v3343
        %v3435 = vadd.f32 %v3242, %v3346
        %v3436 = vadd.f32 %v3243, %v3349
        %v3437 = vadd.f32 %v3244, %v3352
        %v3438 = vadd.f32 %v3245, %v3355
        %v3439 = vadd.f32 %v3246, %v3358
        %v3440 = vadd.f32 %v3247, %v3361
        %v3441 = vadd.f32 %v3248, %v3364
        %v3442 = vadd.f32 %v3249, %v3367
        %v3443 = vadd.f32 %v3250, %v3370
        %v3444 = vadd.f32 %v3251, %v3373
        %v3445 = vadd.f32 %v3252, %v3376
        %v3446 = vadd.f32 %v3253, %v3379
        %v3447 = vadd.f32 %v3254, %v3382
        %v3448 = vadd.f32 %v3255, %v3385
        %v3449 = vadd.f32 %v3256, %v3388
        %v3450 = vadd.f32 %v3257, %v3391
        %v3451 = vadd.f32 %v3258, %v3394
        %v3452 = vadd.f32 %v3259, %v3397
        %v3453 = vadd.f32 %v3260, %v3400
        %v3454 = vadd.f32 %v3261, %v3403
        %v3455 = vadd.f32 %v3262, %v3406
        %v3456 = vadd.f32 %v3263, %v3409
        %v3457 = vadd.f32 %v3264, %v3412
        %v3458 = vadd.f32 %v3265, %v3415
        %v3459 = vadd.f32 %v3266, %v3418
        %v3460 = vadd.f32 %v3267, %v3421
        %v3461 = vadd.f32 %v3268, %v3424
        %v3462 = vadd.f32 %v3269, %v3427
        %v3463 = vadd.f32 %v3270, %v3430
        %v3464 = vld [vmem:[%s1460] sm:$0xff]
        %v3465 = vld [vmem:[%s1460 + $0x8] sm:$0xff]
        %v3466 = vld [vmem:[%s1460 + $0x18] sm:$0xff]
        %v3467 = vld [vmem:[%s1460 + $0x20] sm:$0xff]
        %v3468 = vld [vmem:[%s1460 + $0x30] sm:$0xff]
        %v3469 = vld [vmem:[%s1460 + $0x38] sm:$0xff]
        %v3470 = vld [vmem:[%s1460 + $0x48] sm:$0xff]
        %v3471 = vld [vmem:[%s1460 + $0x50] sm:$0xff]
        %v3472 = vld [vmem:[%s1460 + $0x60] sm:$0xff]
        %v3473 = vld [vmem:[%s1460 + $0x68] sm:$0xff]
        %v3474 = vld [vmem:[%s1460 + $0x78] sm:$0xff]
        %v3475 = vld [vmem:[%s1460 + $0x80] sm:$0xff]
        %v3476 = vld [vmem:[%s1460 + $0x90] sm:$0xff]
        %v3477 = vld [vmem:[%s1460 + $0x98] sm:$0xff]
        %v3478 = vld [vmem:[%s1460 + $0xa8] sm:$0xff]
        %v3479 = vld [vmem:[%s1460 + $0xb0] sm:$0xff]
        %v3480 = vld [vmem:[%s1460 + $0xc0] sm:$0xff]
        %v3481 = vld [vmem:[%s1460 + $0xc8] sm:$0xff]
        %v3482 = vld [vmem:[%s1460 + $0xd8] sm:$0xff]
        %v3483 = vld [vmem:[%s1460 + $0xe0] sm:$0xff]
        %v3484 = vld [vmem:[%s1460 + $0xf0] sm:$0xff]
        %v3485 = vld [vmem:[%s1460 + $0xf8] sm:$0xff]
        %v3486 = vld [vmem:[%s1460 + $0x108] sm:$0xff]
        %v3487 = vld [vmem:[%s1460 + $0x110] sm:$0xff]
        %v3488 = vld [vmem:[%s1460 + $0x120] sm:$0xff]
        %v3489 = vld [vmem:[%s1460 + $0x128] sm:$0xff]
        %v3490 = vld [vmem:[%s1460 + $0x138] sm:$0xff]
        %v3491 = vld [vmem:[%s1460 + $0x140] sm:$0xff]
        %v3492 = vld [vmem:[%s1460 + $0x150] sm:$0xff]
        %v3493 = vld [vmem:[%s1460 + $0x158] sm:$0xff]
        %v3494 = vld [vmem:[%s1460 + $0x168] sm:$0xff]
        %v3495 = vld [vmem:[%s1460 + $0x170] sm:$0xff]
        %v3496 = vld [vmem:[#allocation8 + $0x300] sm:$0xff]
        %v3497 = vld [vmem:[#allocation8 + $0x308] sm:$0xff]
        %v3498 = vld [vmem:[#allocation8 + $0x310] sm:$0xff]
        %v3499 = vld [vmem:[#allocation8 + $0x318] sm:$0xff]
        %v3500 = vld [vmem:[#allocation8 + $0x320] sm:$0xff]
        %v3501 = vld [vmem:[#allocation8 + $0x328] sm:$0xff]
        %v3502 = vld [vmem:[#allocation8 + $0x330] sm:$0xff]
        %v3503 = vld [vmem:[#allocation8 + $0x338] sm:$0xff]
        %v3504 = vld [vmem:[#allocation8 + $0x340] sm:$0xff]
        %v3505 = vld [vmem:[#allocation8 + $0x348] sm:$0xff]
        %v3506 = vld [vmem:[#allocation8 + $0x350] sm:$0xff]
        %v3507 = vld [vmem:[#allocation8 + $0x358] sm:$0xff]
        %v3508 = vld [vmem:[#allocation8 + $0x360] sm:$0xff]
        %v3509 = vld [vmem:[#allocation8 + $0x368] sm:$0xff]
        %v3510 = vld [vmem:[#allocation8 + $0x370] sm:$0xff]
        %v3511 = vld [vmem:[#allocation8 + $0x378] sm:$0xff]
        %3512 = vmatpush.msra.mxu0 %v3511
        %3513 = vmatpush.msra.mxu0 %v3510
        %3514 = vmatpush.msra.mxu0 %v3509
        %3515 = vmatpush.msra.mxu0 %v3508
        %3516 = vmatpush.msra.mxu0 %v3507
        %3517 = vmatpush.msra.mxu0 %v3506
        %3518 = vmatpush.msra.mxu0 %v3505
        %3519 = vmatpush.msra.mxu0 %v3504
        %3520 = vmatpush.msra.mxu0 %v3503
        %3521 = vmatpush.msra.mxu0 %v3502
        %3522 = vmatpush.msra.mxu0 %v3501
        %3523 = vmatpush.msra.mxu0 %v3500
        %3524 = vmatpush.msra.mxu0 %v3499
        %3525 = vmatpush.msra.mxu0 %v3498
        %3526 = vmatpush.msra.mxu0 %v3497
        %3527 = vmatpush.msra.mxu0 %v3496
        %3528 = vmatmul.f32.gmra.mxu0 %v3464
        %v3529 = vpop.f32.mrf.mxu0
        %v3530 = vadd.f32 0.0, %v3529
        %3531 = vmatmul.f32.gmra.mxu0 %v3465
        %v3532 = vpop.f32.mrf.mxu0
        %v3533 = vadd.f32 0.0, %v3532
        %3534 = vmatmul.f32.gmra.mxu0 %v3466
        %v3535 = vpop.f32.mrf.mxu0
        %v3536 = vadd.f32 0.0, %v3535
        %3537 = vmatmul.f32.gmra.mxu0 %v3467
        %v3538 = vpop.f32.mrf.mxu0
        %v3539 = vadd.f32 0.0, %v3538
        %3540 = vmatmul.f32.gmra.mxu0 %v3468
        %v3541 = vpop.f32.mrf.mxu0
        %v3542 = vadd.f32 0.0, %v3541
        %3543 = vmatmul.f32.gmra.mxu0 %v3469
        %v3544 = vpop.f32.mrf.mxu0
        %v3545 = vadd.f32 0.0, %v3544
        %3546 = vmatmul.f32.gmra.mxu0 %v3470
        %v3547 = vpop.f32.mrf.mxu0
        %v3548 = vadd.f32 0.0, %v3547
        %3549 = vmatmul.f32.gmra.mxu0 %v3471
        %v3550 = vpop.f32.mrf.mxu0
        %v3551 = vadd.f32 0.0, %v3550
        %3552 = vmatmul.f32.gmra.mxu0 %v3472
        %v3553 = vpop.f32.mrf.mxu0
        %v3554 = vadd.f32 0.0, %v3553
        %3555 = vmatmul.f32.gmra.mxu0 %v3473
        %v3556 = vpop.f32.mrf.mxu0
        %v3557 = vadd.f32 0.0, %v3556
        %3558 = vmatmul.f32.gmra.mxu0 %v3474
        %v3559 = vpop.f32.mrf.mxu0
        %v3560 = vadd.f32 0.0, %v3559
        %3561 = vmatmul.f32.gmra.mxu0 %v3475
        %v3562 = vpop.f32.mrf.mxu0
        %v3563 = vadd.f32 0.0, %v3562
        %3564 = vmatmul.f32.gmra.mxu0 %v3476
        %v3565 = vpop.f32.mrf.mxu0
        %v3566 = vadd.f32 0.0, %v3565
        %3567 = vmatmul.f32.gmra.mxu0 %v3477
        %v3568 = vpop.f32.mrf.mxu0
        %v3569 = vadd.f32 0.0, %v3568
        %3570 = vmatmul.f32.gmra.mxu0 %v3478
        %v3571 = vpop.f32.mrf.mxu0
        %v3572 = vadd.f32 0.0, %v3571
        %3573 = vmatmul.f32.gmra.mxu0 %v3479
        %v3574 = vpop.f32.mrf.mxu0
        %v3575 = vadd.f32 0.0, %v3574
        %3576 = vmatmul.f32.gmra.mxu0 %v3480
        %v3577 = vpop.f32.mrf.mxu0
        %v3578 = vadd.f32 0.0, %v3577
        %3579 = vmatmul.f32.gmra.mxu0 %v3481
        %v3580 = vpop.f32.mrf.mxu0
        %v3581 = vadd.f32 0.0, %v3580
        %3582 = vmatmul.f32.gmra.mxu0 %v3482
        %v3583 = vpop.f32.mrf.mxu0
        %v3584 = vadd.f32 0.0, %v3583
        %3585 = vmatmul.f32.gmra.mxu0 %v3483
        %v3586 = vpop.f32.mrf.mxu0
        %v3587 = vadd.f32 0.0, %v3586
        %3588 = vmatmul.f32.gmra.mxu0 %v3484
        %v3589 = vpop.f32.mrf.mxu0
        %v3590 = vadd.f32 0.0, %v3589
        %3591 = vmatmul.f32.gmra.mxu0 %v3485
        %v3592 = vpop.f32.mrf.mxu0
        %v3593 = vadd.f32 0.0, %v3592
        %3594 = vmatmul.f32.gmra.mxu0 %v3486
        %v3595 = vpop.f32.mrf.mxu0
        %v3596 = vadd.f32 0.0, %v3595
        %3597 = vmatmul.f32.gmra.mxu0 %v3487
        %v3598 = vpop.f32.mrf.mxu0
        %v3599 = vadd.f32 0.0, %v3598
        %3600 = vmatmul.f32.gmra.mxu0 %v3488
        %v3601 = vpop.f32.mrf.mxu0
        %v3602 = vadd.f32 0.0, %v3601
        %3603 = vmatmul.f32.gmra.mxu0 %v3489
        %v3604 = vpop.f32.mrf.mxu0
        %v3605 = vadd.f32 0.0, %v3604
        %3606 = vmatmul.f32.gmra.mxu0 %v3490
        %v3607 = vpop.f32.mrf.mxu0
        %v3608 = vadd.f32 0.0, %v3607
        %3609 = vmatmul.f32.gmra.mxu0 %v3491
        %v3610 = vpop.f32.mrf.mxu0
        %v3611 = vadd.f32 0.0, %v3610
        %3612 = vmatmul.f32.gmra.mxu0 %v3492
        %v3613 = vpop.f32.mrf.mxu0
        %v3614 = vadd.f32 0.0, %v3613
        %3615 = vmatmul.f32.gmra.mxu0 %v3493
        %v3616 = vpop.f32.mrf.mxu0
        %v3617 = vadd.f32 0.0, %v3616
        %3618 = vmatmul.f32.gmra.mxu0 %v3494
        %v3619 = vpop.f32.mrf.mxu0
        %v3620 = vadd.f32 0.0, %v3619
        %3621 = vmatmul.f32.gmra.mxu0 %v3495
        %v3622 = vpop.f32.mrf.mxu0
        %v3623 = vadd.f32 0.0, %v3622
        %3624 = vdwg.mxu0
        %v3625 = vadd.f32 %v3432, %v3530
        %v3626 = vadd.f32 %v3433, %v3533
        %v3627 = vadd.f32 %v3434, %v3536
        %v3628 = vadd.f32 %v3435, %v3539
        %v3629 = vadd.f32 %v3436, %v3542
        %v3630 = vadd.f32 %v3437, %v3545
        %v3631 = vadd.f32 %v3438, %v3548
        %v3632 = vadd.f32 %v3439, %v3551
        %v3633 = vadd.f32 %v3440, %v3554
        %v3634 = vadd.f32 %v3441, %v3557
        %v3635 = vadd.f32 %v3442, %v3560
        %v3636 = vadd.f32 %v3443, %v3563
        %v3637 = vadd.f32 %v3444, %v3566
        %v3638 = vadd.f32 %v3445, %v3569
        %v3639 = vadd.f32 %v3446, %v3572
        %v3640 = vadd.f32 %v3447, %v3575
        %v3641 = vadd.f32 %v3448, %v3578
        %v3642 = vadd.f32 %v3449, %v3581
        %v3643 = vadd.f32 %v3450, %v3584
        %v3644 = vadd.f32 %v3451, %v3587
        %v3645 = vadd.f32 %v3452, %v3590
        %v3646 = vadd.f32 %v3453, %v3593
        %v3647 = vadd.f32 %v3454, %v3596
        %v3648 = vadd.f32 %v3455, %v3599
        %v3649 = vadd.f32 %v3456, %v3602
        %v3650 = vadd.f32 %v3457, %v3605
        %v3651 = vadd.f32 %v3458, %v3608
        %v3652 = vadd.f32 %v3459, %v3611
        %v3653 = vadd.f32 %v3460, %v3614
        %v3654 = vadd.f32 %v3461, %v3617
        %v3655 = vadd.f32 %v3462, %v3620
        %v3656 = vadd.f32 %v3463, %v3623
        %v3657 = vld [vmem:[%s1460 + $0x1] sm:$0xff]
        %v3658 = vld [vmem:[%s1460 + $0x9] sm:$0xff]
        %v3659 = vld [vmem:[%s1460 + $0x19] sm:$0xff]
        %v3660 = vld [vmem:[%s1460 + $0x21] sm:$0xff]
        %v3661 = vld [vmem:[%s1460 + $0x31] sm:$0xff]
        %v3662 = vld [vmem:[%s1460 + $0x39] sm:$0xff]
        %v3663 = vld [vmem:[%s1460 + $0x49] sm:$0xff]
        %v3664 = vld [vmem:[%s1460 + $0x51] sm:$0xff]
        %v3665 = vld [vmem:[%s1460 + $0x61] sm:$0xff]
        %v3666 = vld [vmem:[%s1460 + $0x69] sm:$0xff]
        %v3667 = vld [vmem:[%s1460 + $0x79] sm:$0xff]
        %v3668 = vld [vmem:[%s1460 + $0x81] sm:$0xff]
        %v3669 = vld [vmem:[%s1460 + $0x91] sm:$0xff]
        %v3670 = vld [vmem:[%s1460 + $0x99] sm:$0xff]
        %v3671 = vld [vmem:[%s1460 + $0xa9] sm:$0xff]
        %v3672 = vld [vmem:[%s1460 + $0xb1] sm:$0xff]
        %v3673 = vld [vmem:[%s1460 + $0xc1] sm:$0xff]
        %v3674 = vld [vmem:[%s1460 + $0xc9] sm:$0xff]
        %v3675 = vld [vmem:[%s1460 + $0xd9] sm:$0xff]
        %v3676 = vld [vmem:[%s1460 + $0xe1] sm:$0xff]
        %v3677 = vld [vmem:[%s1460 + $0xf1] sm:$0xff]
        %v3678 = vld [vmem:[%s1460 + $0xf9] sm:$0xff]
        %v3679 = vld [vmem:[%s1460 + $0x109] sm:$0xff]
        %v3680 = vld [vmem:[%s1460 + $0x111] sm:$0xff]
        %v3681 = vld [vmem:[%s1460 + $0x121] sm:$0xff]
        %v3682 = vld [vmem:[%s1460 + $0x129] sm:$0xff]
        %v3683 = vld [vmem:[%s1460 + $0x139] sm:$0xff]
        %v3684 = vld [vmem:[%s1460 + $0x141] sm:$0xff]
        %v3685 = vld [vmem:[%s1460 + $0x151] sm:$0xff]
        %v3686 = vld [vmem:[%s1460 + $0x159] sm:$0xff]
        %v3687 = vld [vmem:[%s1460 + $0x169] sm:$0xff]
        %v3688 = vld [vmem:[%s1460 + $0x171] sm:$0xff]
        %v3689 = vld [vmem:[#allocation8 + $0x380] sm:$0xff]
        %v3690 = vld [vmem:[#allocation8 + $0x388] sm:$0xff]
        %v3691 = vld [vmem:[#allocation8 + $0x390] sm:$0xff]
        %v3692 = vld [vmem:[#allocation8 + $0x398] sm:$0xff]
        %v3693 = vld [vmem:[#allocation8 + $0x3a0] sm:$0xff]
        %v3694 = vld [vmem:[#allocation8 + $0x3a8] sm:$0xff]
        %v3695 = vld [vmem:[#allocation8 + $0x3b0] sm:$0xff]
        %v3696 = vld [vmem:[#allocation8 + $0x3b8] sm:$0xff]
        %v3697 = vld [vmem:[#allocation8 + $0x3c0] sm:$0xff]
        %v3698 = vld [vmem:[#allocation8 + $0x3c8] sm:$0xff]
        %v3699 = vld [vmem:[#allocation8 + $0x3d0] sm:$0xff]
        %v3700 = vld [vmem:[#allocation8 + $0x3d8] sm:$0xff]
        %v3701 = vld [vmem:[#allocation8 + $0x3e0] sm:$0xff]
        %v3702 = vld [vmem:[#allocation8 + $0x3e8] sm:$0xff]
        %v3703 = vld [vmem:[#allocation8 + $0x3f0] sm:$0xff]
        %v3704 = vld [vmem:[#allocation8 + $0x3f8] sm:$0xff]
        %3705 = vmatpush.msra.mxu0 %v3704
        %3706 = vmatpush.msra.mxu0 %v3703
        %3707 = vmatpush.msra.mxu0 %v3702
        %3708 = vmatpush.msra.mxu0 %v3701
        %3709 = vmatpush.msra.mxu0 %v3700
        %3710 = vmatpush.msra.mxu0 %v3699
        %3711 = vmatpush.msra.mxu0 %v3698
        %3712 = vmatpush.msra.mxu0 %v3697
        %3713 = vmatpush.msra.mxu0 %v3696
        %3714 = vmatpush.msra.mxu0 %v3695
        %3715 = vmatpush.msra.mxu0 %v3694
        %3716 = vmatpush.msra.mxu0 %v3693
        %3717 = vmatpush.msra.mxu0 %v3692
        %3718 = vmatpush.msra.mxu0 %v3691
        %3719 = vmatpush.msra.mxu0 %v3690
        %3720 = vmatpush.msra.mxu0 %v3689
        %3721 = vmatmul.f32.gmra.mxu0 %v3657
        %v3722 = vpop.f32.mrf.mxu0
        %v3723 = vadd.f32 0.0, %v3722
        %3724 = vmatmul.f32.gmra.mxu0 %v3658
        %v3725 = vpop.f32.mrf.mxu0
        %v3726 = vadd.f32 0.0, %v3725
        %3727 = vmatmul.f32.gmra.mxu0 %v3659
        %v3728 = vpop.f32.mrf.mxu0
        %v3729 = vadd.f32 0.0, %v3728
        %3730 = vmatmul.f32.gmra.mxu0 %v3660
        %v3731 = vpop.f32.mrf.mxu0
        %v3732 = vadd.f32 0.0, %v3731
        %3733 = vmatmul.f32.gmra.mxu0 %v3661
        %v3734 = vpop.f32.mrf.mxu0
        %v3735 = vadd.f32 0.0, %v3734
        %3736 = vmatmul.f32.gmra.mxu0 %v3662
        %v3737 = vpop.f32.mrf.mxu0
        %v3738 = vadd.f32 0.0, %v3737
        %3739 = vmatmul.f32.gmra.mxu0 %v3663
        %v3740 = vpop.f32.mrf.mxu0
        %v3741 = vadd.f32 0.0, %v3740
        %3742 = vmatmul.f32.gmra.mxu0 %v3664
        %v3743 = vpop.f32.mrf.mxu0
        %v3744 = vadd.f32 0.0, %v3743
        %3745 = vmatmul.f32.gmra.mxu0 %v3665
        %v3746 = vpop.f32.mrf.mxu0
        %v3747 = vadd.f32 0.0, %v3746
        %3748 = vmatmul.f32.gmra.mxu0 %v3666
        %v3749 = vpop.f32.mrf.mxu0
        %v3750 = vadd.f32 0.0, %v3749
        %3751 = vmatmul.f32.gmra.mxu0 %v3667
        %v3752 = vpop.f32.mrf.mxu0
        %v3753 = vadd.f32 0.0, %v3752
        %3754 = vmatmul.f32.gmra.mxu0 %v3668
        %v3755 = vpop.f32.mrf.mxu0
        %v3756 = vadd.f32 0.0, %v3755
        %3757 = vmatmul.f32.gmra.mxu0 %v3669
        %v3758 = vpop.f32.mrf.mxu0
        %v3759 = vadd.f32 0.0, %v3758
        %3760 = vmatmul.f32.gmra.mxu0 %v3670
        %v3761 = vpop.f32.mrf.mxu0
        %v3762 = vadd.f32 0.0, %v3761
        %3763 = vmatmul.f32.gmra.mxu0 %v3671
        %v3764 = vpop.f32.mrf.mxu0
        %v3765 = vadd.f32 0.0, %v3764
        %3766 = vmatmul.f32.gmra.mxu0 %v3672
        %v3767 = vpop.f32.mrf.mxu0
        %v3768 = vadd.f32 0.0, %v3767
        %3769 = vmatmul.f32.gmra.mxu0 %v3673
        %v3770 = vpop.f32.mrf.mxu0
        %v3771 = vadd.f32 0.0, %v3770
        %3772 = vmatmul.f32.gmra.mxu0 %v3674
        %v3773 = vpop.f32.mrf.mxu0
        %v3774 = vadd.f32 0.0, %v3773
        %3775 = vmatmul.f32.gmra.mxu0 %v3675
        %v3776 = vpop.f32.mrf.mxu0
        %v3777 = vadd.f32 0.0, %v3776
        %3778 = vmatmul.f32.gmra.mxu0 %v3676
        %v3779 = vpop.f32.mrf.mxu0
        %v3780 = vadd.f32 0.0, %v3779
        %3781 = vmatmul.f32.gmra.mxu0 %v3677
        %v3782 = vpop.f32.mrf.mxu0
        %v3783 = vadd.f32 0.0, %v3782
        %3784 = vmatmul.f32.gmra.mxu0 %v3678
        %v3785 = vpop.f32.mrf.mxu0
        %v3786 = vadd.f32 0.0, %v3785
        %3787 = vmatmul.f32.gmra.mxu0 %v3679
        %v3788 = vpop.f32.mrf.mxu0
        %v3789 = vadd.f32 0.0, %v3788
        %3790 = vmatmul.f32.gmra.mxu0 %v3680
        %v3791 = vpop.f32.mrf.mxu0
        %v3792 = vadd.f32 0.0, %v3791
        %3793 = vmatmul.f32.gmra.mxu0 %v3681
        %v3794 = vpop.f32.mrf.mxu0
        %v3795 = vadd.f32 0.0, %v3794
        %3796 = vmatmul.f32.gmra.mxu0 %v3682
        %v3797 = vpop.f32.mrf.mxu0
        %v3798 = vadd.f32 0.0, %v3797
        %3799 = vmatmul.f32.gmra.mxu0 %v3683
        %v3800 = vpop.f32.mrf.mxu0
        %v3801 = vadd.f32 0.0, %v3800
        %3802 = vmatmul.f32.gmra.mxu0 %v3684
        %v3803 = vpop.f32.mrf.mxu0
        %v3804 = vadd.f32 0.0, %v3803
        %3805 = vmatmul.f32.gmra.mxu0 %v3685
        %v3806 = vpop.f32.mrf.mxu0
        %v3807 = vadd.f32 0.0, %v3806
        %3808 = vmatmul.f32.gmra.mxu0 %v3686
        %v3809 = vpop.f32.mrf.mxu0
        %v3810 = vadd.f32 0.0, %v3809
        %3811 = vmatmul.f32.gmra.mxu0 %v3687
        %v3812 = vpop.f32.mrf.mxu0
        %v3813 = vadd.f32 0.0, %v3812
        %3814 = vmatmul.f32.gmra.mxu0 %v3688
        %v3815 = vpop.f32.mrf.mxu0
        %v3816 = vadd.f32 0.0, %v3815
        %3817 = vdwg.mxu0
        %v3818 = vadd.f32 %v3625, %v3723
        %v3819 = vadd.f32 %v3626, %v3726
        %v3820 = vadd.f32 %v3627, %v3729
        %v3821 = vadd.f32 %v3628, %v3732
        %v3822 = vadd.f32 %v3629, %v3735
        %v3823 = vadd.f32 %v3630, %v3738
        %v3824 = vadd.f32 %v3631, %v3741
        %v3825 = vadd.f32 %v3632, %v3744
        %v3826 = vadd.f32 %v3633, %v3747
        %v3827 = vadd.f32 %v3634, %v3750
        %v3828 = vadd.f32 %v3635, %v3753
        %v3829 = vadd.f32 %v3636, %v3756
        %v3830 = vadd.f32 %v3637, %v3759
        %v3831 = vadd.f32 %v3638, %v3762
        %v3832 = vadd.f32 %v3639, %v3765
        %v3833 = vadd.f32 %v3640, %v3768
        %v3834 = vadd.f32 %v3641, %v3771
        %v3835 = vadd.f32 %v3642, %v3774
        %v3836 = vadd.f32 %v3643, %v3777
        %v3837 = vadd.f32 %v3644, %v3780
        %v3838 = vadd.f32 %v3645, %v3783
        %v3839 = vadd.f32 %v3646, %v3786
        %v3840 = vadd.f32 %v3647, %v3789
        %v3841 = vadd.f32 %v3648, %v3792
        %v3842 = vadd.f32 %v3649, %v3795
        %v3843 = vadd.f32 %v3650, %v3798
        %v3844 = vadd.f32 %v3651, %v3801
        %v3845 = vadd.f32 %v3652, %v3804
        %v3846 = vadd.f32 %v3653, %v3807
        %v3847 = vadd.f32 %v3654, %v3810
        %v3848 = vadd.f32 %v3655, %v3813
        %v3849 = vadd.f32 %v3656, %v3816
        %v3850 = vld [vmem:[%s1460 + $0x2] sm:$0xff]
        %v3851 = vld [vmem:[%s1460 + $0xa] sm:$0xff]
        %v3852 = vld [vmem:[%s1460 + $0x1a] sm:$0xff]
        %v3853 = vld [vmem:[%s1460 + $0x22] sm:$0xff]
        %v3854 = vld [vmem:[%s1460 + $0x32] sm:$0xff]
        %v3855 = vld [vmem:[%s1460 + $0x3a] sm:$0xff]
        %v3856 = vld [vmem:[%s1460 + $0x4a] sm:$0xff]
        %v3857 = vld [vmem:[%s1460 + $0x52] sm:$0xff]
        %v3858 = vld [vmem:[%s1460 + $0x62] sm:$0xff]
        %v3859 = vld [vmem:[%s1460 + $0x6a] sm:$0xff]
        %v3860 = vld [vmem:[%s1460 + $0x7a] sm:$0xff]
        %v3861 = vld [vmem:[%s1460 + $0x82] sm:$0xff]
        %v3862 = vld [vmem:[%s1460 + $0x92] sm:$0xff]
        %v3863 = vld [vmem:[%s1460 + $0x9a] sm:$0xff]
        %v3864 = vld [vmem:[%s1460 + $0xaa] sm:$0xff]
        %v3865 = vld [vmem:[%s1460 + $0xb2] sm:$0xff]
        %v3866 = vld [vmem:[%s1460 + $0xc2] sm:$0xff]
        %v3867 = vld [vmem:[%s1460 + $0xca] sm:$0xff]
        %v3868 = vld [vmem:[%s1460 + $0xda] sm:$0xff]
        %v3869 = vld [vmem:[%s1460 + $0xe2] sm:$0xff]
        %v3870 = vld [vmem:[%s1460 + $0xf2] sm:$0xff]
        %v3871 = vld [vmem:[%s1460 + $0xfa] sm:$0xff]
        %v3872 = vld [vmem:[%s1460 + $0x10a] sm:$0xff]
        %v3873 = vld [vmem:[%s1460 + $0x112] sm:$0xff]
        %v3874 = vld [vmem:[%s1460 + $0x122] sm:$0xff]
        %v3875 = vld [vmem:[%s1460 + $0x12a] sm:$0xff]
        %v3876 = vld [vmem:[%s1460 + $0x13a] sm:$0xff]
        %v3877 = vld [vmem:[%s1460 + $0x142] sm:$0xff]
        %v3878 = vld [vmem:[%s1460 + $0x152] sm:$0xff]
        %v3879 = vld [vmem:[%s1460 + $0x15a] sm:$0xff]
        %v3880 = vld [vmem:[%s1460 + $0x16a] sm:$0xff]
        %v3881 = vld [vmem:[%s1460 + $0x172] sm:$0xff]
        %v3882 = vld [vmem:[#allocation8 + $0x400] sm:$0xff]
        %v3883 = vld [vmem:[#allocation8 + $0x408] sm:$0xff]
        %v3884 = vld [vmem:[#allocation8 + $0x410] sm:$0xff]
        %v3885 = vld [vmem:[#allocation8 + $0x418] sm:$0xff]
        %v3886 = vld [vmem:[#allocation8 + $0x420] sm:$0xff]
        %v3887 = vld [vmem:[#allocation8 + $0x428] sm:$0xff]
        %v3888 = vld [vmem:[#allocation8 + $0x430] sm:$0xff]
        %v3889 = vld [vmem:[#allocation8 + $0x438] sm:$0xff]
        %v3890 = vld [vmem:[#allocation8 + $0x440] sm:$0xff]
        %v3891 = vld [vmem:[#allocation8 + $0x448] sm:$0xff]
        %v3892 = vld [vmem:[#allocation8 + $0x450] sm:$0xff]
        %v3893 = vld [vmem:[#allocation8 + $0x458] sm:$0xff]
        %v3894 = vld [vmem:[#allocation8 + $0x460] sm:$0xff]
        %v3895 = vld [vmem:[#allocation8 + $0x468] sm:$0xff]
        %v3896 = vld [vmem:[#allocation8 + $0x470] sm:$0xff]
        %v3897 = vld [vmem:[#allocation8 + $0x478] sm:$0xff]
        %3898 = vmatpush.msra.mxu0 %v3897
        %3899 = vmatpush.msra.mxu0 %v3896
        %3900 = vmatpush.msra.mxu0 %v3895
        %3901 = vmatpush.msra.mxu0 %v3894
        %3902 = vmatpush.msra.mxu0 %v3893
        %3903 = vmatpush.msra.mxu0 %v3892
        %3904 = vmatpush.msra.mxu0 %v3891
        %3905 = vmatpush.msra.mxu0 %v3890
        %3906 = vmatpush.msra.mxu0 %v3889
        %3907 = vmatpush.msra.mxu0 %v3888
        %3908 = vmatpush.msra.mxu0 %v3887
        %3909 = vmatpush.msra.mxu0 %v3886
        %3910 = vmatpush.msra.mxu0 %v3885
        %3911 = vmatpush.msra.mxu0 %v3884
        %3912 = vmatpush.msra.mxu0 %v3883
        %3913 = vmatpush.msra.mxu0 %v3882
        %3914 = vmatmul.f32.gmra.mxu0 %v3850
        %v3915 = vpop.f32.mrf.mxu0
        %v3916 = vadd.f32 0.0, %v3915
        %3917 = vmatmul.f32.gmra.mxu0 %v3851
        %v3918 = vpop.f32.mrf.mxu0
        %v3919 = vadd.f32 0.0, %v3918
        %3920 = vmatmul.f32.gmra.mxu0 %v3852
        %v3921 = vpop.f32.mrf.mxu0
        %v3922 = vadd.f32 0.0, %v3921
        %3923 = vmatmul.f32.gmra.mxu0 %v3853
        %v3924 = vpop.f32.mrf.mxu0
        %v3925 = vadd.f32 0.0, %v3924
        %3926 = vmatmul.f32.gmra.mxu0 %v3854
        %v3927 = vpop.f32.mrf.mxu0
        %v3928 = vadd.f32 0.0, %v3927
        %3929 = vmatmul.f32.gmra.mxu0 %v3855
        %v3930 = vpop.f32.mrf.mxu0
        %v3931 = vadd.f32 0.0, %v3930
        %3932 = vmatmul.f32.gmra.mxu0 %v3856
        %v3933 = vpop.f32.mrf.mxu0
        %v3934 = vadd.f32 0.0, %v3933
        %3935 = vmatmul.f32.gmra.mxu0 %v3857
        %v3936 = vpop.f32.mrf.mxu0
        %v3937 = vadd.f32 0.0, %v3936
        %3938 = vmatmul.f32.gmra.mxu0 %v3858
        %v3939 = vpop.f32.mrf.mxu0
        %v3940 = vadd.f32 0.0, %v3939
        %3941 = vmatmul.f32.gmra.mxu0 %v3859
        %v3942 = vpop.f32.mrf.mxu0
        %v3943 = vadd.f32 0.0, %v3942
        %3944 = vmatmul.f32.gmra.mxu0 %v3860
        %v3945 = vpop.f32.mrf.mxu0
        %v3946 = vadd.f32 0.0, %v3945
        %3947 = vmatmul.f32.gmra.mxu0 %v3861
        %v3948 = vpop.f32.mrf.mxu0
        %v3949 = vadd.f32 0.0, %v3948
        %3950 = vmatmul.f32.gmra.mxu0 %v3862
        %v3951 = vpop.f32.mrf.mxu0
        %v3952 = vadd.f32 0.0, %v3951
        %3953 = vmatmul.f32.gmra.mxu0 %v3863
        %v3954 = vpop.f32.mrf.mxu0
        %v3955 = vadd.f32 0.0, %v3954
        %3956 = vmatmul.f32.gmra.mxu0 %v3864
        %v3957 = vpop.f32.mrf.mxu0
        %v3958 = vadd.f32 0.0, %v3957
        %3959 = vmatmul.f32.gmra.mxu0 %v3865
        %v3960 = vpop.f32.mrf.mxu0
        %v3961 = vadd.f32 0.0, %v3960
        %3962 = vmatmul.f32.gmra.mxu0 %v3866
        %v3963 = vpop.f32.mrf.mxu0
        %v3964 = vadd.f32 0.0, %v3963
        %3965 = vmatmul.f32.gmra.mxu0 %v3867
        %v3966 = vpop.f32.mrf.mxu0
        %v3967 = vadd.f32 0.0, %v3966
        %3968 = vmatmul.f32.gmra.mxu0 %v3868
        %v3969 = vpop.f32.mrf.mxu0
        %v3970 = vadd.f32 0.0, %v3969
        %3971 = vmatmul.f32.gmra.mxu0 %v3869
        %v3972 = vpop.f32.mrf.mxu0
        %v3973 = vadd.f32 0.0, %v3972
        %3974 = vmatmul.f32.gmra.mxu0 %v3870
        %v3975 = vpop.f32.mrf.mxu0
        %v3976 = vadd.f32 0.0, %v3975
        %3977 = vmatmul.f32.gmra.mxu0 %v3871
        %v3978 = vpop.f32.mrf.mxu0
        %v3979 = vadd.f32 0.0, %v3978
        %3980 = vmatmul.f32.gmra.mxu0 %v3872
        %v3981 = vpop.f32.mrf.mxu0
        %v3982 = vadd.f32 0.0, %v3981
        %3983 = vmatmul.f32.gmra.mxu0 %v3873
        %v3984 = vpop.f32.mrf.mxu0
        %v3985 = vadd.f32 0.0, %v3984
        %3986 = vmatmul.f32.gmra.mxu0 %v3874
        %v3987 = vpop.f32.mrf.mxu0
        %v3988 = vadd.f32 0.0, %v3987
        %3989 = vmatmul.f32.gmra.mxu0 %v3875
        %v3990 = vpop.f32.mrf.mxu0
        %v3991 = vadd.f32 0.0, %v3990
        %3992 = vmatmul.f32.gmra.mxu0 %v3876
        %v3993 = vpop.f32.mrf.mxu0
        %v3994 = vadd.f32 0.0, %v3993
        %3995 = vmatmul.f32.gmra.mxu0 %v3877
        %v3996 = vpop.f32.mrf.mxu0
        %v3997 = vadd.f32 0.0, %v3996
        %3998 = vmatmul.f32.gmra.mxu0 %v3878
        %v3999 = vpop.f32.mrf.mxu0
        %v4000 = vadd.f32 0.0, %v3999
        %4001 = vmatmul.f32.gmra.mxu0 %v3879
        %v4002 = vpop.f32.mrf.mxu0
        %v4003 = vadd.f32 0.0, %v4002
        %4004 = vmatmul.f32.gmra.mxu0 %v3880
        %v4005 = vpop.f32.mrf.mxu0
        %v4006 = vadd.f32 0.0, %v4005
        %4007 = vmatmul.f32.gmra.mxu0 %v3881
        %v4008 = vpop.f32.mrf.mxu0
        %v4009 = vadd.f32 0.0, %v4008
        %4010 = vdwg.mxu0
        %v4011 = vadd.f32 %v3818, %v3916
        %v4012 = vadd.f32 %v3819, %v3919
        %v4013 = vadd.f32 %v3820, %v3922
        %v4014 = vadd.f32 %v3821, %v3925
        %v4015 = vadd.f32 %v3822, %v3928
        %v4016 = vadd.f32 %v3823, %v3931
        %v4017 = vadd.f32 %v3824, %v3934
        %v4018 = vadd.f32 %v3825, %v3937
        %v4019 = vadd.f32 %v3826, %v3940
        %v4020 = vadd.f32 %v3827, %v3943
        %v4021 = vadd.f32 %v3828, %v3946
        %v4022 = vadd.f32 %v3829, %v3949
        %v4023 = vadd.f32 %v3830, %v3952
        %v4024 = vadd.f32 %v3831, %v3955
        %v4025 = vadd.f32 %v3832, %v3958
        %v4026 = vadd.f32 %v3833, %v3961
        %v4027 = vadd.f32 %v3834, %v3964
        %v4028 = vadd.f32 %v3835, %v3967
        %v4029 = vadd.f32 %v3836, %v3970
        %v4030 = vadd.f32 %v3837, %v3973
        %v4031 = vadd.f32 %v3838, %v3976
        %v4032 = vadd.f32 %v3839, %v3979
        %v4033 = vadd.f32 %v3840, %v3982
        %v4034 = vadd.f32 %v3841, %v3985
        %v4035 = vadd.f32 %v3842, %v3988
        %v4036 = vadd.f32 %v3843, %v3991
        %v4037 = vadd.f32 %v3844, %v3994
        %v4038 = vadd.f32 %v3845, %v3997
        %v4039 = vadd.f32 %v3846, %v4000
        %v4040 = vadd.f32 %v3847, %v4003
        %v4041 = vadd.f32 %v3848, %v4006
        %v4042 = vadd.f32 %v3849, %v4009
        %v4043 = vadd.f32 %v4011, %v4012
        %v4044 = vadd.f32 %v4043, %v4013
        %v4045 = vadd.f32 %v4044, %v4014
        %v4046 = vadd.f32 %v4045, %v4015
        %v4047 = vadd.f32 %v4046, %v4016
        %v4048 = vadd.f32 %v4047, %v4017
        %v4049 = vadd.f32 %v4048, %v4018
        %v4050 = vadd.f32 %v4049, %v4019
        %v4051 = vadd.f32 %v4050, %v4020
        %v4052 = vadd.f32 %v4051, %v4021
        %v4053 = vadd.f32 %v4052, %v4022
        %v4054 = vadd.f32 %v4053, %v4023
        %v4055 = vadd.f32 %v4054, %v4024
        %v4056 = vadd.f32 %v4055, %v4025
        %v4057 = vadd.f32 %v4056, %v4026
        %v4058 = vadd.f32 %v4057, %v4027
        %v4059 = vadd.f32 %v4058, %v4028
        %v4060 = vadd.f32 %v4059, %v4029
        %v4061 = vadd.f32 %v4060, %v4030
        %v4062 = vadd.f32 %v4061, %v4031
        %v4063 = vadd.f32 %v4062, %v4032
        %v4064 = vadd.f32 %v4063, %v4033
        %v4065 = vadd.f32 %v4064, %v4034
        %v4066 = vadd.f32 %v4065, %v4035
        %v4067 = vadd.f32 %v4066, %v4036
        %v4068 = vadd.f32 %v4067, %v4037
        %v4069 = vadd.f32 %v4068, %v4038
        %v4070 = vadd.f32 %v4069, %v4039
        %v4071 = vadd.f32 %v4070, %v4040
        %v4072 = vadd.f32 %v4071, %v4041
        %v4073 = vadd.f32 %v4072, %v4042
        %v4074 = vrot.slane %v4073, 4
        %v4075 = vadd.f32 %v4073, %v4074
        %v4076 = vrot.slane %v4075, 2
        %v4077 = vadd.f32 %v4075, %v4076
        %v4078 = vrot.slane %v4077, 1
        %v4079 = vadd.f32 %v4077, %v4078
        %v4080 = vmul.f32 %v4079, %v2083
        %v4081 = vsub.f32 %v4011, %v4080
        %v4082 = vsub.f32 %v4012, %v4080
        %v4083 = vsub.f32 %v4013, %v4080
        %v4084 = vsub.f32 %v4014, %v4080
        %v4085 = vsub.f32 %v4015, %v4080
        %v4086 = vsub.f32 %v4016, %v4080
        %v4087 = vsub.f32 %v4017, %v4080
        %v4088 = vsub.f32 %v4018, %v4080
        %v4089 = vsub.f32 %v4019, %v4080
        %v4090 = vsub.f32 %v4020, %v4080
        %v4091 = vsub.f32 %v4021, %v4080
        %v4092 = vsub.f32 %v4022, %v4080
        %v4093 = vsub.f32 %v4023, %v4080
        %v4094 = vsub.f32 %v4024, %v4080
        %v4095 = vsub.f32 %v4025, %v4080
        %v4096 = vsub.f32 %v4026, %v4080
        %v4097 = vsub.f32 %v4027, %v4080
        %v4098 = vsub.f32 %v4028, %v4080
        %v4099 = vsub.f32 %v4029, %v4080
        %v4100 = vsub.f32 %v4030, %v4080
        %v4101 = vsub.f32 %v4031, %v4080
        %v4102 = vsub.f32 %v4032, %v4080
        %v4103 = vsub.f32 %v4033, %v4080
        %v4104 = vsub.f32 %v4034, %v4080
        %v4105 = vsub.f32 %v4035, %v4080
        %v4106 = vsub.f32 %v4036, %v4080
        %v4107 = vsub.f32 %v4037, %v4080
        %v4108 = vsub.f32 %v4038, %v4080
        %v4109 = vsub.f32 %v4039, %v4080
        %v4110 = vsub.f32 %v4040, %v4080
        %v4111 = vsub.f32 %v4041, %v4080
        %v4112 = vsub.f32 %v4042, %v4080
        %v4113 = vmul.f32 %v4081, %v4081
        %v4114 = vmul.f32 %v4082, %v4082
        %v4115 = vmul.f32 %v4083, %v4083
        %v4116 = vmul.f32 %v4084, %v4084
        %v4117 = vmul.f32 %v4085, %v4085
        %v4118 = vmul.f32 %v4086, %v4086
        %v4119 = vmul.f32 %v4087, %v4087
        %v4120 = vmul.f32 %v4088, %v4088
        %v4121 = vmul.f32 %v4089, %v4089
        %v4122 = vmul.f32 %v4090, %v4090
        %v4123 = vmul.f32 %v4091, %v4091
        %v4124 = vmul.f32 %v4092, %v4092
        %v4125 = vmul.f32 %v4093, %v4093
        %v4126 = vmul.f32 %v4094, %v4094
        %v4127 = vmul.f32 %v4095, %v4095
        %v4128 = vmul.f32 %v4096, %v4096
        %v4129 = vmul.f32 %v4097, %v4097
        %v4130 = vmul.f32 %v4098, %v4098
        %v4131 = vmul.f32 %v4099, %v4099
        %v4132 = vmul.f32 %v4100, %v4100
        %v4133 = vmul.f32 %v4101, %v4101
        %v4134 = vmul.f32 %v4102, %v4102
        %v4135 = vmul.f32 %v4103, %v4103
        %v4136 = vmul.f32 %v4104, %v4104
        %v4137 = vmul.f32 %v4105, %v4105
        %v4138 = vmul.f32 %v4106, %v4106
        %v4139 = vmul.f32 %v4107, %v4107
        %v4140 = vmul.f32 %v4108, %v4108
        %v4141 = vmul.f32 %v4109, %v4109
        %v4142 = vmul.f32 %v4110, %v4110
        %v4143 = vmul.f32 %v4111, %v4111
        %v4144 = vmul.f32 %v4112, %v4112
        %v4145 = vadd.f32 %v4113, %v4114
        %v4146 = vadd.f32 %v4145, %v4115
        %v4147 = vadd.f32 %v4146, %v4116
        %v4148 = vadd.f32 %v4147, %v4117
        %v4149 = vadd.f32 %v4148, %v4118
        %v4150 = vadd.f32 %v4149, %v4119
        %v4151 = vadd.f32 %v4150, %v4120
        %v4152 = vadd.f32 %v4151, %v4121
        %v4153 = vadd.f32 %v4152, %v4122
        %v4154 = vadd.f32 %v4153, %v4123
        %v4155 = vadd.f32 %v4154, %v4124
        %v4156 = vadd.f32 %v4155, %v4125
        %v4157 = vadd.f32 %v4156, %v4126
        %v4158 = vadd.f32 %v4157, %v4127
        %v4159 = vadd.f32 %v4158, %v4128
        %v4160 = vadd.f32 %v4159, %v4129
        %v4161 = vadd.f32 %v4160, %v4130
        %v4162 = vadd.f32 %v4161, %v4131
        %v4163 = vadd.f32 %v4162, %v4132
        %v4164 = vadd.f32 %v4163, %v4133
        %v4165 = vadd.f32 %v4164, %v4134
        %v4166 = vadd.f32 %v4165, %v4135
        %v4167 = vadd.f32 %v4166, %v4136
        %v4168 = vadd.f32 %v4167, %v4137
        %v4169 = vadd.f32 %v4168, %v4138
        %v4170 = vadd.f32 %v4169, %v4139
        %v4171 = vadd.f32 %v4170, %v4140
        %v4172 = vadd.f32 %v4171, %v4141
        %v4173 = vadd.f32 %v4172, %v4142
        %v4174 = vadd.f32 %v4173, %v4143
        %v4175 = vadd.f32 %v4174, %v4144
        %v4176 = vrot.slane %v4175, 4
        %v4177 = vadd.f32 %v4175, %v4176
        %v4178 = vrot.slane %v4177, 2
        %v4179 = vadd.f32 %v4177, %v4178
        %v4180 = vrot.slane %v4179, 1
        %v4181 = vadd.f32 %v4179, %v4180
        %v4182 = vmul.f32 %v4181, %v2083
        %v4183 = vadd.f32 %v4182, 1e-05
        %v4184 = vrsqrt.pop %v4183
        %v4185 = vmul.f32 %v4184, %v4183
        %v4186 = vmul.f32 %v4185, %v4184
        %v4187 = vmul.f32 0.5, %v4186
        %v4188 = vsub.f32 1.5, %v4187
        %v4189 = vmul.f32 %v4184, %v4188
        %vm4190 = vweird.f32 %v4183
        %vm4191 = vweird.f32 %v4184
        %vm4192 = vmor %vm4190, %vm4191
        %v4193 = vsel %vm4192, %v4184, %v4189
        %v4194 = vmul.f32 %v4081, %v4193
        %v4195 = vmul.f32 %v4082, %v4193
        %v4196 = vmul.f32 %v4083, %v4193
        %v4197 = vmul.f32 %v4084, %v4193
        %v4198 = vmul.f32 %v4085, %v4193
        %v4199 = vmul.f32 %v4086, %v4193
        %v4200 = vmul.f32 %v4087, %v4193
        %v4201 = vmul.f32 %v4088, %v4193
        %v4202 = vmul.f32 %v4089, %v4193
        %v4203 = vmul.f32 %v4090, %v4193
        %v4204 = vmul.f32 %v4091, %v4193
        %v4205 = vmul.f32 %v4092, %v4193
        %v4206 = vmul.f32 %v4093, %v4193
        %v4207 = vmul.f32 %v4094, %v4193
        %v4208 = vmul.f32 %v4095, %v4193
        %v4209 = vmul.f32 %v4096, %v4193
        %v4210 = vmul.f32 %v4097, %v4193
        %v4211 = vmul.f32 %v4098, %v4193
        %v4212 = vmul.f32 %v4099, %v4193
        %v4213 = vmul.f32 %v4100, %v4193
        %v4214 = vmul.f32 %v4101, %v4193
        %v4215 = vmul.f32 %v4102, %v4193
        %v4216 = vmul.f32 %v4103, %v4193
        %v4217 = vmul.f32 %v4104, %v4193
        %v4218 = vmul.f32 %v4105, %v4193
        %v4219 = vmul.f32 %v4106, %v4193
        %v4220 = vmul.f32 %v4107, %v4193
        %v4221 = vmul.f32 %v4108, %v4193
        %v4222 = vmul.f32 %v4109, %v4193
        %v4223 = vmul.f32 %v4110, %v4193
        %v4224 = vmul.f32 %v4111, %v4193
        %v4225 = vmul.f32 %v4112, %v4193
        %v4226 = vld [vmem:[%s190] sm:$0xff]
        %v4227 = vld [vmem:[%s190 + $0x8] sm:$0xff]
        %v4228 = vld [vmem:[%s190 + $0x10] sm:$0xff]
        %v4229 = vld [vmem:[%s190 + $0x18] sm:$0xff]
        %v4230 = vld [vmem:[%s190 + $0x20] sm:$0xff]
        %v4231 = vld [vmem:[%s190 + $0x28] sm:$0xff]
        %v4232 = vld [vmem:[%s190 + $0x30] sm:$0xff]
        %v4233 = vld [vmem:[%s190 + $0x38] sm:$0xff]
        %v4234 = vld [vmem:[%s190 + $0x40] sm:$0xff]
        %v4235 = vld [vmem:[%s190 + $0x48] sm:$0xff]
        %v4236 = vld [vmem:[%s190 + $0x50] sm:$0xff]
        %v4237 = vld [vmem:[%s190 + $0x58] sm:$0xff]
        %v4238 = vld [vmem:[%s190 + $0x60] sm:$0xff]
        %v4239 = vld [vmem:[%s190 + $0x68] sm:$0xff]
        %v4240 = vld [vmem:[%s190 + $0x70] sm:$0xff]
        %v4241 = vld [vmem:[%s190 + $0x78] sm:$0xff]
        %v4242 = vld [vmem:[%s190 + $0x80] sm:$0xff]
        %v4243 = vld [vmem:[%s190 + $0x88] sm:$0xff]
        %v4244 = vld [vmem:[%s190 + $0x90] sm:$0xff]
        %v4245 = vld [vmem:[%s190 + $0x98] sm:$0xff]
        %v4246 = vld [vmem:[%s190 + $0xa0] sm:$0xff]
        %v4247 = vld [vmem:[%s190 + $0xa8] sm:$0xff]
        %v4248 = vld [vmem:[%s190 + $0xb0] sm:$0xff]
        %v4249 = vld [vmem:[%s190 + $0xb8] sm:$0xff]
        %v4250 = vld [vmem:[%s190 + $0xc0] sm:$0xff]
        %v4251 = vld [vmem:[%s190 + $0xc8] sm:$0xff]
        %v4252 = vld [vmem:[%s190 + $0xd0] sm:$0xff]
        %v4253 = vld [vmem:[%s190 + $0xd8] sm:$0xff]
        %v4254 = vld [vmem:[%s190 + $0xe0] sm:$0xff]
        %v4255 = vld [vmem:[%s190 + $0xe8] sm:$0xff]
        %v4256 = vld [vmem:[%s190 + $0xf0] sm:$0xff]
        %v4257 = vld [vmem:[%s190 + $0xf8] sm:$0xff]
        %v4258 = vadd.f32 %v4226, %v4194
        %v4259 = vadd.f32 %v4227, %v4195
        %v4260 = vadd.f32 %v4228, %v4196
        %v4261 = vadd.f32 %v4229, %v4197
        %v4262 = vadd.f32 %v4230, %v4198
        %v4263 = vadd.f32 %v4231, %v4199
        %v4264 = vadd.f32 %v4232, %v4200
        %v4265 = vadd.f32 %v4233, %v4201
        %v4266 = vadd.f32 %v4234, %v4202
        %v4267 = vadd.f32 %v4235, %v4203
        %v4268 = vadd.f32 %v4236, %v4204
        %v4269 = vadd.f32 %v4237, %v4205
        %v4270 = vadd.f32 %v4238, %v4206
        %v4271 = vadd.f32 %v4239, %v4207
        %v4272 = vadd.f32 %v4240, %v4208
        %v4273 = vadd.f32 %v4241, %v4209
        %v4274 = vadd.f32 %v4242, %v4210
        %v4275 = vadd.f32 %v4243, %v4211
        %v4276 = vadd.f32 %v4244, %v4212
        %v4277 = vadd.f32 %v4245, %v4213
        %v4278 = vadd.f32 %v4246, %v4214
        %v4279 = vadd.f32 %v4247, %v4215
        %v4280 = vadd.f32 %v4248, %v4216
        %v4281 = vadd.f32 %v4249, %v4217
        %v4282 = vadd.f32 %v4250, %v4218
        %v4283 = vadd.f32 %v4251, %v4219
        %v4284 = vadd.f32 %v4252, %v4220
        %v4285 = vadd.f32 %v4253, %v4221
        %v4286 = vadd.f32 %v4254, %v4222
        %v4287 = vadd.f32 %v4255, %v4223
        %v4288 = vadd.f32 %v4256, %v4224
        %v4289 = vadd.f32 %v4257, %v4225
        %4290 = vst [vmem:[%s223] sm:$0xff] %v4258
        %4291 = vst [vmem:[%s223 + $0x8] sm:$0xff] %v4259
        %4292 = vst [vmem:[%s223 + $0x10] sm:$0xff] %v4260
        %4293 = vst [vmem:[%s223 + $0x18] sm:$0xff] %v4261
        %4294 = vst [vmem:[%s223 + $0x20] sm:$0xff] %v4262
        %4295 = vst [vmem:[%s223 + $0x28] sm:$0xff] %v4263
        %4296 = vst [vmem:[%s223 + $0x30] sm:$0xff] %v4264
        %4297 = vst [vmem:[%s223 + $0x38] sm:$0xff] %v4265
        %4298 = vst [vmem:[%s223 + $0x40] sm:$0xff] %v4266
        %4299 = vst [vmem:[%s223 + $0x48] sm:$0xff] %v4267
        %4300 = vst [vmem:[%s223 + $0x50] sm:$0xff] %v4268
        %4301 = vst [vmem:[%s223 + $0x58] sm:$0xff] %v4269
        %4302 = vst [vmem:[%s223 + $0x60] sm:$0xff] %v4270
        %4303 = vst [vmem:[%s223 + $0x68] sm:$0xff] %v4271
        %4304 = vst [vmem:[%s223 + $0x70] sm:$0xff] %v4272
        %4305 = vst [vmem:[%s223 + $0x78] sm:$0xff] %v4273
        %4306 = vst [vmem:[%s223 + $0x80] sm:$0xff] %v4274
        %4307 = vst [vmem:[%s223 + $0x88] sm:$0xff] %v4275
        %4308 = vst [vmem:[%s223 + $0x90] sm:$0xff] %v4276
        %4309 = vst [vmem:[%s223 + $0x98] sm:$0xff] %v4277
        %4310 = vst [vmem:[%s223 + $0xa0] sm:$0xff] %v4278
        %4311 = vst [vmem:[%s223 + $0xa8] sm:$0xff] %v4279
        %4312 = vst [vmem:[%s223 + $0xb0] sm:$0xff] %v4280
        %4313 = vst [vmem:[%s223 + $0xb8] sm:$0xff] %v4281
        %4314 = vst [vmem:[%s223 + $0xc0] sm:$0xff] %v4282
        %4315 = vst [vmem:[%s223 + $0xc8] sm:$0xff] %v4283
        %4316 = vst [vmem:[%s223 + $0xd0] sm:$0xff] %v4284
        %4317 = vst [vmem:[%s223 + $0xd8] sm:$0xff] %v4285
        %4318 = vst [vmem:[%s223 + $0xe0] sm:$0xff] %v4286
        %4319 = vst [vmem:[%s223 + $0xe8] sm:$0xff] %v4287
        %4320 = vst [vmem:[%s223 + $0xf0] sm:$0xff] %v4288
        %4321 = vst [vmem:[%s223 + $0xf8] sm:$0xff] %v4289
        %s4322 = sand.u32 %s97, 1
        %s4323 = scalar_lea.sflag [#allocation5], %s4322
        %s4324 = sand.u32 %s97, 1
        %s4325 = smul.addr %s4324, 256
        %s4326 = scalar_lea.vmem [#allocation9], %s4325
        // Predicated region
        $region45: #{tpu_custom_call.1} parent=31 // pred_check
          %p4327 = pneg %p107
        $region46: #{tpu_custom_call.1} parent=31 // pred_check_branch
          %4329 = sbr.rel (%p4327) target = $region48
        $region47: #{tpu_custom_call.1} parent=31 // pred_region
          %4331 = vsyncadd %s4323, 0
          %s4332 = smul.addr %s21, 32
          %s4333 = smul.addr %s4332, 8
          %s4334 = scalar_lea.hbm %s3, %s4333
          %s4335 = sshll.u32 %s4326, 4
          %s4336 = int_to_ptr.vmem [resolvable:$true] %s4335
          %s4337 = sshll.u32 %s4334, 4
          %s4338 = int_to_ptr.hbm [resolvable:$true] %s4337
          %4343 = dma.vmem_to_hbm [thread:$0]  %s4336, 4096, %s4338, %s4323, 128, 128, 8
        $region48: #{tpu_custom_call.1} parent=31 // pred_fallthru
          _
      $region32: #{tpu_custom_call.1} parent=5 // pred_fallthru
        _
      %p4344 = scmp.le.s32.totalorder 2, %s16
      // Predicated region
      $region49: #{tpu_custom_call.1} parent=5 // pred_check
        %p4345 = pneg %p4344
      $region50: #{tpu_custom_call.1} parent=5 // pred_check_branch
        %4347 = sbr.rel (%p4345) target = $region52
      $region51: #{tpu_custom_call.1} parent=5 // pred_region
        %s4348 = ssub.s32 %s16, 2
        // Predicated region
        $region53: #{tpu_custom_call.1} parent=51 // pred_check
          %p4349 = pneg %p113
        $region54: #{tpu_custom_call.1} parent=51 // pred_check_branch
          %4351 = sbr.rel (%p4349) target = $region56
        $region55: #{tpu_custom_call.1} parent=51 // pred_region
          %s4352 = sand.u32 %s98, 1
          %s4353 = scalar_lea.sflag [#allocation5], %s4352
          %s4354 = sand.u32 %s98, 1
          %s4355 = smul.addr %s4354, 256
          %s4356 = scalar_lea.vmem [#allocation9], %s4355
          %4358 = dma.done %s4353, 4096
        $region56: #{tpu_custom_call.1} parent=51 // pred_fallthru
          _
      $region52: #{tpu_custom_call.1} parent=5 // pred_fallthru
        _
    $region6: #{tpu_custom_call.1} parent=1 // loop_footer
      %s20 = sadd.s32 1, %s16
    $region7: #{tpu_custom_call.1} parent=1 // loop_footer_branch
      %15 = sbr.rel target = $region3
    $region8: #{tpu_custom_call.1} parent=1 // loop_exit
      _
    %4359 = vsyncpa [#allocation4], 1
    %s4360 = scalar_lea.sflag [#allocation4], 1
    %4361 = vsyncpa %s4360, 1
    %4362 = vsyncpa [#allocation7], 1
    %4363 = vsyncpa [#allocation5], 1
    %s4364 = scalar_lea.sflag [#allocation5], 1
    %4365 = vsyncpa %s4364, 1

</llo_original>
